<compile_context>
chip_gen: v5e
topology: v5e:2x2
jax: 0.10.0
libtpu: 0.0.40
codegen_flags: <defaults>
</compile_context>

<pallas_src>
import jax
import jax.numpy as jnp
import numpy as np
from jax.experimental import pallas as pl
from jax.experimental.pallas import tpu as pltpu

BN_EPS = 1e-5
K = 3                        # Conv1d kernel_size (padding=1, stride=1 -> 'same')
C1, C2 = 32, 64              # channel widths c1, c2 from the module
HIDDEN1, HIDDEN2 = 256, 128

# Conv-stage parameter order (after the activation tensor).
CONV_PARAM_ORDER = (
    "A_w1d", "A_sb1d", "A_w2", "A_sb2",       # layer11 || layer21 (block-diag, ds fused)
    "BC_w1", "BC_sb1", "BC_w2", "BC_sb2",     # layer31 || layer12 || layer22 (shared LHS)
    "D_w1d", "D_sb1d", "D_w2", "D_sb2",       # layer31 re-applied (stand-in block, ds fused)
)


# ----------------------------- in-kernel helpers -----------------------------

def _im2col3(x):
    """(L, C) bf16 -> (L, 3*C) bf16: zero 'same'-padded K=3 tap gather (one sample)."""
    L, C = x.shape
    z = jnp.zeros((1, C), x.dtype)
    xpad = jnp.concatenate([z, x, z], axis=0)                       # (L+2, C)
    # TODO(synk): tap boundaries at 4/64/128/192 lanes are not all 128-aligned; a
    # halo-scratch (pltpu.VMEM + pl.ds) or 128-padded-tap weight layout would remove
    # the masked lane copies entirely.
    return jnp.concatenate([xpad[0:L], xpad[1:L + 1], xpad[2:L + 2]], axis=-1)


def _mm_bn(lhs_bf16, w_ref, sb_ref):
    """bf16 MXU matmul + folded BatchNorm1d; f32 accumulate/epilogue."""
    y = jnp.dot(lhs_bf16, w_ref[...], preferred_element_type=jnp.float32)
    sb = sb_ref[...]
    return y * sb[0:1, :] + sb[1:2, :]


# ------------------------------- Pallas kernels ------------------------------

def _conv_stage_kernel(x_ref,
                       wA1d, sbA1d, wA2, sbA2,
                       wBC1, sbBC1, wBC2, sbBC2,
                       wD1d, sbD1d, wD2, sbD2,
                       o_ref):
    # x_ref: (1, L, 4) channels-last cat(input1, input2) for ONE batch element.
    x = x_ref[0].astype(jnp.bfloat16)                               # (L, 4)

    # Stage A: layer11 || layer21 (block-diag); 1x1 downsample fused into conv1's N dim.
    yA = _mm_bn(_im2col3(x), wA1d, sbA1d)                           # (L,128)=[ds(64)|conv1(64)]
    rA = yA[:, :2 * C1]                                             # residual (no ReLU)
    hA = jnp.maximum(yA[:, 2 * C1:], 0.0).astype(jnp.bfloat16)
    p1 = jnp.maximum(_mm_bn(_im2col3(hA), wA2, sbA2) + rA, 0.0)     # (L, 64) = [f1 | s1]
    p1b = p1.astype(jnp.bfloat16)

    # Stage B+C fused (shared LHS = im2col(cat(f1,s1))):
    #   layer31(cat(f1,s1))  ||  layer12(f1) || layer22(s1)  (+ C's 1x1 downsample)
    y1 = _mm_bn(_im2col3(p1b), wBC1, sbBC1)            # (L,320)=[dsC(128)|conv1C(128)|conv1B(64)]
    rC = y1[:, :2 * C2]
    hBC = jnp.maximum(y1[:, 2 * C2:], 0.0).astype(jnp.bfloat16)     # (L,192)=[hC(128)|hB(64)]
    y2 = _mm_bn(_im2col3(hBC), wBC2, sbBC2)                         # (L,192)=[conv2C(128)|conv2B(64)]
    res = jnp.concatenate([rC, p1], axis=-1)           # p1 = identity residual of layer31
    outBC = jnp.maximum(y2 + res, 0.0)
    p2b = outBC[:, :2 * C2].astype(jnp.bfloat16)                    # (L,128) = [f2 | s2]
    fs1 = outBC[:, 2 * C2:]                                         # (L, 64) = layer31(cat(f1,s1))

    # Stage D: the PyTorch forward re-applies layer31 (64-in) to the 128-channel
    # cat(f2, s2), which is a shape error in PyTorch.
    # TODO(synk): use a shape-compatible stand-in ResBlock(128, 64) to keep the graph runnable.
    yD = _mm_bn(_im2col3(p2b), wD1d, sbD1d)                         # (L,128)=[ds(64)|conv1(64)]
    rD = yD[:, :C2]
    hD = jnp.maximum(yD[:, C2:], 0.0).astype(jnp.bfloat16)
    fs2 = jnp.maximum(_mm_bn(_im2col3(hD), wD2, sbD2) + rD, 0.0)    # (L, 64)

    # fs3 = cat(fs1, fs2) written straight into lane slices of the bf16 output block.
    o_ref[0, :, :C2] = fs1.astype(o_ref.dtype)
    o_ref[0, :, C2:] = fs2.astype(o_ref.dtype)


def _fc_kernel(x_ref, w1, b1, w2, b2, w3, b3, o_ref, acc):
    k = pl.program_id(0)

    @pl.when(k == 0)
    def _():
        acc[...] = jnp.zeros_like(acc)

    # K-tiled fc1: stream (B, TK) x (TK, H1) partial products into the f32 accumulator.
    acc[...] += jnp.dot(x_ref[...], w1[...], preferred_element_type=jnp.float32)

    @pl.when(k == pl.num_programs(0) - 1)
    def _():
        h = jnp.maximum(acc[...] + b1[...], 0.0)
        h = jnp.maximum(jnp.dot(h.astype(jnp.bfloat16), w2[...],
                                preferred_element_type=jnp.float32) + b2[...], 0.0)
        o_ref[...] = (jnp.dot(h.astype(jnp.bfloat16), w3[...],
                              preferred_element_type=jnp.float32) + b3[...]).astype(o_ref.dtype)


# --------------------------- parameter initialization ------------------------

def _fold_bn(key, c):
    # TODO(synk): BatchNorm1d folded with inference running statistics; the nn.Module's
    # train-mode per-batch statistics are not reproduced.
    kg, kb = jax.random.split(key)
    gamma = 1.0 + 0.1 * jax.random.normal(kg, (c,), jnp.float32)
    beta = 0.1 * jax.random.normal(kb, (c,), jnp.float32)
    running_mean = jnp.zeros((c,), jnp.float32)
    running_var = jnp.ones((c,), jnp.float32)
    scale = gamma / jnp.sqrt(running_var + BN_EPS)
    bias = beta - running_mean * scale
    return scale, bias


def _init_resblock_raw(key, cin, cout):
    k = jax.random.split(key, 6)
    p = {"w1": jax.random.normal(k[0], (K, cin, cout), jnp.float32) / np.sqrt(K * cin),
         "w2": jax.random.normal(k[2], (K, cout, cout), jnp.float32) / np.sqrt(K * cout)}
    p["s1"], p["b1"] = _fold_bn(k[1], cout)
    p["s2"], p["b2"] = _fold_bn(k[3], cout)
    if cin != cout:                    # downsample = Conv1d(1x1, bias=False) + BN
        p["wd"] = jax.random.normal(k[4], (cin, cout), jnp.float32) / np.sqrt(cin)
        p["sd"], p["bd"] = _fold_bn(k[5], cout)
    return p


def _bd_k(wf, ws):
    """Block-diagonal fusion of two (K, Ci, Co) conv weights."""
    Kk, cif, cof = wf.shape
    _, cis, cos = ws.shape
    w = jnp.zeros((Kk, cif + cis, cof + cos), jnp.float32)
    w = w.at[:, :cif, :cof].set(wf)
    return w.at[:, cif:, cof:].set(ws)


def _bd_1(wf, ws):
    """Block-diagonal fusion of two (Ci, Co) 1x1 conv weights."""
    cif, cof = wf.shape
    cis, cos = ws.shape
    w = jnp.zeros((cif + cis, cof + cos), jnp.float32)
    w = w.at[:cif, :cof].set(wf)
    return w.at[cif:, cof:].set(ws)


def _pack_k(w):
    """(K, Ci, Co) -> im2col weight (K*Ci, Co) (tap-major rows)."""
    Kk, ci, co = w.shape
    return w.reshape(Kk * ci, co)


def _center_rows(wd):
    """Place a 1x1 conv (Ci, Co) at the center-tap rows of an im2col weight (3*Ci, Co)."""
    ci, co = wd.shape
    return jnp.zeros((K * ci, co), jnp.float32).at[ci:2 * ci, :].set(wd)


def _sb(scales, biases):
    """Stack folded BN scale/bias column blocks into a (2, Cout_total) f32 tensor."""
    return jnp.stack([jnp.concatenate(scales), jnp.concatenate(biases)]).astype(jnp.float32)


def init_model(key, seq_len, len_out):
    keys = jax.random.split(key, 12)
    raw = {
        "l11": _init_resblock_raw(keys[0], 2, C1),
        "l12": _init_resblock_raw(keys[1], C1, C2),
        "l21": _init_resblock_raw(keys[2], 2, C1),
        "l22": _init_resblock_raw(keys[3], C1, C2),
        "l31": _init_resblock_raw(keys[4], 2 * C1, C2),    # identity downsample (64 -> 64)
        # TODO(synk): stand-in ResBlock(128, 64) for the second layer31 call (shape error
        # in the original PyTorch forward; cannot match a working PyTorch reference).
        "l31b": _init_resblock_raw(keys[5], 2 * C2, C2),
    }
    l11, l12, l21, l22, l31, l31b = (raw[n] for n in ("l11", "l12", "l21", "l22", "l31", "l31b"))
    bf = jnp.bfloat16

    params = {
        # Stage A: layer11 || layer21; output columns = [downsample(64) | conv1(64)].
        "A_w1d": jnp.concatenate([_center_rows(_bd_1(l11["wd"], l21["wd"])),
                                  _pack_k(_bd_k(l11["w1"], l21["w1"]))], axis=1).astype(bf),
        "A_sb1d": _sb([l11["sd"], l21["sd"], l11["s1"], l21["s1"]],
                      [l11["bd"], l21["bd"], l11["b1"], l21["b1"]]),
        "A_w2": _pack_k(_bd_k(l11["w2"], l21["w2"])).astype(bf),
        "A_sb2": _sb([l11["s2"], l21["s2"]], [l11["b2"], l21["b2"]]),
        # Stage B+C fused; conv1 columns = [dsC(128) | conv1C(128) | conv1B(64)].
        "BC_w1": jnp.concatenate([_center_rows(_bd_1(l12["wd"], l22["wd"])),
                                  _pack_k(_bd_k(l12["w1"], l22["w1"])),
                                  _pack_k(l31["w1"])], axis=1).astype(bf),
        "BC_sb1": _sb([l12["sd"], l22["sd"], l12["s1"], l22["s1"], l31["s1"]],
                      [l12["bd"], l22["bd"], l12["b1"], l22["b1"], l31["b1"]]),
        # conv2 columns = [conv2C(128) | conv2B(64)] over hBC = [hC(128) | hB(64)].
        "BC_w2": _pack_k(_bd_k(_bd_k(l12["w2"], l22["w2"]), l31["w2"])).astype(bf),
        "BC_sb2": _sb([l12["s2"], l22["s2"], l31["s2"]], [l12["b2"], l22["b2"], l31["b2"]]),
        # Stage D: stand-in block, downsample fused into conv1's N dim.
        "D_w1d": jnp.concatenate([_center_rows(l31b["wd"]),
                                  _pack_k(l31b["w1"])], axis=1).astype(bf),
        "D_sb1d": _sb([l31b["sd"], l31b["s1"]], [l31b["bd"], l31b["b1"]]),
        "D_w2": _pack_k(l31b["w2"]).astype(bf),
        "D_sb2": _sb([l31b["s2"]], [l31b["b2"]]),
    }

    fc_in = 2 * C2 * seq_len            # == num_keypoints * c2 with num_keypoints = 2*seq_len
    # fc1 rows permuted ONCE from PyTorch's channel-major flatten of (B, 2*c2, L) to the
    # L-major flatten of the channels-last conv output (no runtime transpose).
    w1_cmajor = jax.random.normal(keys[6], (fc_in, HIDDEN1), jnp.float32) / np.sqrt(fc_in)
    w1_lmajor = (w1_cmajor.reshape(2 * C2, seq_len, HIDDEN1)
                 .transpose(1, 0, 2).reshape(fc_in, HIDDEN1))
    # TODO(synk): fp8 (v7x) / int8 (v5e, v6e) fc1 weights would halve the dominant HBM stream
    # at real seq_len; kept bf16 here for accuracy.
    params["fc1_wt"] = w1_lmajor.astype(bf)
    params["fc1_b"] = 0.01 * jax.random.normal(keys[7], (1, HIDDEN1), jnp.float32)
    params["fc2_wt"] = (jax.random.normal(keys[8], (HIDDEN1, HIDDEN2), jnp.float32)
                        / np.sqrt(HIDDEN1)).astype(bf)
    params["fc2_b"] = 0.01 * jax.random.normal(keys[9], (1, HIDDEN2), jnp.float32)
    params["fc3_wt"] = (jax.random.normal(keys[10], (HIDDEN2, len_out), jnp.float32)
                        / np.sqrt(HIDDEN2)).astype(bf)
    params["fc3_b"] = 0.01 * jax.random.normal(keys[11], (1, len_out), jnp.float32)
    return params, raw


# --------------------------------- forward ----------------------------------

def resnet_pca_mini(params, input1, input2):
    B, _, L = input1.shape
    # PyTorch NCL inputs -> channels-last; branch inputs concatenated on channels so the
    # block-diagonal stage-A weights consume both branches in one matmul.
    x = jnp.concatenate([jnp.transpose(input1, (0, 2, 1)),
                         jnp.transpose(input2, (0, 2, 1))], axis=-1)          # (B, L, 4)

    conv_weights = [params[k] for k in CONV_PARAM_ORDER]
    const2 = lambda b: (0, 0)                       # weights resident across the batch grid
    conv_flops = 2 * B * L * (12 * 128 + 192 * 64 + 192 * 320 + 576 * 192 + 384 * 128 + 192 * 64)
    conv_bytes = (x.size * x.dtype.itemsize
                  + sum(w.size * w.dtype.itemsize for w in conv_weights)
                  + B * L * 2 * C2 * 2)

    fs3 = pl.pallas_call(
        _conv_stage_kernel,
        out_shape=jax.ShapeDtypeStruct((B, L, 2 * C2), jnp.bfloat16),   # bf16: no f32 round trip
        grid=(B,),
        in_specs=[pl.BlockSpec((1, L, 4), lambda b: (b, 0, 0))]
                 + [pl.BlockSpec(w.shape, const2) for w in conv_weights],
        out_specs=pl.BlockSpec((1, L, 2 * C2), lambda b: (b, 0, 0)),
        compiler_params=pltpu.CompilerParams(
            dimension_semantics=("parallel",),       # batch axis -> both TensorCores on v7x
            vmem_limit_bytes=32 * 1024 * 1024),
        cost_estimate=pl.CostEstimate(flops=conv_flops, transcendentals=0,
                                      bytes_accessed=conv_bytes),
    )(x, *conv_weights)

    # L-major flatten; fc1 rows were permuted at init so no transpose is needed here.
    fs4 = fs3.reshape(B, L * 2 * C2)                                   # bf16
    fc_in = fs4.shape[1]
    h1 = params["fc1_wt"].shape[1]
    h2 = params["fc2_wt"].shape[1]
    len_out = params["fc3_b"].shape[-1]
    # K-tile size for the fc1 weight stream; at real seq_len pick per generation:
    # ~8192 (v7x, 64 MiB VMEM), 16384-32768 (v6e, raise vmem_limit_bytes), 4096-8192 (v5e).
    TK = 512 if fc_in % 512 == 0 else fc_in
    nk = fc_in // TK
    fc_flops = 2 * B * (fc_in * h1 + h1 * h2 + h2 * len_out)
    fc_bytes = (fs4.size + params["fc1_wt"].size + params["fc2_wt"].size
                + params["fc3_wt"].size) * 2 + B * len_out * 4

    return pl.pallas_call(
        _fc_kernel,
        out_shape=jax.ShapeDtypeStruct((B, len_out), jnp.float32),
        grid=(nk,),
        in_specs=[pl.BlockSpec((B, TK), lambda k: (0, k)),             # activations, K-tiled
                  pl.BlockSpec((TK, h1), lambda k: (k, 0)),            # fc1 weight, K-tiled
                  pl.BlockSpec((1, h1), lambda k: (0, 0)),
                  pl.BlockSpec((h1, h2), lambda k: (0, 0)),
                  pl.BlockSpec((1, h2), lambda k: (0, 0)),
                  pl.BlockSpec((h2, len_out), lambda k: (0, 0)),
                  pl.BlockSpec((1, len_out), lambda k: (0, 0))],
        out_specs=pl.BlockSpec((B, len_out), lambda k: (0, 0)),
        scratch_shapes=[pltpu.VMEM((B, h1), jnp.float32)],             # f32 fc1 accumulator
        compiler_params=pltpu.CompilerParams(
            dimension_semantics=("arbitrary",),       # reduction axis
            vmem_limit_bytes=32 * 1024 * 1024),
        cost_estimate=pl.CostEstimate(flops=fc_flops, transcendentals=0,
                                      bytes_accessed=fc_bytes),
    )(fs4, params["fc1_wt"], params["fc1_b"],
      params["fc2_wt"], params["fc2_b"],
      params["fc3_wt"], params["fc3_b"])


# ------------------------- pure-JAX reference (unfused) ----------------------

def _reference_forward(params, raw, input1, input2):
    """Per-layer reference on the UNFUSED params (validates the fused weight packing)."""
    def conv3(x, w):                                   # x (B,L,Ci), w (K,Ci,Co)
        xb = x.astype(jnp.bfloat16)
        Bb, Ll, Ci = xb.shape
        z = jnp.zeros((Bb, 1, Ci), xb.dtype)
        xp = jnp.concatenate([z, xb, z], axis=1)
        cols = jnp.concatenate([xp[:, t:t + Ll] for t in range(K)], axis=-1)
        return jnp.einsum("blc,co->blo", cols, w.reshape(K * Ci, -1).astype(jnp.bfloat16),
                          preferred_element_type=jnp.float32)

    def bn(y, s, b):
        return y * s + b

    def resblock(x, p):
        h = jnp.maximum(bn(conv3(x, p["w1"]), p["s1"], p["b1"]), 0.0)
        out = bn(conv3(h, p["w2"]), p["s2"], p["b2"])
        if "wd" in p:
            r = bn(jnp.einsum("blc,co->blo", x.astype(jnp.bfloat16),
                              p["wd"].astype(jnp.bfloat16),
                              preferred_element_type=jnp.float32), p["sd"], p["bd"])
        else:
            r = x
        return jnp.maximum(out + r, 0.0)

    x1 = jnp.transpose(input1, (0, 2, 1))
    x2 = jnp.transpose(input2, (0, 2, 1))
    f1 = resblock(x1, raw["l11"])
    s1 = resblock(x2, raw["l21"])
    fs1 = resblock(jnp.concatenate([f1, s1], axis=-1), raw["l31"])
    f2 = resblock(f1, raw["l12"])
    s2 = resblock(s1, raw["l22"])
    fs2 = resblock(jnp.concatenate([f2, s2], axis=-1), raw["l31b"])
    fs4 = jnp.concatenate([fs1, fs2], axis=-1).astype(jnp.bfloat16).reshape(input1.shape[0], -1)
    h = jnp.maximum(jnp.dot(fs4, params["fc1_wt"],
                            preferred_element_type=jnp.float32) + params["fc1_b"], 0.0)
    h = jnp.maximum(jnp.dot(h.astype(jnp.bfloat16), params["fc2_wt"],
                            preferred_element_type=jnp.float32) + params["fc2_b"], 0.0)
    return jnp.dot(h.astype(jnp.bfloat16), params["fc3_wt"],
                   preferred_element_type=jnp.float32) + params["fc3_b"]


if __name__ == "__main__":
    B, L, LEN_OUT = 2, 32, 16          # toy num_keypoints: 2*L = 64 (vs 650 in the module)
    key = jax.random.PRNGKey(0)
    kp, k1, k2 = jax.random.split(key, 3)
    params, raw = init_model(kp, L, LEN_OUT)
    input1 = jax.random.normal(k1, (B, 2, L), jnp.float32)
    input2 = jax.random.normal(k2, (B, 2, L), jnp.float32)

    out = jax.block_until_ready(jax.jit(resnet_pca_mini)(params, input1, input2))
    ref = jax.block_until_ready(jax.jit(_reference_forward)(params, raw, input1, input2))

    assert out.shape == (B, LEN_OUT)
    assert bool(jnp.all(jnp.isfinite(out)))
    max_err = float(np.abs(np.asarray(out) - np.asarray(ref)).max())
    assert np.allclose(np.asarray(out), np.asarray(ref), rtol=5e-2, atol=5e-2), max_err
    print("KERNEL_OK")
</pallas_src>

<mosaic_0001>
module attributes {stable_mosaic.version = 11 : i64} {
  func.func @_conv_stage_kernel(%arg0: i32, %arg1: memref<1x32x4xf32, #tpu.memory_space<vmem>>, %arg2: memref<12x128xbf16, #tpu.memory_space<vmem>>, %arg3: memref<2x128xf32, #tpu.memory_space<vmem>>, %arg4: memref<192x64xbf16, #tpu.memory_space<vmem>>, %arg5: memref<2x64xf32, #tpu.memory_space<vmem>>, %arg6: memref<192x320xbf16, #tpu.memory_space<vmem>>, %arg7: memref<2x320xf32, #tpu.memory_space<vmem>>, %arg8: memref<576x192xbf16, #tpu.memory_space<vmem>>, %arg9: memref<2x192xf32, #tpu.memory_space<vmem>>, %arg10: memref<384x128xbf16, #tpu.memory_space<vmem>>, %arg11: memref<2x128xf32, #tpu.memory_space<vmem>>, %arg12: memref<192x64xbf16, #tpu.memory_space<vmem>>, %arg13: memref<2x64xf32, #tpu.memory_space<vmem>>, %arg14: memref<1x32x128xbf16, #tpu.memory_space<vmem>>) attributes {dimension_semantics = [#tpu.dimension_semantics<parallel>], iteration_bounds = array<i64: 2>, scalar_prefetch = 0 : i64, scratch_operands = 0 : i64, tpu.core_type = #tpu.core_type<tc>, window_params = [{transform_indices = @transform_0, window_bounds = array<i64: 1, 32, 4>}, {pipeline_mode = #tpu.pipeline_mode<synchronous>, transform_indices = @transform_1, window_bounds = array<i64: 12, 128>}, {pipeline_mode = #tpu.pipeline_mode<synchronous>, transform_indices = @transform_2, window_bounds = array<i64: 2, 128>}, {pipeline_mode = #tpu.pipeline_mode<synchronous>, transform_indices = @transform_3, window_bounds = array<i64: 192, 64>}, {pipeline_mode = #tpu.pipeline_mode<synchronous>, transform_indices = @transform_4, window_bounds = array<i64: 2, 64>}, {pipeline_mode = #tpu.pipeline_mode<synchronous>, transform_indices = @transform_5, window_bounds = array<i64: 192, 320>}, {pipeline_mode = #tpu.pipeline_mode<synchronous>, transform_indices = @transform_6, window_bounds = array<i64: 2, 320>}, {pipeline_mode = #tpu.pipeline_mode<synchronous>, transform_indices = @transform_7, window_bounds = array<i64: 576, 192>}, {pipeline_mode = #tpu.pipeline_mode<synchronous>, transform_indices = @transform_8, window_bounds = array<i64: 2, 192>}, {pipeline_mode = #tpu.pipeline_mode<synchronous>, transform_indices = @transform_9, window_bounds = array<i64: 384, 128>}, {pipeline_mode = #tpu.pipeline_mode<synchronous>, transform_indices = @transform_10, window_bounds = array<i64: 2, 128>}, {pipeline_mode = #tpu.pipeline_mode<synchronous>, transform_indices = @transform_11, window_bounds = array<i64: 192, 64>}, {pipeline_mode = #tpu.pipeline_mode<synchronous>, transform_indices = @transform_12, window_bounds = array<i64: 2, 64>}, {transform_indices = @transform_13, window_bounds = array<i64: 1, 32, 128>}]} {
    %c0 = arith.constant 0 : index
    %c0_0 = arith.constant 0 : index
    %c0_1 = arith.constant 0 : index
    %0 = vector.load %arg1[%c0, %c0_0, %c0_1] : memref<1x32x4xf32, #tpu.memory_space<vmem>>, vector<1x32x4xf32>
    %1 = vector.shape_cast %0 : vector<1x32x4xf32> to vector<32x4xf32>
    %2 = arith.truncf %1 : vector<32x4xf32> to vector<32x4xbf16>
    %cst = arith.constant 0.000000e+00 : bf16
    %3 = vector.broadcast %cst : bf16 to vector<1x4xbf16>
    %4 = tpu.concatenate %3, %2, %3 in 0 : vector<1x4xbf16>, vector<32x4xbf16>, vector<1x4xbf16> -> vector<34x4xbf16>
    %5 = vector.extract_strided_slice %4 {offsets = [0, 0], sizes = [32, 4], strides = [1, 1]} : vector<34x4xbf16> to vector<32x4xbf16>
    %6 = vector.extract_strided_slice %4 {offsets = [1, 0], sizes = [32, 4], strides = [1, 1]} : vector<34x4xbf16> to vector<32x4xbf16>
    %7 = vector.extract_strided_slice %4 {offsets = [2, 0], sizes = [32, 4], strides = [1, 1]} : vector<34x4xbf16> to vector<32x4xbf16>
    %8 = tpu.concatenate %5, %6, %7 in 1 : vector<32x4xbf16>, vector<32x4xbf16>, vector<32x4xbf16> -> vector<32x12xbf16>
    %c0_2 = arith.constant 0 : index
    %c0_3 = arith.constant 0 : index
    %9 = vector.load %arg2[%c0_2, %c0_3] : memref<12x128xbf16, #tpu.memory_space<vmem>>, vector<12x128xbf16>
    %cst_4 = arith.constant dense<0.000000e+00> : vector<32x128xf32>
    %10 = tpu.matmul %8, %9, %cst_4 {dimension_numbers = #tpu.dot_dimension_numbers<[1], [0], [0], [1], [0, 0, 1, 1], [], []>} : vector<32x12xbf16>, vector<12x128xbf16>, vector<32x128xf32> -> vector<32x128xf32>
    %c0_5 = arith.constant 0 : index
    %c0_6 = arith.constant 0 : index
    %11 = vector.load %arg3[%c0_5, %c0_6] : memref<2x128xf32, #tpu.memory_space<vmem>>, vector<2x128xf32>
    %12 = vector.extract_strided_slice %11 {offsets = [0, 0], sizes = [1, 128], strides = [1, 1]} : vector<2x128xf32> to vector<1x128xf32>
    %13 = vector.broadcast %12 : vector<1x128xf32> to vector<32x128xf32>
    %14 = arith.mulf %10, %13 : vector<32x128xf32>
    %15 = vector.extract_strided_slice %11 {offsets = [1, 0], sizes = [1, 128], strides = [1, 1]} : vector<2x128xf32> to vector<1x128xf32>
    %16 = vector.broadcast %15 : vector<1x128xf32> to vector<32x128xf32>
    %17 = arith.addf %14, %16 : vector<32x128xf32>
    %18 = vector.extract_strided_slice %17 {offsets = [0, 0], sizes = [32, 64], strides = [1, 1]} : vector<32x128xf32> to vector<32x64xf32>
    %19 = vector.extract_strided_slice %17 {offsets = [0, 64], sizes = [32, 64], strides = [1, 1]} : vector<32x128xf32> to vector<32x64xf32>
    %cst_7 = arith.constant 0.000000e+00 : f32
    %20 = vector.broadcast %cst_7 : f32 to vector<32x64xf32>
    %21 = arith.maximumf %19, %20 : vector<32x64xf32>
    %22 = arith.truncf %21 : vector<32x64xf32> to vector<32x64xbf16>
    %cst_8 = arith.constant 0.000000e+00 : bf16
    %23 = vector.broadcast %cst_8 : bf16 to vector<1x64xbf16>
    %24 = tpu.concatenate %23, %22, %23 in 0 : vector<1x64xbf16>, vector<32x64xbf16>, vector<1x64xbf16> -> vector<34x64xbf16>
    %25 = vector.extract_strided_slice %24 {offsets = [0, 0], sizes = [32, 64], strides = [1, 1]} : vector<34x64xbf16> to vector<32x64xbf16>
    %26 = vector.extract_strided_slice %24 {offsets = [1, 0], sizes = [32, 64], strides = [1, 1]} : vector<34x64xbf16> to vector<32x64xbf16>
    %27 = vector.extract_strided_slice %24 {offsets = [2, 0], sizes = [32, 64], strides = [1, 1]} : vector<34x64xbf16> to vector<32x64xbf16>
    %28 = tpu.concatenate %25, %26, %27 in 1 : vector<32x64xbf16>, vector<32x64xbf16>, vector<32x64xbf16> -> vector<32x192xbf16>
    %c0_9 = arith.constant 0 : index
    %c0_10 = arith.constant 0 : index
    %29 = vector.load %arg4[%c0_9, %c0_10] : memref<192x64xbf16, #tpu.memory_space<vmem>>, vector<192x64xbf16>
    %cst_11 = arith.constant dense<0.000000e+00> : vector<32x64xf32>
    %30 = tpu.matmul %28, %29, %cst_11 {dimension_numbers = #tpu.dot_dimension_numbers<[1], [0], [0], [1], [0, 0, 1, 1], [], []>} : vector<32x192xbf16>, vector<192x64xbf16>, vector<32x64xf32> -> vector<32x64xf32>
    %c0_12 = arith.constant 0 : index
    %c0_13 = arith.constant 0 : index
    %31 = vector.load %arg5[%c0_12, %c0_13] : memref<2x64xf32, #tpu.memory_space<vmem>>, vector<2x64xf32>
    %32 = vector.extract_strided_slice %31 {offsets = [0, 0], sizes = [1, 64], strides = [1, 1]} : vector<2x64xf32> to vector<1x64xf32>
    %33 = vector.broadcast %32 : vector<1x64xf32> to vector<32x64xf32>
    %34 = arith.mulf %30, %33 : vector<32x64xf32>
    %35 = vector.extract_strided_slice %31 {offsets = [1, 0], sizes = [1, 64], strides = [1, 1]} : vector<2x64xf32> to vector<1x64xf32>
    %36 = vector.broadcast %35 : vector<1x64xf32> to vector<32x64xf32>
    %37 = arith.addf %34, %36 : vector<32x64xf32>
    %38 = arith.addf %37, %18 : vector<32x64xf32>
    %cst_14 = arith.constant 0.000000e+00 : f32
    %39 = vector.broadcast %cst_14 : f32 to vector<32x64xf32>
    %40 = arith.maximumf %38, %39 : vector<32x64xf32>
    %41 = arith.truncf %40 : vector<32x64xf32> to vector<32x64xbf16>
    %cst_15 = arith.constant 0.000000e+00 : bf16
    %42 = vector.broadcast %cst_15 : bf16 to vector<1x64xbf16>
    %43 = tpu.concatenate %42, %41, %42 in 0 : vector<1x64xbf16>, vector<32x64xbf16>, vector<1x64xbf16> -> vector<34x64xbf16>
    %44 = vector.extract_strided_slice %43 {offsets = [0, 0], sizes = [32, 64], strides = [1, 1]} : vector<34x64xbf16> to vector<32x64xbf16>
    %45 = vector.extract_strided_slice %43 {offsets = [1, 0], sizes = [32, 64], strides = [1, 1]} : vector<34x64xbf16> to vector<32x64xbf16>
    %46 = vector.extract_strided_slice %43 {offsets = [2, 0], sizes = [32, 64], strides = [1, 1]} : vector<34x64xbf16> to vector<32x64xbf16>
    %47 = tpu.concatenate %44, %45, %46 in 1 : vector<32x64xbf16>, vector<32x64xbf16>, vector<32x64xbf16> -> vector<32x192xbf16>
    %c0_16 = arith.constant 0 : index
    %c0_17 = arith.constant 0 : index
    %48 = vector.load %arg6[%c0_16, %c0_17] : memref<192x320xbf16, #tpu.memory_space<vmem>>, vector<192x320xbf16>
    %cst_18 = arith.constant dense<0.000000e+00> : vector<32x320xf32>
    %49 = tpu.matmul %47, %48, %cst_18 {dimension_numbers = #tpu.dot_dimension_numbers<[1], [0], [0], [1], [0, 0, 1, 1], [], []>} : vector<32x192xbf16>, vector<192x320xbf16>, vector<32x320xf32> -> vector<32x320xf32>
    %c0_19 = arith.constant 0 : index
    %c0_20 = arith.constant 0 : index
    %50 = vector.load %arg7[%c0_19, %c0_20] : memref<2x320xf32, #tpu.memory_space<vmem>>, vector<2x320xf32>
    %51 = vector.extract_strided_slice %50 {offsets = [0, 0], sizes = [1, 320], strides = [1, 1]} : vector<2x320xf32> to vector<1x320xf32>
    %52 = vector.broadcast %51 : vector<1x320xf32> to vector<32x320xf32>
    %53 = arith.mulf %49, %52 : vector<32x320xf32>
    %54 = vector.extract_strided_slice %50 {offsets = [1, 0], sizes = [1, 320], strides = [1, 1]} : vector<2x320xf32> to vector<1x320xf32>
    %55 = vector.broadcast %54 : vector<1x320xf32> to vector<32x320xf32>
    %56 = arith.addf %53, %55 : vector<32x320xf32>
    %57 = vector.extract_strided_slice %56 {offsets = [0, 0], sizes = [32, 128], strides = [1, 1]} : vector<32x320xf32> to vector<32x128xf32>
    %58 = vector.extract_strided_slice %56 {offsets = [0, 128], sizes = [32, 192], strides = [1, 1]} : vector<32x320xf32> to vector<32x192xf32>
    %cst_21 = arith.constant 0.000000e+00 : f32
    %59 = vector.broadcast %cst_21 : f32 to vector<32x192xf32>
    %60 = arith.maximumf %58, %59 : vector<32x192xf32>
    %61 = arith.truncf %60 : vector<32x192xf32> to vector<32x192xbf16>
    %cst_22 = arith.constant 0.000000e+00 : bf16
    %62 = vector.broadcast %cst_22 : bf16 to vector<1x192xbf16>
    %63 = tpu.concatenate %62, %61, %62 in 0 : vector<1x192xbf16>, vector<32x192xbf16>, vector<1x192xbf16> -> vector<34x192xbf16>
    %64 = vector.extract_strided_slice %63 {offsets = [0, 0], sizes = [32, 192], strides = [1, 1]} : vector<34x192xbf16> to vector<32x192xbf16>
    %65 = vector.extract_strided_slice %63 {offsets = [1, 0], sizes = [32, 192], strides = [1, 1]} : vector<34x192xbf16> to vector<32x192xbf16>
    %66 = vector.extract_strided_slice %63 {offsets = [2, 0], sizes = [32, 192], strides = [1, 1]} : vector<34x192xbf16> to vector<32x192xbf16>
    %67 = tpu.concatenate %64, %65, %66 in 1 : vector<32x192xbf16>, vector<32x192xbf16>, vector<32x192xbf16> -> vector<32x576xbf16>
    %c0_23 = arith.constant 0 : index
    %c0_24 = arith.constant 0 : index
    %68 = vector.load %arg8[%c0_23, %c0_24] : memref<576x192xbf16, #tpu.memory_space<vmem>>, vector<576x192xbf16>
    %cst_25 = arith.constant dense<0.000000e+00> : vector<32x192xf32>
    %69 = tpu.matmul %67, %68, %cst_25 {dimension_numbers = #tpu.dot_dimension_numbers<[1], [0], [0], [1], [0, 0, 1, 1], [], []>} : vector<32x576xbf16>, vector<576x192xbf16>, vector<32x192xf32> -> vector<32x192xf32>
    %c0_26 = arith.constant 0 : index
    %c0_27 = arith.constant 0 : index
    %70 = vector.load %arg9[%c0_26, %c0_27] : memref<2x192xf32, #tpu.memory_space<vmem>>, vector<2x192xf32>
    %71 = vector.extract_strided_slice %70 {offsets = [0, 0], sizes = [1, 192], strides = [1, 1]} : vector<2x192xf32> to vector<1x192xf32>
    %72 = vector.broadcast %71 : vector<1x192xf32> to vector<32x192xf32>
    %73 = arith.mulf %69, %72 : vector<32x192xf32>
    %74 = vector.extract_strided_slice %70 {offsets = [1, 0], sizes = [1, 192], strides = [1, 1]} : vector<2x192xf32> to vector<1x192xf32>
    %75 = vector.broadcast %74 : vector<1x192xf32> to vector<32x192xf32>
    %76 = arith.addf %73, %75 : vector<32x192xf32>
    %77 = tpu.concatenate %57, %40 in 1 : vector<32x128xf32>, vector<32x64xf32> -> vector<32x192xf32>
    %78 = arith.addf %76, %77 : vector<32x192xf32>
    %cst_28 = arith.constant 0.000000e+00 : f32
    %79 = vector.broadcast %cst_28 : f32 to vector<32x192xf32>
    %80 = arith.maximumf %78, %79 : vector<32x192xf32>
    %81 = vector.extract_strided_slice %80 {offsets = [0, 0], sizes = [32, 128], strides = [1, 1]} : vector<32x192xf32> to vector<32x128xf32>
    %82 = arith.truncf %81 : vector<32x128xf32> to vector<32x128xbf16>
    %83 = vector.extract_strided_slice %80 {offsets = [0, 128], sizes = [32, 64], strides = [1, 1]} : vector<32x192xf32> to vector<32x64xf32>
    %cst_29 = arith.constant 0.000000e+00 : bf16
    %84 = vector.broadcast %cst_29 : bf16 to vector<1x128xbf16>
    %85 = tpu.concatenate %84, %82, %84 in 0 : vector<1x128xbf16>, vector<32x128xbf16>, vector<1x128xbf16> -> vector<34x128xbf16>
    %86 = vector.extract_strided_slice %85 {offsets = [0, 0], sizes = [32, 128], strides = [1, 1]} : vector<34x128xbf16> to vector<32x128xbf16>
    %87 = vector.extract_strided_slice %85 {offsets = [1, 0], sizes = [32, 128], strides = [1, 1]} : vector<34x128xbf16> to vector<32x128xbf16>
    %88 = vector.extract_strided_slice %85 {offsets = [2, 0], sizes = [32, 128], strides = [1, 1]} : vector<34x128xbf16> to vector<32x128xbf16>
    %89 = tpu.concatenate %86, %87, %88 in 1 : vector<32x128xbf16>, vector<32x128xbf16>, vector<32x128xbf16> -> vector<32x384xbf16>
    %c0_30 = arith.constant 0 : index
    %c0_31 = arith.constant 0 : index
    %90 = vector.load %arg10[%c0_30, %c0_31] : memref<384x128xbf16, #tpu.memory_space<vmem>>, vector<384x128xbf16>
    %cst_32 = arith.constant dense<0.000000e+00> : vector<32x128xf32>
    %91 = tpu.matmul %89, %90, %cst_32 {dimension_numbers = #tpu.dot_dimension_numbers<[1], [0], [0], [1], [0, 0, 1, 1], [], []>} : vector<32x384xbf16>, vector<384x128xbf16>, vector<32x128xf32> -> vector<32x128xf32>
    %c0_33 = arith.constant 0 : index
    %c0_34 = arith.constant 0 : index
    %92 = vector.load %arg11[%c0_33, %c0_34] : memref<2x128xf32, #tpu.memory_space<vmem>>, vector<2x128xf32>
    %93 = vector.extract_strided_slice %92 {offsets = [0, 0], sizes = [1, 128], strides = [1, 1]} : vector<2x128xf32> to vector<1x128xf32>
    %94 = vector.broadcast %93 : vector<1x128xf32> to vector<32x128xf32>
    %95 = arith.mulf %91, %94 : vector<32x128xf32>
    %96 = vector.extract_strided_slice %92 {offsets = [1, 0], sizes = [1, 128], strides = [1, 1]} : vector<2x128xf32> to vector<1x128xf32>
    %97 = vector.broadcast %96 : vector<1x128xf32> to vector<32x128xf32>
    %98 = arith.addf %95, %97 : vector<32x128xf32>
    %99 = vector.extract_strided_slice %98 {offsets = [0, 0], sizes = [32, 64], strides = [1, 1]} : vector<32x128xf32> to vector<32x64xf32>
    %100 = vector.extract_strided_slice %98 {offsets = [0, 64], sizes = [32, 64], strides = [1, 1]} : vector<32x128xf32> to vector<32x64xf32>
    %cst_35 = arith.constant 0.000000e+00 : f32
    %101 = vector.broadcast %cst_35 : f32 to vector<32x64xf32>
    %102 = arith.maximumf %100, %101 : vector<32x64xf32>
    %103 = arith.truncf %102 : vector<32x64xf32> to vector<32x64xbf16>
    %cst_36 = arith.constant 0.000000e+00 : bf16
    %104 = vector.broadcast %cst_36 : bf16 to vector<1x64xbf16>
    %105 = tpu.concatenate %104, %103, %104 in 0 : vector<1x64xbf16>, vector<32x64xbf16>, vector<1x64xbf16> -> vector<34x64xbf16>
    %106 = vector.extract_strided_slice %105 {offsets = [0, 0], sizes = [32, 64], strides = [1, 1]} : vector<34x64xbf16> to vector<32x64xbf16>
    %107 = vector.extract_strided_slice %105 {offsets = [1, 0], sizes = [32, 64], strides = [1, 1]} : vector<34x64xbf16> to vector<32x64xbf16>
    %108 = vector.extract_strided_slice %105 {offsets = [2, 0], sizes = [32, 64], strides = [1, 1]} : vector<34x64xbf16> to vector<32x64xbf16>
    %109 = tpu.concatenate %106, %107, %108 in 1 : vector<32x64xbf16>, vector<32x64xbf16>, vector<32x64xbf16> -> vector<32x192xbf16>
    %c0_37 = arith.constant 0 : index
    %c0_38 = arith.constant 0 : index
    %110 = vector.load %arg12[%c0_37, %c0_38] : memref<192x64xbf16, #tpu.memory_space<vmem>>, vector<192x64xbf16>
    %cst_39 = arith.constant dense<0.000000e+00> : vector<32x64xf32>
    %111 = tpu.matmul %109, %110, %cst_39 {dimension_numbers = #tpu.dot_dimension_numbers<[1], [0], [0], [1], [0, 0, 1, 1], [], []>} : vector<32x192xbf16>, vector<192x64xbf16>, vector<32x64xf32> -> vector<32x64xf32>
    %c0_40 = arith.constant 0 : index
    %c0_41 = arith.constant 0 : index
    %112 = vector.load %arg13[%c0_40, %c0_41] : memref<2x64xf32, #tpu.memory_space<vmem>>, vector<2x64xf32>
    %113 = vector.extract_strided_slice %112 {offsets = [0, 0], sizes = [1, 64], strides = [1, 1]} : vector<2x64xf32> to vector<1x64xf32>
    %114 = vector.broadcast %113 : vector<1x64xf32> to vector<32x64xf32>
    %115 = arith.mulf %111, %114 : vector<32x64xf32>
    %116 = vector.extract_strided_slice %112 {offsets = [1, 0], sizes = [1, 64], strides = [1, 1]} : vector<2x64xf32> to vector<1x64xf32>
    %117 = vector.broadcast %116 : vector<1x64xf32> to vector<32x64xf32>
    %118 = arith.addf %115, %117 : vector<32x64xf32>
    %119 = arith.addf %118, %99 : vector<32x64xf32>
    %cst_42 = arith.constant 0.000000e+00 : f32
    %120 = vector.broadcast %cst_42 : f32 to vector<32x64xf32>
    %121 = arith.maximumf %119, %120 : vector<32x64xf32>
    %122 = arith.truncf %83 : vector<32x64xf32> to vector<32x64xbf16>
    %c0_43 = arith.constant 0 : index
    %c0_44 = arith.constant 0 : index
    %c0_45 = arith.constant 0 : index
    %123 = vector.load %arg14[%c0_43, %c0_44, %c0_45] : memref<1x32x128xbf16, #tpu.memory_space<vmem>>, vector<1x32x64xbf16>
    %124 = vector.shape_cast %123 : vector<1x32x64xbf16> to vector<32x64xbf16>
    %125 = vector.shape_cast %122 : vector<32x64xbf16> to vector<1x32x64xbf16>
    tpu.vector_store %arg14[%c0_43, %c0_44, %c0_45], %125 {strides = array<i32>} : memref<1x32x128xbf16, #tpu.memory_space<vmem>>, vector<1x32x64xbf16>,
    %126 = arith.truncf %121 : vector<32x64xf32> to vector<32x64xbf16>
    %c0_46 = arith.constant 0 : index
    %c0_47 = arith.constant 0 : index
    %c64 = arith.constant 64 : index
    %127 = vector.load %arg14[%c0_46, %c0_47, %c64] : memref<1x32x128xbf16, #tpu.memory_space<vmem>>, vector<1x32x64xbf16>
    %128 = vector.shape_cast %127 : vector<1x32x64xbf16> to vector<32x64xbf16>
    %129 = vector.shape_cast %126 : vector<32x64xbf16> to vector<1x32x64xbf16>
    tpu.vector_store %arg14[%c0_46, %c0_47, %c64], %129 {strides = array<i32>} : memref<1x32x128xbf16, #tpu.memory_space<vmem>>, vector<1x32x64xbf16>,
    return
  }
  func.func @transform_0(%arg0: i32) -> (i32, i32, i32) {
    %c0_i32 = arith.constant 0 : i32
    %c0_i32_0 = arith.constant 0 : i32
    %c0_i32_1 = arith.constant 0 : i32
    return %arg0, %c0_i32, %c0_i32_0 : i32, i32, i32
  }
  func.func @transform_1(%arg0: i32) -> (i32, i32) {
    %c0_i32 = arith.constant 0 : i32
    %c0_i32_0 = arith.constant 0 : i32
    %c0_i32_1 = arith.constant 0 : i32
    return %c0_i32, %c0_i32_0 : i32, i32
  }
  func.func @transform_2(%arg0: i32) -> (i32, i32) {
    %c0_i32 = arith.constant 0 : i32
    %c0_i32_0 = arith.constant 0 : i32
    %c0_i32_1 = arith.constant 0 : i32
    return %c0_i32, %c0_i32_0 : i32, i32
  }
  func.func @transform_3(%arg0: i32) -> (i32, i32) {
    %c0_i32 = arith.constant 0 : i32
    %c0_i32_0 = arith.constant 0 : i32
    %c0_i32_1 = arith.constant 0 : i32
    return %c0_i32, %c0_i32_0 : i32, i32
  }
  func.func @transform_4(%arg0: i32) -> (i32, i32) {
    %c0_i32 = arith.constant 0 : i32
    %c0_i32_0 = arith.constant 0 : i32
    %c0_i32_1 = arith.constant 0 : i32
    return %c0_i32, %c0_i32_0 : i32, i32
  }
  func.func @transform_5(%arg0: i32) -> (i32, i32) {
    %c0_i32 = arith.constant 0 : i32
    %c0_i32_0 = arith.constant 0 : i32
    %c0_i32_1 = arith.constant 0 : i32
    return %c0_i32, %c0_i32_0 : i32, i32
  }
  func.func @transform_6(%arg0: i32) -> (i32, i32) {
    %c0_i32 = arith.constant 0 : i32
    %c0_i32_0 = arith.constant 0 : i32
    %c0_i32_1 = arith.constant 0 : i32
    return %c0_i32, %c0_i32_0 : i32, i32
  }
  func.func @transform_7(%arg0: i32) -> (i32, i32) {
    %c0_i32 = arith.constant 0 : i32
    %c0_i32_0 = arith.constant 0 : i32
    %c0_i32_1 = arith.constant 0 : i32
    return %c0_i32, %c0_i32_0 : i32, i32
  }
  func.func @transform_8(%arg0: i32) -> (i32, i32) {
    %c0_i32 = arith.constant 0 : i32
    %c0_i32_0 = arith.constant 0 : i32
    %c0_i32_1 = arith.constant 0 : i32
    return %c0_i32, %c0_i32_0 : i32, i32
  }
  func.func @transform_9(%arg0: i32) -> (i32, i32) {
    %c0_i32 = arith.constant 0 : i32
    %c0_i32_0 = arith.constant 0 : i32
    %c0_i32_1 = arith.constant 0 : i32
    return %c0_i32, %c0_i32_0 : i32, i32
  }
  func.func @transform_10(%arg0: i32) -> (i32, i32) {
    %c0_i32 = arith.constant 0 : i32
    %c0_i32_0 = arith.constant 0 : i32
    %c0_i32_1 = arith.constant 0 : i32
    return %c0_i32, %c0_i32_0 : i32, i32
  }
  func.func @transform_11(%arg0: i32) -> (i32, i32) {
    %c0_i32 = arith.constant 0 : i32
    %c0_i32_0 = arith.constant 0 : i32
    %c0_i32_1 = arith.constant 0 : i32
    return %c0_i32, %c0_i32_0 : i32, i32
  }
  func.func @transform_12(%arg0: i32) -> (i32, i32) {
    %c0_i32 = arith.constant 0 : i32
    %c0_i32_0 = arith.constant 0 : i32
    %c0_i32_1 = arith.constant 0 : i32
    return %c0_i32, %c0_i32_0 : i32, i32
  }
  func.func @transform_13(%arg0: i32) -> (i32, i32, i32) {
    %c0_i32 = arith.constant 0 : i32
    %c0_i32_0 = arith.constant 0 : i32
    %c0_i32_1 = arith.constant 0 : i32
    return %arg0, %c0_i32, %c0_i32_0 : i32, i32, i32
  }
}

module attributes {stable_mosaic.version = 11 : i64} {
  func.func @_fc_kernel(%arg0: i32, %arg1: memref<2x512xbf16, #tpu.memory_space<vmem>>, %arg2: memref<512x256xbf16, #tpu.memory_space<vmem>>, %arg3: memref<1x256xf32, #tpu.memory_space<vmem>>, %arg4: memref<256x128xbf16, #tpu.memory_space<vmem>>, %arg5: memref<1x128xf32, #tpu.memory_space<vmem>>, %arg6: memref<128x16xbf16, #tpu.memory_space<vmem>>, %arg7: memref<1x16xf32, #tpu.memory_space<vmem>>, %arg8: memref<2x16xf32, #tpu.memory_space<vmem>>, %arg9: memref<2x256xf32, #tpu.memory_space<vmem>>) attributes {dimension_semantics = [#tpu.dimension_semantics<arbitrary>], iteration_bounds = array<i64: 8>, scalar_prefetch = 0 : i64, scratch_operands = 1 : i64, tpu.core_type = #tpu.core_type<tc>, window_params = [{transform_indices = @transform_0, window_bounds = array<i64: 2, 512>}, {transform_indices = @transform_1, window_bounds = array<i64: 512, 256>}, {pipeline_mode = #tpu.pipeline_mode<synchronous>, transform_indices = @transform_2, window_bounds = array<i64: 1, 256>}, {pipeline_mode = #tpu.pipeline_mode<synchronous>, transform_indices = @transform_3, window_bounds = array<i64: 256, 128>}, {pipeline_mode = #tpu.pipeline_mode<synchronous>, transform_indices = @transform_4, window_bounds = array<i64: 1, 128>}, {pipeline_mode = #tpu.pipeline_mode<synchronous>, transform_indices = @transform_5, window_bounds = array<i64: 128, 16>}, {pipeline_mode = #tpu.pipeline_mode<synchronous>, transform_indices = @transform_6, window_bounds = array<i64: 1, 16>}, {pipeline_mode = #tpu.pipeline_mode<synchronous>, transform_indices = @transform_7, window_bounds = array<i64: 2, 16>}]} {
    %c0_i32 = arith.constant 0 : i32
    %0 = arith.cmpi eq, %arg0, %c0_i32 : i32
    %1 = arith.extui %0 : i1 to i32
    %c0_i32_0 = arith.constant 0 : i32
    %2 = arith.cmpi ne, %1, %c0_i32_0 : i32
    scf.if %2 {
      %cst_9 = arith.constant 0.000000e+00 : f32
      %12 = vector.broadcast %cst_9 : f32 to vector<2x256xf32>
      %c0_10 = arith.constant 0 : index
      %c0_11 = arith.constant 0 : index
      %13 = vector.load %arg9[%c0_10, %c0_11] : memref<2x256xf32, #tpu.memory_space<vmem>>, vector<2x256xf32>
      tpu.vector_store %arg9[%c0_10, %c0_11], %12 {strides = array<i32>} : memref<2x256xf32, #tpu.memory_space<vmem>>, vector<2x256xf32>,
    } else {
    }
    %c0 = arith.constant 0 : index
    %c0_1 = arith.constant 0 : index
    %3 = vector.load %arg9[%c0, %c0_1] : memref<2x256xf32, #tpu.memory_space<vmem>>, vector<2x256xf32>
    %c0_2 = arith.constant 0 : index
    %c0_3 = arith.constant 0 : index
    %4 = vector.load %arg1[%c0_2, %c0_3] : memref<2x512xbf16, #tpu.memory_space<vmem>>, vector<2x512xbf16>
    %c0_4 = arith.constant 0 : index
    %c0_5 = arith.constant 0 : index
    %5 = vector.load %arg2[%c0_4, %c0_5] : memref<512x256xbf16, #tpu.memory_space<vmem>>, vector<512x256xbf16>
    %cst = arith.constant dense<0.000000e+00> : vector<2x256xf32>
    %6 = tpu.matmul %4, %5, %cst {dimension_numbers = #tpu.dot_dimension_numbers<[1], [0], [0], [1], [0, 0, 1, 1], [], []>} : vector<2x512xbf16>, vector<512x256xbf16>, vector<2x256xf32> -> vector<2x256xf32>
    %7 = arith.addf %3, %6 : vector<2x256xf32>
    %c0_6 = arith.constant 0 : index
    %c0_7 = arith.constant 0 : index
    %8 = vector.load %arg9[%c0_6, %c0_7] : memref<2x256xf32, #tpu.memory_space<vmem>>, vector<2x256xf32>
    tpu.vector_store %arg9[%c0_6, %c0_7], %7 {strides = array<i32>} : memref<2x256xf32, #tpu.memory_space<vmem>>, vector<2x256xf32>,
    %c7_i32 = arith.constant 7 : i32
    %9 = arith.cmpi eq, %arg0, %c7_i32 : i32
    %10 = arith.extui %9 : i1 to i32
    %c0_i32_8 = arith.constant 0 : i32
    %11 = arith.cmpi ne, %10, %c0_i32_8 : i32
    scf.if %11 {
      %c0_9 = arith.constant 0 : index
      %c0_10 = arith.constant 0 : index
      %12 = vector.load %arg9[%c0_9, %c0_10] : memref<2x256xf32, #tpu.memory_space<vmem>>, vector<2x256xf32>
      %c0_11 = arith.constant 0 : index
      %c0_12 = arith.constant 0 : index
      %13 = vector.load %arg3[%c0_11, %c0_12] : memref<1x256xf32, #tpu.memory_space<vmem>>, vector<1x256xf32>
      %14 = vector.broadcast %13 : vector<1x256xf32> to vector<2x256xf32>
      %15 = arith.addf %12, %14 : vector<2x256xf32>
      %cst_13 = arith.constant 0.000000e+00 : f32
      %16 = vector.broadcast %cst_13 : f32 to vector<2x256xf32>
      %17 = arith.maximumf %15, %16 : vector<2x256xf32>
      %18 = arith.truncf %17 : vector<2x256xf32> to vector<2x256xbf16>
      %c0_14 = arith.constant 0 : index
      %c0_15 = arith.constant 0 : index
      %19 = vector.load %arg4[%c0_14, %c0_15] : memref<256x128xbf16, #tpu.memory_space<vmem>>, vector<256x128xbf16>
      %cst_16 = arith.constant dense<0.000000e+00> : vector<2x128xf32>
      %20 = tpu.matmul %18, %19, %cst_16 {dimension_numbers = #tpu.dot_dimension_numbers<[1], [0], [0], [1], [0, 0, 1, 1], [], []>} : vector<2x256xbf16>, vector<256x128xbf16>, vector<2x128xf32> -> vector<2x128xf32>
      %c0_17 = arith.constant 0 : index
      %c0_18 = arith.constant 0 : index
      %21 = vector.load %arg5[%c0_17, %c0_18] : memref<1x128xf32, #tpu.memory_space<vmem>>, vector<1x128xf32>
      %22 = vector.broadcast %21 : vector<1x128xf32> to vector<2x128xf32>
      %23 = arith.addf %20, %22 : vector<2x128xf32>
      %cst_19 = arith.constant 0.000000e+00 : f32
      %24 = vector.broadcast %cst_19 : f32 to vector<2x128xf32>
      %25 = arith.maximumf %23, %24 : vector<2x128xf32>
      %26 = arith.truncf %25 : vector<2x128xf32> to vector<2x128xbf16>
      %c0_20 = arith.constant 0 : index
      %c0_21 = arith.constant 0 : index
      %27 = vector.load %arg6[%c0_20, %c0_21] : memref<128x16xbf16, #tpu.memory_space<vmem>>, vector<128x16xbf16>
      %cst_22 = arith.constant dense<0.000000e+00> : vector<2x16xf32>
      %28 = tpu.matmul %26, %27, %cst_22 {dimension_numbers = #tpu.dot_dimension_numbers<[1], [0], [0], [1], [0, 0, 1, 1], [], []>} : vector<2x128xbf16>, vector<128x16xbf16>, vector<2x16xf32> -> vector<2x16xf32>
      %c0_23 = arith.constant 0 : index
      %c0_24 = arith.constant 0 : index
      %29 = vector.load %arg7[%c0_23, %c0_24] : memref<1x16xf32, #tpu.memory_space<vmem>>, vector<1x16xf32>
      %30 = vector.broadcast %29 : vector<1x16xf32> to vector<2x16xf32>
      %31 = arith.addf %28, %30 : vector<2x16xf32>
      %c0_25 = arith.constant 0 : index
      %c0_26 = arith.constant 0 : index
      %32 = vector.load %arg8[%c0_25, %c0_26] : memref<2x16xf32, #tpu.memory_space<vmem>>, vector<2x16xf32>
      tpu.vector_store %arg8[%c0_25, %c0_26], %31 {strides = array<i32>} : memref<2x16xf32, #tpu.memory_space<vmem>>, vector<2x16xf32>,
    } else {
    }
    return
  }
  func.func @transform_0(%arg0: i32) -> (i32, i32) {
    %c0_i32 = arith.constant 0 : i32
    %c0_i32_0 = arith.constant 0 : i32
    return %c0_i32, %arg0 : i32, i32
  }
  func.func @transform_1(%arg0: i32) -> (i32, i32) {
    %c0_i32 = arith.constant 0 : i32
    %c0_i32_0 = arith.constant 0 : i32
    return %arg0, %c0_i32 : i32, i32
  }
  func.func @transform_2(%arg0: i32) -> (i32, i32) {
    %c0_i32 = arith.constant 0 : i32
    %c0_i32_0 = arith.constant 0 : i32
    %c0_i32_1 = arith.constant 0 : i32
    return %c0_i32, %c0_i32_0 : i32, i32
  }
  func.func @transform_3(%arg0: i32) -> (i32, i32) {
    %c0_i32 = arith.constant 0 : i32
    %c0_i32_0 = arith.constant 0 : i32
    %c0_i32_1 = arith.constant 0 : i32
    return %c0_i32, %c0_i32_0 : i32, i32
  }
  func.func @transform_4(%arg0: i32) -> (i32, i32) {
    %c0_i32 = arith.constant 0 : i32
    %c0_i32_0 = arith.constant 0 : i32
    %c0_i32_1 = arith.constant 0 : i32
    return %c0_i32, %c0_i32_0 : i32, i32
  }
  func.func @transform_5(%arg0: i32) -> (i32, i32) {
    %c0_i32 = arith.constant 0 : i32
    %c0_i32_0 = arith.constant 0 : i32
    %c0_i32_1 = arith.constant 0 : i32
    return %c0_i32, %c0_i32_0 : i32, i32
  }
  func.func @transform_6(%arg0: i32) -> (i32, i32) {
    %c0_i32 = arith.constant 0 : i32
    %c0_i32_0 = arith.constant 0 : i32
    %c0_i32_1 = arith.constant 0 : i32
    return %c0_i32, %c0_i32_0 : i32, i32
  }
  func.func @transform_7(%arg0: i32) -> (i32, i32) {
    %c0_i32 = arith.constant 0 : i32
    %c0_i32_0 = arith.constant 0 : i32
    %c0_i32_1 = arith.constant 0 : i32
    return %c0_i32, %c0_i32_0 : i32, i32
  }
}

</mosaic_0001>

<llo_original>
// kernel: resnet_pca_mini.3
$region0: #{resnet_pca_mini.3}
  #allocation0 [shape = 'u32[]', space=smem, size = 0x4, offset = 0x4, fixed_abs, tag = 'smem constant byte address 0x4 - core index']
  #allocation1 [shape = 'u32[72,128]{1,0:T(1,128)}', space=vmem, size = 0x9000, scoped, tag = 'internal scratch']
  #allocation2 [shape = 'f32[2,256]{1,0:T(2,128)}', space=vmem, size = 0x800, scoped, tag = 'scratch operand']
  %s0 = inlined_call_operand.vmem [shape: bf16[2,4096], index: 0, kind: input, shape index: {}]
  %s1 = inlined_call_operand.hbm [shape: bf16[4096,256], index: 1, kind: input, shape index: {}]
  %s2 = inlined_call_operand.hbm [shape: f32[1,256], index: 2, kind: input, shape index: {}]
  %s3 = inlined_call_operand.hbm [shape: bf16[256,128], index: 3, kind: input, shape index: {}]
  %s4 = inlined_call_operand.hbm [shape: f32[1,128], index: 4, kind: input, shape index: {}]
  %s5 = inlined_call_operand.vmem [shape: bf16[128,16], index: 5, kind: input, shape index: {}]
  %s6 = inlined_call_operand.hbm [shape: f32[1,16], index: 6, kind: input, shape index: {}]
  %s7 = inlined_call_operand.hbm [shape: f32[2,16], index: 7, kind: output, shape index: {}]
  %s8 = sld [smem:[#allocation0]]
  $region89: #{resnet_pca_mini.3} parent=0
    _
  %s10 = ssub.s32 1, %s8
  %s11 = scalar_select 0, %s10, %s8
  $region1: #{resnet_pca_mini.3} parent=0
    #allocation3 [shape = 'u8[524288]{0}', space=vmem, size = 0x80000, scoped, tag = 'input window, operand 1']
    #allocation4 [shape = 's32[2]{0}', space=sflag, size = 0x8, scoped, tag = 'scoped memory for resnet_pca_mini.3']
    #allocation5 [shape = 's32[2]{0}', space=sflag, size = 0x8, scoped, tag = 'scoped memory for resnet_pca_mini.3']
    #allocation6 [shape = 'u8[1024]{0}', space=vmem, size = 0x400, scoped, tag = 'input window, operand 2, single buffered']
    #allocation7 [shape = 's32[1]{0}', space=sflag, size = 0x4, scoped, tag = 'scoped memory for resnet_pca_mini.3']
    #allocation8 [shape = 'u8[65536]{0}', space=vmem, size = 0x10000, scoped, tag = 'input window, operand 3, single buffered']
    #allocation9 [shape = 'u8[512]{0}', space=vmem, size = 0x400, scoped, tag = 'input window, operand 4, single buffered']
    #allocation10 [shape = 's32[1]{0}', space=sflag, size = 0x4, scoped, tag = 'scoped memory for resnet_pca_mini.3']
    #allocation11 [shape = 'u8[512]{0}', space=vmem, size = 0x400, scoped, tag = 'input window, operand 6, single buffered']
    #allocation12 [shape = 'u8[1024]{0}', space=vmem, size = 0x400, scoped, tag = 'output window, operand 0, single buffered']
    %12 = vsyncpa [#allocation4], 0
    %s13 = scalar_lea.sflag [#allocation4], 1
    %14 = vsyncpa %s13, 0
    %15 = vsyncpa [#allocation7], 0
    %16 = vsyncpa [#allocation10], 0
    %17 = vsyncpa [#allocation5], 0
    loop: start=0, step=1, limit=10
    $region2: #{resnet_pca_mini.3} parent=1 // loop_pre_header
      _
    $region3: #{resnet_pca_mini.3} parent=1 // loop_header
      %s19 = sphi 0, %s23
      %p20 = scmp.ge.s32.totalorder %s19, 10
      %s29 = sphi 0, %s31
      %s32 = sphi 0, %s29
      %s33 = sphi 0, %s32
      %s49 = sphi 0, %s33
      %s55 = sphi 0, %s57
      %s58 = sphi 0, %s55
      %s59 = sphi 0, %s58
      %s75 = sphi 0, %s59
      %s79 = sphi 0, %s79
      %s81 = sphi 0, %s79
      %s82 = sphi 0, %s81
      %s96 = sphi 0, %s82
      %s100 = sphi 0, %s100
      %s102 = sphi 0, %s100
      %s103 = sphi 0, %s102
      %s117 = sphi 0, %s103
      %s121 = sphi 0, %s121
      %s123 = sphi 0, %s121
      %s124 = sphi 0, %s123
      %s138 = sphi 0, %s124
      %s142 = sphi 0, %s142
      %s144 = sphi 0, %s142
      %s145 = sphi 0, %s144
      %s159 = sphi 0, %s145
      %s163 = sphi 0, %s163
      %s165 = sphi 0, %s163
      %s166 = sphi 0, %s165
      %s180 = sphi 0, %s166
      %s184 = sphi 0, %s184
      %s186 = sphi 0, %s184
      %s187 = sphi 0, %s186
      %s201 = sphi 0, %s187
    $region4: #{resnet_pca_mini.3} parent=1 // loop_header_branch
      %22 = sbr.rel (%p20) target = $region8
    $region5: #{resnet_pca_mini.3} parent=1 // loop_body
      %s24 = ssub.s32 %s19, 1
      %s25 = ssub.s32 %s19, 2
      %s26 = sadd.s32 %s19, 1
      %s27 = ssub.s32 %s19, %s26
      %p28 = scmp.eq.s32.totalorder %s27, 0
      %s30 = sadd.s32 %s29, 1
      %s31 = scalar_select %p28, %s29, %s30
      %p34 = pneg %p28
      %p35 = scmp.eq.s32.totalorder %s19, 7
      %p36 = por %p34, %p35
      %p37 = scmp.ne.s32.totalorder %s29, %s32
      %p38 = scmp.eq.s32.totalorder %s19, 0
      %p39 = por %p37, %p38
      %p40 = scmp.ne.s32.totalorder %s29, %s32
      %p41 = scmp.eq.s32.totalorder %s24, 7
      %p42 = por %p40, %p41
      %p43 = scmp.ne.s32.totalorder %s32, %s33
      %p44 = scmp.eq.s32.totalorder %s24, 0
      %p45 = por %p43, %p44
      %p46 = scmp.ne.s32.totalorder %s32, %s33
      %p47 = scmp.eq.s32.totalorder %s25, 7
      %p48 = por %p46, %p47
      %p50 = scmp.ne.s32.totalorder %s33, %s49
      %p51 = scmp.eq.s32.totalorder %s25, 0
      %p52 = por %p50, %p51
      %s53 = ssub.s32 %s19, %s26
      %p54 = scmp.eq.s32.totalorder %s53, 0
      %s56 = sadd.s32 %s55, 1
      %s57 = scalar_select %p54, %s55, %s56
      %p60 = pneg %p54
      %p61 = scmp.eq.s32.totalorder %s19, 7
      %p62 = por %p60, %p61
      %p63 = scmp.ne.s32.totalorder %s55, %s58
      %p64 = scmp.eq.s32.totalorder %s19, 0
      %p65 = por %p63, %p64
      %p66 = scmp.ne.s32.totalorder %s55, %s58
      %p67 = scmp.eq.s32.totalorder %s24, 7
      %p68 = por %p66, %p67
      %p69 = scmp.ne.s32.totalorder %s58, %s59
      %p70 = scmp.eq.s32.totalorder %s24, 0
      %p71 = por %p69, %p70
      %p72 = scmp.ne.s32.totalorder %s58, %s59
      %p73 = scmp.eq.s32.totalorder %s25, 7
      %p74 = por %p72, %p73
      %p76 = scmp.ne.s32.totalorder %s59, %s75
      %p77 = scmp.eq.s32.totalorder %s25, 0
      %p78 = por %p76, %p77
      %s80 = sadd.s32 %s79, 1
      %p83 = scmp.eq.s32.totalorder %s19, 7
      %p84 = scmp.ne.s32.totalorder %s79, %s81
      %p85 = scmp.eq.s32.totalorder %s19, 0
      %p86 = por %p84, %p85
      %p87 = scmp.ne.s32.totalorder %s79, %s81
      %p88 = scmp.eq.s32.totalorder %s24, 7
      %p89 = por %p87, %p88
      %p90 = scmp.ne.s32.totalorder %s81, %s82
      %p91 = scmp.eq.s32.totalorder %s24, 0
      %p92 = por %p90, %p91
      %p93 = scmp.ne.s32.totalorder %s81, %s82
      %p94 = scmp.eq.s32.totalorder %s25, 7
      %p95 = por %p93, %p94
      %p97 = scmp.ne.s32.totalorder %s82, %s96
      %p98 = scmp.eq.s32.totalorder %s25, 0
      %p99 = por %p97, %p98
      %s101 = sadd.s32 %s100, 1
      %p104 = scmp.eq.s32.totalorder %s19, 7
      %p105 = scmp.ne.s32.totalorder %s100, %s102
      %p106 = scmp.eq.s32.totalorder %s19, 0
      %p107 = por %p105, %p106
      %p108 = scmp.ne.s32.totalorder %s100, %s102
      %p109 = scmp.eq.s32.totalorder %s24, 7
      %p110 = por %p108, %p109
      %p111 = scmp.ne.s32.totalorder %s102, %s103
      %p112 = scmp.eq.s32.totalorder %s24, 0
      %p113 = por %p111, %p112
      %p114 = scmp.ne.s32.totalorder %s102, %s103
      %p115 = scmp.eq.s32.totalorder %s25, 7
      %p116 = por %p114, %p115
      %p118 = scmp.ne.s32.totalorder %s103, %s117
      %p119 = scmp.eq.s32.totalorder %s25, 0
      %p120 = por %p118, %p119
      %s122 = sadd.s32 %s121, 1
      %p125 = scmp.eq.s32.totalorder %s19, 7
      %p126 = scmp.ne.s32.totalorder %s121, %s123
      %p127 = scmp.eq.s32.totalorder %s19, 0
      %p128 = por %p126, %p127
      %p129 = scmp.ne.s32.totalorder %s121, %s123
      %p130 = scmp.eq.s32.totalorder %s24, 7
      %p131 = por %p129, %p130
      %p132 = scmp.ne.s32.totalorder %s123, %s124
      %p133 = scmp.eq.s32.totalorder %s24, 0
      %p134 = por %p132, %p133
      %p135 = scmp.ne.s32.totalorder %s123, %s124
      %p136 = scmp.eq.s32.totalorder %s25, 7
      %p137 = por %p135, %p136
      %p139 = scmp.ne.s32.totalorder %s124, %s138
      %p140 = scmp.eq.s32.totalorder %s25, 0
      %p141 = por %p139, %p140
      %s143 = sadd.s32 %s142, 1
      %p146 = scmp.eq.s32.totalorder %s19, 7
      %p147 = scmp.ne.s32.totalorder %s142, %s144
      %p148 = scmp.eq.s32.totalorder %s19, 0
      %p149 = por %p147, %p148
      %p150 = scmp.ne.s32.totalorder %s142, %s144
      %p151 = scmp.eq.s32.totalorder %s24, 7
      %p152 = por %p150, %p151
      %p153 = scmp.ne.s32.totalorder %s144, %s145
      %p154 = scmp.eq.s32.totalorder %s24, 0
      %p155 = por %p153, %p154
      %p156 = scmp.ne.s32.totalorder %s144, %s145
      %p157 = scmp.eq.s32.totalorder %s25, 7
      %p158 = por %p156, %p157
      %p160 = scmp.ne.s32.totalorder %s145, %s159
      %p161 = scmp.eq.s32.totalorder %s25, 0
      %p162 = por %p160, %p161
      %s164 = sadd.s32 %s163, 1
      %p167 = scmp.eq.s32.totalorder %s19, 7
      %p168 = scmp.ne.s32.totalorder %s163, %s165
      %p169 = scmp.eq.s32.totalorder %s19, 0
      %p170 = por %p168, %p169
      %p171 = scmp.ne.s32.totalorder %s163, %s165
      %p172 = scmp.eq.s32.totalorder %s24, 7
      %p173 = por %p171, %p172
      %p174 = scmp.ne.s32.totalorder %s165, %s166
      %p175 = scmp.eq.s32.totalorder %s24, 0
      %p176 = por %p174, %p175
      %p177 = scmp.ne.s32.totalorder %s165, %s166
      %p178 = scmp.eq.s32.totalorder %s25, 7
      %p179 = por %p177, %p178
      %p181 = scmp.ne.s32.totalorder %s166, %s180
      %p182 = scmp.eq.s32.totalorder %s25, 0
      %p183 = por %p181, %p182
      %s185 = sadd.s32 %s184, 1
      %p188 = scmp.eq.s32.totalorder %s19, 7
      %p189 = scmp.ne.s32.totalorder %s184, %s186
      %p190 = scmp.eq.s32.totalorder %s19, 0
      %p191 = por %p189, %p190
      %p192 = scmp.ne.s32.totalorder %s184, %s186
      %p193 = scmp.eq.s32.totalorder %s24, 7
      %p194 = por %p192, %p193
      %p195 = scmp.ne.s32.totalorder %s186, %s187
      %p196 = scmp.eq.s32.totalorder %s24, 0
      %p197 = por %p195, %p196
      %p198 = scmp.ne.s32.totalorder %s186, %s187
      %p199 = scmp.eq.s32.totalorder %s25, 7
      %p200 = por %p198, %p199
      %p202 = scmp.ne.s32.totalorder %s187, %s201
      %p203 = scmp.eq.s32.totalorder %s25, 0
      %p204 = por %p202, %p203
      %p205 = scmp.le.s32.totalorder 1, %s19
      %p206 = scmp.lt.s32.totalorder %s19, 9
      %p207 = pnand %p205, %p206
      %p208 = pneg %p207
      // Predicated region
      $region9: #{resnet_pca_mini.3} parent=5 // pred_check
        _
      $region10: #{resnet_pca_mini.3} parent=5 // pred_check_branch
        %210 = sbr.rel (%p207) target = $region12
      $region11: #{resnet_pca_mini.3} parent=5 // pred_region
        %s211 = ssub.s32 %s19, 1
        // Predicated region
        $region13: #{resnet_pca_mini.3} parent=11 // pred_check
          %p212 = pneg %p92
        $region14: #{resnet_pca_mini.3} parent=11 // pred_check_branch
          %214 = sbr.rel (%p212) target = $region16
        $region15: #{resnet_pca_mini.3} parent=11 // pred_region
          %216 = vsyncadd [#allocation7], 0
          %s218 = sshll.u32 %s2, 4
          %s219 = int_to_ptr.hbm [resolvable:$true] %s218
          %s220 = sshll.u32 [#allocation6], 4
          %s221 = int_to_ptr.vmem [resolvable:$true] %s220
          %223 = dma.hbm_to_vmem [thread:$0]  %s219, 32, %s221, [#allocation7]
        $region16: #{resnet_pca_mini.3} parent=11 // pred_fallthru
          _
        // Predicated region
        $region17: #{resnet_pca_mini.3} parent=11 // pred_check
          %p224 = pneg %p113
        $region18: #{resnet_pca_mini.3} parent=11 // pred_check_branch
          %226 = sbr.rel (%p224) target = $region20
        $region19: #{resnet_pca_mini.3} parent=11 // pred_region
          %228 = vsyncadd [#allocation7], 0
          %s229 = sshll.u32 %s3, 4
          %s230 = int_to_ptr.hbm [resolvable:$true] %s229
          %s231 = sshll.u32 [#allocation8], 4
          %s232 = int_to_ptr.vmem [resolvable:$true] %s231
          %237 = dma.hbm_to_vmem [thread:$0]  %s230, 2048, %s232, [#allocation7], 64, 64, 4
        $region20: #{resnet_pca_mini.3} parent=11 // pred_fallthru
          _
        // Predicated region
        $region21: #{resnet_pca_mini.3} parent=11 // pred_check
          %p238 = pneg %p134
        $region22: #{resnet_pca_mini.3} parent=11 // pred_check_branch
          %240 = sbr.rel (%p238) target = $region24
        $region23: #{resnet_pca_mini.3} parent=11 // pred_region
          %242 = vsyncadd [#allocation10], 0
          %s244 = sshll.u32 %s4, 4
          %s245 = int_to_ptr.hbm [resolvable:$true] %s244
          %s246 = sshll.u32 [#allocation9], 4
          %s247 = int_to_ptr.vmem [resolvable:$true] %s246
          %249 = dma.hbm_to_vmem [thread:$0]  %s245, 16, %s247, [#allocation10]
        $region24: #{resnet_pca_mini.3} parent=11 // pred_fallthru
          _
        // Predicated region
        $region25: #{resnet_pca_mini.3} parent=11 // pred_check
          %p250 = pneg %p155
        $region26: #{resnet_pca_mini.3} parent=11 // pred_check_branch
          %252 = sbr.rel (%p250) target = $region28
        $region27: #{resnet_pca_mini.3} parent=11 // pred_region
          _
        $region28: #{resnet_pca_mini.3} parent=11 // pred_fallthru
          _
        // Predicated region
        $region29: #{resnet_pca_mini.3} parent=11 // pred_check
          %p253 = pneg %p176
        $region30: #{resnet_pca_mini.3} parent=11 // pred_check_branch
          %255 = sbr.rel (%p253) target = $region32
        $region31: #{resnet_pca_mini.3} parent=11 // pred_region
          %257 = vsyncadd [#allocation10], 0
          %s259 = sshll.u32 %s6, 4
          %s260 = int_to_ptr.hbm [resolvable:$true] %s259
          %s261 = sshll.u32 [#allocation11], 4
          %s262 = int_to_ptr.vmem [resolvable:$true] %s261
          %264 = dma.hbm_to_vmem [thread:$0]  %s260, 16, %s262, [#allocation10]
        $region32: #{resnet_pca_mini.3} parent=11 // pred_fallthru
          _
      $region12: #{resnet_pca_mini.3} parent=5 // pred_fallthru
        _
      %p265 = scmp.lt.s32.totalorder %s19, 8
      // Predicated region
      $region33: #{resnet_pca_mini.3} parent=5 // pred_check
        %p266 = pneg %p265
      $region34: #{resnet_pca_mini.3} parent=5 // pred_check_branch
        %268 = sbr.rel (%p266) target = $region36
      $region35: #{resnet_pca_mini.3} parent=5 // pred_region
        // Predicated region
        $region37: #{resnet_pca_mini.3} parent=35 // pred_check
          %p269 = pneg %p39
        $region38: #{resnet_pca_mini.3} parent=35 // pred_check_branch
          %271 = sbr.rel (%p269) target = $region40
        $region39: #{resnet_pca_mini.3} parent=35 // pred_region
          %s272 = smul.u32 4, %s19
          %p273 = scmp.lt.s32.totalorder %s272, 31
          %s274 = scalar_select %p273, %s272, 31
          %s275 = scalar_lea.vmem %s0, %s274
          %s276 = smul.u32 4, %s19
        $region40: #{resnet_pca_mini.3} parent=35 // pred_fallthru
          _
        // Predicated region
        $region41: #{resnet_pca_mini.3} parent=35 // pred_check
          %p277 = pneg %p65
        $region42: #{resnet_pca_mini.3} parent=35 // pred_check_branch
          %279 = sbr.rel (%p277) target = $region44
        $region43: #{resnet_pca_mini.3} parent=35 // pred_region
          %s280 = sand.u32 %s55, 1
          %s281 = scalar_lea.sflag [#allocation4], %s280
          %s282 = sand.u32 %s55, 1
          %s283 = smul.addr %s282, 512
          %s284 = scalar_lea.vmem [#allocation3], %s283
          %s285 = smul.u32 64, %s19
          %287 = vsyncadd %s281, 0
          %s288 = smul.addr %s285, 2
          %s289 = smul.addr %s288, 4
          %s290 = scalar_lea.hbm %s1, %s289
          %s291 = sshll.u32 %s290, 4
          %s292 = int_to_ptr.hbm [resolvable:$true] %s291
          %s293 = sshll.u32 %s284, 4
          %s294 = int_to_ptr.vmem [resolvable:$true] %s293
          %299 = dma.hbm_to_vmem [thread:$0]  %s292, 8192, %s294, %s281, 128, 128, 8
        $region44: #{resnet_pca_mini.3} parent=35 // pred_fallthru
          _
      $region36: #{resnet_pca_mini.3} parent=5 // pred_fallthru
        _
      %p300 = scmp.le.s32.totalorder 1, %s19
      %p301 = scmp.lt.s32.totalorder %s19, 9
      %p302 = pnand %p300, %p301
      %p303 = pneg %p302
      // Predicated region
      $region45: #{resnet_pca_mini.3} parent=5 // pred_check
        _
      $region46: #{resnet_pca_mini.3} parent=5 // pred_check_branch
        %305 = sbr.rel (%p302) target = $region48
      $region47: #{resnet_pca_mini.3} parent=5 // pred_region
        %s306 = ssub.s32 %s19, 1
        %s307 = sand.u32 %s58, 1
        %s308 = scalar_lea.sflag [#allocation4], %s307
        %s309 = sand.u32 %s58, 1
        %s310 = smul.addr %s309, 512
        %s311 = scalar_lea.vmem [#allocation3], %s310
        // Predicated region
        $region49: #{resnet_pca_mini.3} parent=47 // pred_check
          %p312 = pneg %p71
        $region50: #{resnet_pca_mini.3} parent=47 // pred_check_branch
          %314 = sbr.rel (%p312) target = $region52
        $region51: #{resnet_pca_mini.3} parent=47 // pred_region
          %316 = dma.done %s308, 8192
        $region52: #{resnet_pca_mini.3} parent=47 // pred_fallthru
          _
        // Predicated region
        $region53: #{resnet_pca_mini.3} parent=47 // pred_check
          %p317 = pneg %p92
        $region54: #{resnet_pca_mini.3} parent=47 // pred_check_branch
          %319 = sbr.rel (%p317) target = $region56
        $region55: #{resnet_pca_mini.3} parent=47 // pred_region
          %321 = dma.done [#allocation7], 32
        $region56: #{resnet_pca_mini.3} parent=47 // pred_fallthru
          _
        // Predicated region
        $region57: #{resnet_pca_mini.3} parent=47 // pred_check
          %p322 = pneg %p113
        $region58: #{resnet_pca_mini.3} parent=47 // pred_check_branch
          %324 = sbr.rel (%p322) target = $region60
        $region59: #{resnet_pca_mini.3} parent=47 // pred_region
          %326 = dma.done [#allocation7], 2048
        $region60: #{resnet_pca_mini.3} parent=47 // pred_fallthru
          _
        // Predicated region
        $region61: #{resnet_pca_mini.3} parent=47 // pred_check
          %p327 = pneg %p134
        $region62: #{resnet_pca_mini.3} parent=47 // pred_check_branch
          %329 = sbr.rel (%p327) target = $region64
        $region63: #{resnet_pca_mini.3} parent=47 // pred_region
          %331 = dma.done [#allocation10], 16
        $region64: #{resnet_pca_mini.3} parent=47 // pred_fallthru
          _
        // Predicated region
        $region65: #{resnet_pca_mini.3} parent=47 // pred_check
          %p332 = pneg %p176
        $region66: #{resnet_pca_mini.3} parent=47 // pred_check_branch
          %334 = sbr.rel (%p332) target = $region68
        $region67: #{resnet_pca_mini.3} parent=47 // pred_region
          %336 = dma.done [#allocation10], 16
        $region68: #{resnet_pca_mini.3} parent=47 // pred_fallthru
          _
        %s337 = smul.u32 4, %s24
        %p338 = scmp.lt.s32.totalorder %s337, 31
        %s339 = scalar_select %p338, %s337, 31
        %s340 = scalar_lea.vmem %s0, %s339
        %p341 = pneg %p45
        %p342 = pneg %p42
        %s343 = sand.u32 %s58, 1
        %s344 = scalar_lea.sflag [#allocation4], %s343
        %s345 = sand.u32 %s58, 1
        %s346 = smul.addr %s345, 512
        %s347 = scalar_lea.vmem [#allocation3], %s346
        %p348 = pneg %p71
        %p349 = pneg %p68
        %p350 = pneg %p92
        %p351 = pneg %p89
        %p352 = pneg %p113
        %p353 = pneg %p110
        %p354 = pneg %p134
        %p355 = pneg %p131
        %p356 = pneg %p155
        %p357 = pneg %p152
        %p358 = pneg %p176
        %p359 = pneg %p173
        %p360 = pneg %p197
        %p361 = pneg %p194
        %s362 = smul.u32 4, %s24
        %p363 = scmp.lt.s32.totalorder %s362, 31
        %s364 = scalar_select %p363, %s362, 31
        %s365 = scalar_lea.vmem %s0, %s364
        %s366 = smul.u32 4, %s24
        %s367 = smul.u32 64, %s24
        %p368 = scmp.eq.s32.totalorder %s24, 0
        // Predicated region
        $region69: #{resnet_pca_mini.3} parent=47 // pred_check
          %p369 = pneg %p368
        $region70: #{resnet_pca_mini.3} parent=47 // pred_check_branch
          %371 = sbr.rel (%p369) target = $region72
        $region71: #{resnet_pca_mini.3} parent=47 // pred_region
          %372 = vst [vmem:[#allocation2] sm:$0xf] 0.0
        $region72: #{resnet_pca_mini.3} parent=47 // pred_fallthru
          _
        %v373 = vld [vmem:[#allocation2] sm:$0xf]
        %v374 = vld [vmem:[%s365] sm:$0xf]
        %v375 = vld [vmem:[%s311] sm:$0xff]
        %v376 = vld [vmem:[%s311 + $0x8] sm:$0xff]
        %v377 = vld [vmem:[%s311 + $0x10] sm:$0xff]
        %v378 = vld [vmem:[%s311 + $0x18] sm:$0xff]
        %v379 = vld [vmem:[%s311 + $0x20] sm:$0xff]
        %v380 = vld [vmem:[%s311 + $0x28] sm:$0xff]
        %v381 = vld [vmem:[%s311 + $0x30] sm:$0xff]
        %v382 = vld [vmem:[%s311 + $0x38] sm:$0xff]
        %v383 = vld [vmem:[%s311 + $0x40] sm:$0xff]
        %v384 = vld [vmem:[%s311 + $0x48] sm:$0xff]
        %v385 = vld [vmem:[%s311 + $0x50] sm:$0xff]
        %v386 = vld [vmem:[%s311 + $0x58] sm:$0xff]
        %v387 = vld [vmem:[%s311 + $0x60] sm:$0xff]
        %v388 = vld [vmem:[%s311 + $0x68] sm:$0xff]
        %v389 = vld [vmem:[%s311 + $0x70] sm:$0xff]
        %v390 = vld [vmem:[%s311 + $0x78] sm:$0xff]
        %v391 = vld [vmem:[%s311 + $0x80] sm:$0xff]
        %v392 = vld [vmem:[%s311 + $0x88] sm:$0xff]
        %v393 = vld [vmem:[%s311 + $0x90] sm:$0xff]
        %v394 = vld [vmem:[%s311 + $0x98] sm:$0xff]
        %v395 = vld [vmem:[%s311 + $0xa0] sm:$0xff]
        %v396 = vld [vmem:[%s311 + $0xa8] sm:$0xff]
        %v397 = vld [vmem:[%s311 + $0xb0] sm:$0xff]
        %v398 = vld [vmem:[%s311 + $0xb8] sm:$0xff]
        %v399 = vld [vmem:[%s311 + $0xc0] sm:$0xff]
        %v400 = vld [vmem:[%s311 + $0xc8] sm:$0xff]
        %v401 = vld [vmem:[%s311 + $0xd0] sm:$0xff]
        %v402 = vld [vmem:[%s311 + $0xd8] sm:$0xff]
        %v403 = vld [vmem:[%s311 + $0xe0] sm:$0xff]
        %v404 = vld [vmem:[%s311 + $0xe8] sm:$0xff]
        %v405 = vld [vmem:[%s311 + $0xf0] sm:$0xff]
        %v406 = vld [vmem:[%s311 + $0xf8] sm:$0xff]
        %v407 = vld [vmem:[%s311 + $0x100] sm:$0xff]
        %v408 = vld [vmem:[%s311 + $0x108] sm:$0xff]
        %v409 = vld [vmem:[%s311 + $0x110] sm:$0xff]
        %v410 = vld [vmem:[%s311 + $0x118] sm:$0xff]
        %v411 = vld [vmem:[%s311 + $0x120] sm:$0xff]
        %v412 = vld [vmem:[%s311 + $0x128] sm:$0xff]
        %v413 = vld [vmem:[%s311 + $0x130] sm:$0xff]
        %v414 = vld [vmem:[%s311 + $0x138] sm:$0xff]
        %v415 = vld [vmem:[%s311 + $0x140] sm:$0xff]
        %v416 = vld [vmem:[%s311 + $0x148] sm:$0xff]
        %v417 = vld [vmem:[%s311 + $0x150] sm:$0xff]
        %v418 = vld [vmem:[%s311 + $0x158] sm:$0xff]
        %v419 = vld [vmem:[%s311 + $0x160] sm:$0xff]
        %v420 = vld [vmem:[%s311 + $0x168] sm:$0xff]
        %v421 = vld [vmem:[%s311 + $0x170] sm:$0xff]
        %v422 = vld [vmem:[%s311 + $0x178] sm:$0xff]
        %v423 = vld [vmem:[%s311 + $0x180] sm:$0xff]
        %v424 = vld [vmem:[%s311 + $0x188] sm:$0xff]
        %v425 = vld [vmem:[%s311 + $0x190] sm:$0xff]
        %v426 = vld [vmem:[%s311 + $0x198] sm:$0xff]
        %v427 = vld [vmem:[%s311 + $0x1a0] sm:$0xff]
        %v428 = vld [vmem:[%s311 + $0x1a8] sm:$0xff]
        %v429 = vld [vmem:[%s311 + $0x1b0] sm:$0xff]
        %v430 = vld [vmem:[%s311 + $0x1b8] sm:$0xff]
        %v431 = vld [vmem:[%s311 + $0x1c0] sm:$0xff]
        %v432 = vld [vmem:[%s311 + $0x1c8] sm:$0xff]
        %v433 = vld [vmem:[%s311 + $0x1d0] sm:$0xff]
        %v434 = vld [vmem:[%s311 + $0x1d8] sm:$0xff]
        %v435 = vld [vmem:[%s311 + $0x1e0] sm:$0xff]
        %v436 = vld [vmem:[%s311 + $0x1e8] sm:$0xff]
        %v437 = vld [vmem:[%s311 + $0x1f0] sm:$0xff]
        %v438 = vld [vmem:[%s311 + $0x1f8] sm:$0xff]
        %440 = vst [vmem:[#allocation1] ss:$9 sm:$0xff] %v374
        %v441 = vld [vmem:[#allocation1] sm:$0xff]
        %v442 = vld [vmem:[#allocation1 + $0x9] sm:$0xff]
        %v443 = vld [vmem:[#allocation1 + $0x12] sm:$0xff]
        %v444 = vld [vmem:[#allocation1 + $0x1b] sm:$0xff]
        %v513 = vunpack.c.l.b16 %v375
        %v514 = vunpack.c.h.b16 %v375
        %v515 = vunpack.c.l.b16 %v376
        %v516 = vunpack.c.h.b16 %v376
        %v517 = vunpack.c.l.b16 %v377
        %v518 = vunpack.c.h.b16 %v377
        %v519 = vunpack.c.l.b16 %v378
        %v520 = vunpack.c.h.b16 %v378
        %v521 = vunpack.c.l.b16 %v379
        %v522 = vunpack.c.h.b16 %v379
        %v523 = vunpack.c.l.b16 %v380
        %v524 = vunpack.c.h.b16 %v380
        %v525 = vunpack.c.l.b16 %v381
        %v526 = vunpack.c.h.b16 %v381
        %v527 = vunpack.c.l.b16 %v382
        %v528 = vunpack.c.h.b16 %v382
        %v529 = vunpack.c.l.b16 %v383
        %v530 = vunpack.c.h.b16 %v383
        %v531 = vunpack.c.l.b16 %v384
        %v532 = vunpack.c.h.b16 %v384
        %v533 = vunpack.c.l.b16 %v385
        %v534 = vunpack.c.h.b16 %v385
        %v535 = vunpack.c.l.b16 %v386
        %v536 = vunpack.c.h.b16 %v386
        %v537 = vunpack.c.l.b16 %v387
        %v538 = vunpack.c.h.b16 %v387
        %v539 = vunpack.c.l.b16 %v388
        %v540 = vunpack.c.h.b16 %v388
        %v541 = vunpack.c.l.b16 %v389
        %v542 = vunpack.c.h.b16 %v389
        %v543 = vunpack.c.l.b16 %v390
        %v544 = vunpack.c.h.b16 %v390
        %v545 = vunpack.c.l.b16 %v391
        %v546 = vunpack.c.h.b16 %v391
        %v547 = vunpack.c.l.b16 %v392
        %v548 = vunpack.c.h.b16 %v392
        %v549 = vunpack.c.l.b16 %v393
        %v550 = vunpack.c.h.b16 %v393
        %v551 = vunpack.c.l.b16 %v394
        %v552 = vunpack.c.h.b16 %v394
        %v553 = vunpack.c.l.b16 %v395
        %v554 = vunpack.c.h.b16 %v395
        %v555 = vunpack.c.l.b16 %v396
        %v556 = vunpack.c.h.b16 %v396
        %v557 = vunpack.c.l.b16 %v397
        %v558 = vunpack.c.h.b16 %v397
        %v559 = vunpack.c.l.b16 %v398
        %v560 = vunpack.c.h.b16 %v398
        %v561 = vunpack.c.l.b16 %v399
        %v562 = vunpack.c.h.b16 %v399
        %v563 = vunpack.c.l.b16 %v400
        %v564 = vunpack.c.h.b16 %v400
        %v565 = vunpack.c.l.b16 %v401
        %v566 = vunpack.c.h.b16 %v401
        %v567 = vunpack.c.l.b16 %v402
        %v568 = vunpack.c.h.b16 %v402
        %v569 = vunpack.c.l.b16 %v403
        %v570 = vunpack.c.h.b16 %v403
        %v571 = vunpack.c.l.b16 %v404
        %v572 = vunpack.c.h.b16 %v404
        %v573 = vunpack.c.l.b16 %v405
        %v574 = vunpack.c.h.b16 %v405
        %v575 = vunpack.c.l.b16 %v406
        %v576 = vunpack.c.h.b16 %v406
        %v577 = vunpack.c.l.b16 %v407
        %v578 = vunpack.c.h.b16 %v407
        %v579 = vunpack.c.l.b16 %v408
        %v580 = vunpack.c.h.b16 %v408
        %v581 = vunpack.c.l.b16 %v409
        %v582 = vunpack.c.h.b16 %v409
        %v583 = vunpack.c.l.b16 %v410
        %v584 = vunpack.c.h.b16 %v410
        %v585 = vunpack.c.l.b16 %v411
        %v586 = vunpack.c.h.b16 %v411
        %v587 = vunpack.c.l.b16 %v412
        %v588 = vunpack.c.h.b16 %v412
        %v589 = vunpack.c.l.b16 %v413
        %v590 = vunpack.c.h.b16 %v413
        %v591 = vunpack.c.l.b16 %v414
        %v592 = vunpack.c.h.b16 %v414
        %v593 = vunpack.c.l.b16 %v415
        %v594 = vunpack.c.h.b16 %v415
        %v595 = vunpack.c.l.b16 %v416
        %v596 = vunpack.c.h.b16 %v416
        %v597 = vunpack.c.l.b16 %v417
        %v598 = vunpack.c.h.b16 %v417
        %v599 = vunpack.c.l.b16 %v418
        %v600 = vunpack.c.h.b16 %v418
        %v601 = vunpack.c.l.b16 %v419
        %v602 = vunpack.c.h.b16 %v419
        %v603 = vunpack.c.l.b16 %v420
        %v604 = vunpack.c.h.b16 %v420
        %v605 = vunpack.c.l.b16 %v421
        %v606 = vunpack.c.h.b16 %v421
        %v607 = vunpack.c.l.b16 %v422
        %v608 = vunpack.c.h.b16 %v422
        %v609 = vunpack.c.l.b16 %v423
        %v610 = vunpack.c.h.b16 %v423
        %v611 = vunpack.c.l.b16 %v424
        %v612 = vunpack.c.h.b16 %v424
        %v613 = vunpack.c.l.b16 %v425
        %v614 = vunpack.c.h.b16 %v425
        %v615 = vunpack.c.l.b16 %v426
        %v616 = vunpack.c.h.b16 %v426
        %v617 = vunpack.c.l.b16 %v427
        %v618 = vunpack.c.h.b16 %v427
        %v619 = vunpack.c.l.b16 %v428
        %v620 = vunpack.c.h.b16 %v428
        %v621 = vunpack.c.l.b16 %v429
        %v622 = vunpack.c.h.b16 %v429
        %v623 = vunpack.c.l.b16 %v430
        %v624 = vunpack.c.h.b16 %v430
        %v625 = vunpack.c.l.b16 %v431
        %v626 = vunpack.c.h.b16 %v431
        %v627 = vunpack.c.l.b16 %v432
        %v628 = vunpack.c.h.b16 %v432
        %v629 = vunpack.c.l.b16 %v433
        %v630 = vunpack.c.h.b16 %v433
        %v631 = vunpack.c.l.b16 %v434
        %v632 = vunpack.c.h.b16 %v434
        %v633 = vunpack.c.l.b16 %v435
        %v634 = vunpack.c.h.b16 %v435
        %v635 = vunpack.c.l.b16 %v436
        %v636 = vunpack.c.h.b16 %v436
        %v637 = vunpack.c.l.b16 %v437
        %v638 = vunpack.c.h.b16 %v437
        %v639 = vunpack.c.l.b16 %v438
        %v640 = vunpack.c.h.b16 %v438
        %v641 = vpack.c.b16 %v515, %v513
        %v642 = vpack.c.b16 %v516, %v514
        %v643 = vpack.c.b16 %v519, %v517
        %v644 = vpack.c.b16 %v520, %v518
        %v645 = vpack.c.b16 %v523, %v521
        %v646 = vpack.c.b16 %v524, %v522
        %v647 = vpack.c.b16 %v527, %v525
        %v648 = vpack.c.b16 %v528, %v526
        %v649 = vpack.c.b16 %v531, %v529
        %v650 = vpack.c.b16 %v532, %v530
        %v651 = vpack.c.b16 %v535, %v533
        %v652 = vpack.c.b16 %v536, %v534
        %v653 = vpack.c.b16 %v539, %v537
        %v654 = vpack.c.b16 %v540, %v538
        %v655 = vpack.c.b16 %v543, %v541
        %v656 = vpack.c.b16 %v544, %v542
        %v657 = vpack.c.b16 %v547, %v545
        %v658 = vpack.c.b16 %v548, %v546
        %v659 = vpack.c.b16 %v551, %v549
        %v660 = vpack.c.b16 %v552, %v550
        %v661 = vpack.c.b16 %v555, %v553
        %v662 = vpack.c.b16 %v556, %v554
        %v663 = vpack.c.b16 %v559, %v557
        %v664 = vpack.c.b16 %v560, %v558
        %v665 = vpack.c.b16 %v563, %v561
        %v666 = vpack.c.b16 %v564, %v562
        %v667 = vpack.c.b16 %v567, %v565
        %v668 = vpack.c.b16 %v568, %v566
        %v669 = vpack.c.b16 %v571, %v569
        %v670 = vpack.c.b16 %v572, %v570
        %v671 = vpack.c.b16 %v575, %v573
        %v672 = vpack.c.b16 %v576, %v574
        %v673 = vpack.c.b16 %v579, %v577
        %v674 = vpack.c.b16 %v580, %v578
        %v675 = vpack.c.b16 %v583, %v581
        %v676 = vpack.c.b16 %v584, %v582
        %v677 = vpack.c.b16 %v587, %v585
        %v678 = vpack.c.b16 %v588, %v586
        %v679 = vpack.c.b16 %v591, %v589
        %v680 = vpack.c.b16 %v592, %v590
        %v681 = vpack.c.b16 %v595, %v593
        %v682 = vpack.c.b16 %v596, %v594
        %v683 = vpack.c.b16 %v599, %v597
        %v684 = vpack.c.b16 %v600, %v598
        %v685 = vpack.c.b16 %v603, %v601
        %v686 = vpack.c.b16 %v604, %v602
        %v687 = vpack.c.b16 %v607, %v605
        %v688 = vpack.c.b16 %v608, %v606
        %v689 = vpack.c.b16 %v611, %v609
        %v690 = vpack.c.b16 %v612, %v610
        %v691 = vpack.c.b16 %v615, %v613
        %v692 = vpack.c.b16 %v616, %v614
        %v693 = vpack.c.b16 %v619, %v617
        %v694 = vpack.c.b16 %v620, %v618
        %v695 = vpack.c.b16 %v623, %v621
        %v696 = vpack.c.b16 %v624, %v622
        %v697 = vpack.c.b16 %v627, %v625
        %v698 = vpack.c.b16 %v628, %v626
        %v699 = vpack.c.b16 %v631, %v629
        %v700 = vpack.c.b16 %v632, %v630
        %v701 = vpack.c.b16 %v635, %v633
        %v702 = vpack.c.b16 %v636, %v634
        %v703 = vpack.c.b16 %v639, %v637
        %v704 = vpack.c.b16 %v640, %v638
        %769 = vmatpush.bf16.msra.mxu0 %v655
        %770 = vmatpush.bf16.msra.mxu0 %v653
        %771 = vmatpush.bf16.msra.mxu0 %v651
        %772 = vmatpush.bf16.msra.mxu0 %v649
        %773 = vmatpush.bf16.msra.mxu0 %v647
        %774 = vmatpush.bf16.msra.mxu0 %v645
        %775 = vmatpush.bf16.msra.mxu0 %v643
        %776 = vmatpush.bf16.msra.mxu0 %v641
        %777 = vmatmul.bf16.gmra.mxu0 %v441
        %v778 = vpop.f32.mrf.mxu0
        %v779 = vadd.f32 0.0, %v778
        %v780 = vpop.f32.mrf.mxu0
        %781 = vdwg.mxu0
        %782 = vmatpush.bf16.msra.mxu0 %v671
        %783 = vmatpush.bf16.msra.mxu0 %v669
        %784 = vmatpush.bf16.msra.mxu0 %v667
        %785 = vmatpush.bf16.msra.mxu0 %v665
        %786 = vmatpush.bf16.msra.mxu0 %v663
        %787 = vmatpush.bf16.msra.mxu0 %v661
        %788 = vmatpush.bf16.msra.mxu0 %v659
        %789 = vmatpush.bf16.msra.mxu0 %v657
        %790 = vmatmul.bf16.gmra.mxu0 %v442
        %v791 = vpop.f32.mrf.mxu0
        %v792 = vadd.f32 %v779, %v791
        %v793 = vpop.f32.mrf.mxu0
        %794 = vdwg.mxu0
        %795 = vmatpush.bf16.msra.mxu0 %v687
        %796 = vmatpush.bf16.msra.mxu0 %v685
        %797 = vmatpush.bf16.msra.mxu0 %v683
        %798 = vmatpush.bf16.msra.mxu0 %v681
        %799 = vmatpush.bf16.msra.mxu0 %v679
        %800 = vmatpush.bf16.msra.mxu0 %v677
        %801 = vmatpush.bf16.msra.mxu0 %v675
        %802 = vmatpush.bf16.msra.mxu0 %v673
        %803 = vmatmul.bf16.gmra.mxu0 %v443
        %v804 = vpop.f32.mrf.mxu0
        %v805 = vadd.f32 %v792, %v804
        %v806 = vpop.f32.mrf.mxu0
        %807 = vdwg.mxu0
        %808 = vmatpush.bf16.msra.mxu0 %v703
        %809 = vmatpush.bf16.msra.mxu0 %v701
        %810 = vmatpush.bf16.msra.mxu0 %v699
        %811 = vmatpush.bf16.msra.mxu0 %v697
        %812 = vmatpush.bf16.msra.mxu0 %v695
        %813 = vmatpush.bf16.msra.mxu0 %v693
        %814 = vmatpush.bf16.msra.mxu0 %v691
        %815 = vmatpush.bf16.msra.mxu0 %v689
        %816 = vmatmul.bf16.gmra.mxu0 %v444
        %v817 = vpop.f32.mrf.mxu0
        %v818 = vadd.f32 %v805, %v817
        %v819 = vpop.f32.mrf.mxu0
        %820 = vdwg.mxu0
        %821 = vmatpush.bf16.msra.mxu0 %v656
        %822 = vmatpush.bf16.msra.mxu0 %v654
        %823 = vmatpush.bf16.msra.mxu0 %v652
        %824 = vmatpush.bf16.msra.mxu0 %v650
        %825 = vmatpush.bf16.msra.mxu0 %v648
        %826 = vmatpush.bf16.msra.mxu0 %v646
        %827 = vmatpush.bf16.msra.mxu0 %v644
        %828 = vmatpush.bf16.msra.mxu0 %v642
        %829 = vmatmul.bf16.gmra.mxu0 %v441
        %v830 = vpop.f32.mrf.mxu0
        %v831 = vadd.f32 0.0, %v830
        %v832 = vpop.f32.mrf.mxu0
        %833 = vdwg.mxu0
        %834 = vmatpush.bf16.msra.mxu0 %v672
        %835 = vmatpush.bf16.msra.mxu0 %v670
        %836 = vmatpush.bf16.msra.mxu0 %v668
        %837 = vmatpush.bf16.msra.mxu0 %v666
        %838 = vmatpush.bf16.msra.mxu0 %v664
        %839 = vmatpush.bf16.msra.mxu0 %v662
        %840 = vmatpush.bf16.msra.mxu0 %v660
        %841 = vmatpush.bf16.msra.mxu0 %v658
        %842 = vmatmul.bf16.gmra.mxu0 %v442
        %v843 = vpop.f32.mrf.mxu0
        %v844 = vadd.f32 %v831, %v843
        %v845 = vpop.f32.mrf.mxu0
        %846 = vdwg.mxu0
        %847 = vmatpush.bf16.msra.mxu0 %v688
        %848 = vmatpush.bf16.msra.mxu0 %v686
        %849 = vmatpush.bf16.msra.mxu0 %v684
        %850 = vmatpush.bf16.msra.mxu0 %v682
        %851 = vmatpush.bf16.msra.mxu0 %v680
        %852 = vmatpush.bf16.msra.mxu0 %v678
        %853 = vmatpush.bf16.msra.mxu0 %v676
        %854 = vmatpush.bf16.msra.mxu0 %v674
        %855 = vmatmul.bf16.gmra.mxu0 %v443
        %v856 = vpop.f32.mrf.mxu0
        %v857 = vadd.f32 %v844, %v856
        %v858 = vpop.f32.mrf.mxu0
        %859 = vdwg.mxu0
        %860 = vmatpush.bf16.msra.mxu0 %v704
        %861 = vmatpush.bf16.msra.mxu0 %v702
        %862 = vmatpush.bf16.msra.mxu0 %v700
        %863 = vmatpush.bf16.msra.mxu0 %v698
        %864 = vmatpush.bf16.msra.mxu0 %v696
        %865 = vmatpush.bf16.msra.mxu0 %v694
        %866 = vmatpush.bf16.msra.mxu0 %v692
        %867 = vmatpush.bf16.msra.mxu0 %v690
        %868 = vmatmul.bf16.gmra.mxu0 %v444
        %v869 = vpop.f32.mrf.mxu0
        %v870 = vadd.f32 %v857, %v869
        %v871 = vpop.f32.mrf.mxu0
        %872 = vdwg.mxu0
        %v875 = vrot.slane %v870, 6
        %vm876 = vcmask 1041408
        %v877 = vsel %vm876, %v818, %v875
        %v879 = vadd.f32 %v373, %v877
        %880 = vst [vmem:[#allocation2] sm:$0xf] %v879
        %p881 = scmp.eq.s32.totalorder %s24, 7
        // Predicated region
        $region73: #{resnet_pca_mini.3} parent=47 // pred_check
          %p882 = pneg %p881
        $region74: #{resnet_pca_mini.3} parent=47 // pred_check_branch
          %884 = sbr.rel (%p882) target = $region76
        $region75: #{resnet_pca_mini.3} parent=47 // pred_region
          %v885 = vld [vmem:[#allocation2] sm:$0xf]
          %v886 = vld [vmem:[#allocation6] sm:$0x3]
          %v888 = vperm.slane %v886, 0
          %v889 = vperm.slane %v886, 1
          %v890 = vrot.slane %v889, 6
          %v891 = vsel %vm876, %v888, %v890
          %v893 = vadd.f32 %v885, %v891
          %v894 = vmax.f32 %v893, 0.0
          %896 = vst [vmem:[#allocation1] ss:$4 sm:$0xff] %v894
          %v897 = vld.sshfl [vmem:[#allocation1] sm:$0xff pattern:$0x73625140]
          %v898 = vld.sshfl [vmem:[#allocation1 + $0x8] sm:$0xff pattern:$0x73625140]
          %v901 = vpack.c.bf16 %v897, %v897
          %v902 = vpack.c.bf16 %v898, %v898
          %v903 = vld [vmem:[#allocation8] sm:$0xf]
          %v904 = vld [vmem:[#allocation8 + $0x4] sm:$0xf]
          %v905 = vld [vmem:[#allocation8 + $0x8] sm:$0xf]
          %v906 = vld [vmem:[#allocation8 + $0xc] sm:$0xf]
          %v907 = vld [vmem:[#allocation8 + $0x10] sm:$0xf]
          %v908 = vld [vmem:[#allocation8 + $0x14] sm:$0xf]
          %v909 = vld [vmem:[#allocation8 + $0x18] sm:$0xf]
          %v910 = vld [vmem:[#allocation8 + $0x1c] sm:$0xf]
          %v911 = vld [vmem:[#allocation8 + $0x20] sm:$0xf]
          %v912 = vld [vmem:[#allocation8 + $0x24] sm:$0xf]
          %v913 = vld [vmem:[#allocation8 + $0x28] sm:$0xf]
          %v914 = vld [vmem:[#allocation8 + $0x2c] sm:$0xf]
          %v915 = vld [vmem:[#allocation8 + $0x30] sm:$0xf]
          %v916 = vld [vmem:[#allocation8 + $0x34] sm:$0xf]
          %v917 = vld [vmem:[#allocation8 + $0x38] sm:$0xf]
          %v918 = vld [vmem:[#allocation8 + $0x3c] sm:$0xf]
          %v919 = vld [vmem:[#allocation8 + $0x40] sm:$0xf]
          %v920 = vld [vmem:[#allocation8 + $0x44] sm:$0xf]
          %v921 = vld [vmem:[#allocation8 + $0x48] sm:$0xf]
          %v922 = vld [vmem:[#allocation8 + $0x4c] sm:$0xf]
          %v923 = vld [vmem:[#allocation8 + $0x50] sm:$0xf]
          %v924 = vld [vmem:[#allocation8 + $0x54] sm:$0xf]
          %v925 = vld [vmem:[#allocation8 + $0x58] sm:$0xf]
          %v926 = vld [vmem:[#allocation8 + $0x5c] sm:$0xf]
          %v927 = vld [vmem:[#allocation8 + $0x60] sm:$0xf]
          %v928 = vld [vmem:[#allocation8 + $0x64] sm:$0xf]
          %v929 = vld [vmem:[#allocation8 + $0x68] sm:$0xf]
          %v930 = vld [vmem:[#allocation8 + $0x6c] sm:$0xf]
          %v931 = vld [vmem:[#allocation8 + $0x70] sm:$0xf]
          %v932 = vld [vmem:[#allocation8 + $0x74] sm:$0xf]
          %v933 = vld [vmem:[#allocation8 + $0x78] sm:$0xf]
          %v934 = vld [vmem:[#allocation8 + $0x7c] sm:$0xf]
          %v935 = vld [vmem:[#allocation9] sm:$0x1]
          %v937 = vperm.slane %v935, 0
          %v971 = vunpack.c.l.b16 %v903
          %v972 = vunpack.c.l.b16 %v904
          %v973 = vunpack.c.l.b16 %v905
          %v974 = vunpack.c.l.b16 %v906
          %v975 = vunpack.c.l.b16 %v907
          %v976 = vunpack.c.l.b16 %v908
          %v977 = vunpack.c.l.b16 %v909
          %v978 = vunpack.c.l.b16 %v910
          %v979 = vunpack.c.l.b16 %v911
          %v980 = vunpack.c.l.b16 %v912
          %v981 = vunpack.c.l.b16 %v913
          %v982 = vunpack.c.l.b16 %v914
          %v983 = vunpack.c.l.b16 %v915
          %v984 = vunpack.c.l.b16 %v916
          %v985 = vunpack.c.l.b16 %v917
          %v986 = vunpack.c.l.b16 %v918
          %v987 = vunpack.c.l.b16 %v919
          %v988 = vunpack.c.l.b16 %v920
          %v989 = vunpack.c.l.b16 %v921
          %v990 = vunpack.c.l.b16 %v922
          %v991 = vunpack.c.l.b16 %v923
          %v992 = vunpack.c.l.b16 %v924
          %v993 = vunpack.c.l.b16 %v925
          %v994 = vunpack.c.l.b16 %v926
          %v995 = vunpack.c.l.b16 %v927
          %v996 = vunpack.c.l.b16 %v928
          %v997 = vunpack.c.l.b16 %v929
          %v998 = vunpack.c.l.b16 %v930
          %v999 = vunpack.c.l.b16 %v931
          %v1000 = vunpack.c.l.b16 %v932
          %v1001 = vunpack.c.l.b16 %v933
          %v1002 = vunpack.c.l.b16 %v934
          %v1003 = vpack.c.b16 %v972, %v971
          %v1004 = vpack.c.b16 %v974, %v973
          %v1005 = vpack.c.b16 %v976, %v975
          %v1006 = vpack.c.b16 %v978, %v977
          %v1007 = vpack.c.b16 %v980, %v979
          %v1008 = vpack.c.b16 %v982, %v981
          %v1009 = vpack.c.b16 %v984, %v983
          %v1010 = vpack.c.b16 %v986, %v985
          %v1011 = vpack.c.b16 %v988, %v987
          %v1012 = vpack.c.b16 %v990, %v989
          %v1013 = vpack.c.b16 %v992, %v991
          %v1014 = vpack.c.b16 %v994, %v993
          %v1015 = vpack.c.b16 %v996, %v995
          %v1016 = vpack.c.b16 %v998, %v997
          %v1017 = vpack.c.b16 %v1000, %v999
          %v1018 = vpack.c.b16 %v1002, %v1001
          %1035 = vmatpush.bf16.msra.mxu0 %v1010
          %1036 = vmatpush.bf16.msra.mxu0 %v1009
          %1037 = vmatpush.bf16.msra.mxu0 %v1008
          %1038 = vmatpush.bf16.msra.mxu0 %v1007
          %1039 = vmatpush.bf16.msra.mxu0 %v1006
          %1040 = vmatpush.bf16.msra.mxu0 %v1005
          %1041 = vmatpush.bf16.msra.mxu0 %v1004
          %1042 = vmatpush.bf16.msra.mxu0 %v1003
          %1043 = vmatmul.bf16.gmra.mxu0 %v901
          %v1044 = vpop.f32.mrf.mxu0
          %v1045 = vadd.f32 %v937, %v1044
          %v1046 = vpop.f32.mrf.mxu0
          %1047 = vdwg.mxu0
          %1048 = vmatpush.bf16.msra.mxu0 %v1018
          %1049 = vmatpush.bf16.msra.mxu0 %v1017
          %1050 = vmatpush.bf16.msra.mxu0 %v1016
          %1051 = vmatpush.bf16.msra.mxu0 %v1015
          %1052 = vmatpush.bf16.msra.mxu0 %v1014
          %1053 = vmatpush.bf16.msra.mxu0 %v1013
          %1054 = vmatpush.bf16.msra.mxu0 %v1012
          %1055 = vmatpush.bf16.msra.mxu0 %v1011
          %1056 = vmatmul.bf16.gmra.mxu0 %v902
          %v1057 = vpop.f32.mrf.mxu0
          %v1058 = vadd.f32 %v1045, %v1057
          %v1059 = vpop.f32.mrf.mxu0
          %1060 = vdwg.mxu0
          %v1061 = vmax.f32 %v1058, 0.0
          %v1062 = vpack.c.bf16 %v1061, %v1061
          %v1063 = vld [vmem:[%s5] sm:$0xf]
          %v1064 = vld [vmem:[%s5 + $0x4] sm:$0xf]
          %v1065 = vld [vmem:[%s5 + $0x8] sm:$0xf]
          %v1066 = vld [vmem:[%s5 + $0xc] sm:$0xf]
          %v1067 = vld [vmem:[%s5 + $0x10] sm:$0xf]
          %v1068 = vld [vmem:[%s5 + $0x14] sm:$0xf]
          %v1069 = vld [vmem:[%s5 + $0x18] sm:$0xf]
          %v1070 = vld [vmem:[%s5 + $0x1c] sm:$0xf]
          %v1071 = vld [vmem:[%s5 + $0x20] sm:$0xf]
          %v1072 = vld [vmem:[%s5 + $0x24] sm:$0xf]
          %v1073 = vld [vmem:[%s5 + $0x28] sm:$0xf]
          %v1074 = vld [vmem:[%s5 + $0x2c] sm:$0xf]
          %v1075 = vld [vmem:[%s5 + $0x30] sm:$0xf]
          %v1076 = vld [vmem:[%s5 + $0x34] sm:$0xf]
          %v1077 = vld [vmem:[%s5 + $0x38] sm:$0xf]
          %v1078 = vld [vmem:[%s5 + $0x3c] sm:$0xf]
          %v1079 = vld [vmem:[#allocation11] sm:$0x1]
          %v1081 = vperm.slane %v1079, 0
          %v1099 = vunpack.c.l.b16 %v1063
          %v1100 = vunpack.c.l.b16 %v1064
          %v1101 = vunpack.c.l.b16 %v1065
          %v1102 = vunpack.c.l.b16 %v1066
          %v1103 = vunpack.c.l.b16 %v1067
          %v1104 = vunpack.c.l.b16 %v1068
          %v1105 = vunpack.c.l.b16 %v1069
          %v1106 = vunpack.c.l.b16 %v1070
          %v1107 = vunpack.c.l.b16 %v1071
          %v1108 = vunpack.c.l.b16 %v1072
          %v1109 = vunpack.c.l.b16 %v1073
          %v1110 = vunpack.c.l.b16 %v1074
          %v1111 = vunpack.c.l.b16 %v1075
          %v1112 = vunpack.c.l.b16 %v1076
          %v1113 = vunpack.c.l.b16 %v1077
          %v1114 = vunpack.c.l.b16 %v1078
          %v1115 = vpack.c.b16 %v1100, %v1099
          %v1116 = vpack.c.b16 %v1102, %v1101
          %v1117 = vpack.c.b16 %v1104, %v1103
          %v1118 = vpack.c.b16 %v1106, %v1105
          %v1119 = vpack.c.b16 %v1108, %v1107
          %v1120 = vpack.c.b16 %v1110, %v1109
          %v1121 = vpack.c.b16 %v1112, %v1111
          %v1122 = vpack.c.b16 %v1114, %v1113
          %1131 = vmatpush.bf16.msra.mxu0 %v1122
          %1132 = vmatpush.bf16.msra.mxu0 %v1121
          %1133 = vmatpush.bf16.msra.mxu0 %v1120
          %1134 = vmatpush.bf16.msra.mxu0 %v1119
          %1135 = vmatpush.bf16.msra.mxu0 %v1118
          %1136 = vmatpush.bf16.msra.mxu0 %v1117
          %1137 = vmatpush.bf16.msra.mxu0 %v1116
          %1138 = vmatpush.bf16.msra.mxu0 %v1115
          %1139 = vmatmul.bf16.gmra.mxu0 %v1062
          %v1140 = vpop.f32.mrf.mxu0
          %v1141 = vadd.f32 %v1081, %v1140
          %v1142 = vpop.f32.mrf.mxu0
          %1143 = vdwg.mxu0
          %vm1144 = vcmask 123904
          %1145 = vst.msk [vmem:[#allocation12] sm:$0x3] %vm1144, %v1141
        $region76: #{resnet_pca_mini.3} parent=47 // pred_fallthru
          _
        // Predicated region
        $region77: #{resnet_pca_mini.3} parent=47 // pred_check
          %p1146 = pneg %p194
        $region78: #{resnet_pca_mini.3} parent=47 // pred_check_branch
          %1148 = sbr.rel (%p1146) target = $region80
        $region79: #{resnet_pca_mini.3} parent=47 // pred_region
          %1150 = vsyncadd [#allocation5], 0
          %s1152 = sshll.u32 [#allocation12], 4
          %s1153 = int_to_ptr.vmem [resolvable:$true] %s1152
          %s1154 = sshll.u32 %s7, 4
          %s1155 = int_to_ptr.hbm [resolvable:$true] %s1154
          %1157 = dma.vmem_to_hbm [thread:$0]  %s1153, 32, %s1155, [#allocation5]
        $region80: #{resnet_pca_mini.3} parent=47 // pred_fallthru
          _
        // Predicated region
        $region81: #{resnet_pca_mini.3} parent=47 // pred_check
          %p1158 = pneg %p194
        $region82: #{resnet_pca_mini.3} parent=47 // pred_check_branch
          %1160 = sbr.rel (%p1158) target = $region84
        $region83: #{resnet_pca_mini.3} parent=47 // pred_region
          %1162 = dma.done [#allocation5], 32
        $region84: #{resnet_pca_mini.3} parent=47 // pred_fallthru
          _
      $region48: #{resnet_pca_mini.3} parent=5 // pred_fallthru
        _
      %p1163 = scmp.le.s32.totalorder 2, %s19
      // Predicated region
      $region85: #{resnet_pca_mini.3} parent=5 // pred_check
        %p1164 = pneg %p1163
      $region86: #{resnet_pca_mini.3} parent=5 // pred_check_branch
        %1166 = sbr.rel (%p1164) target = $region88
      $region87: #{resnet_pca_mini.3} parent=5 // pred_region
        %s1167 = ssub.s32 %s19, 2
      $region88: #{resnet_pca_mini.3} parent=5 // pred_fallthru
        _
    $region6: #{resnet_pca_mini.3} parent=1 // loop_footer
      %s23 = sadd.s32 1, %s19
    $region7: #{resnet_pca_mini.3} parent=1 // loop_footer_branch
      %18 = sbr.rel target = $region3
    $region8: #{resnet_pca_mini.3} parent=1 // loop_exit
      _
    %1168 = vsyncpa [#allocation4], 1
    %s1169 = scalar_lea.sflag [#allocation4], 1
    %1170 = vsyncpa %s1169, 1
    %1171 = vsyncpa [#allocation7], 1
    %1172 = vsyncpa [#allocation10], 1
    %1173 = vsyncpa [#allocation5], 1
    %s1174 = scalar_lea.sflag [#allocation5], 1
    %1175 = vsyncpa %s1174, 1

// kernel: resnet_pca_mini.2
$region0: #{resnet_pca_mini.2}
  #allocation0 [shape = 'u32[]', space=smem, size = 0x4, offset = 0x4, fixed_abs, tag = 'smem constant byte address 0x4 - core index']
  #allocation1 [shape = 'u32[72,128]{1,0:T(1,128)}', space=vmem, size = 0x9000, scoped, tag = 'internal scratch']
  %s0 = inlined_call_operand.vmem [shape: f32[2,32,4], index: 0, kind: input, shape index: {}]
  %s1 = inlined_call_operand.hbm [shape: bf16[12,128], index: 1, kind: input, shape index: {}]
  %s2 = inlined_call_operand.hbm [shape: f32[2,128], index: 2, kind: input, shape index: {}]
  %s3 = inlined_call_operand.vmem [shape: bf16[192,64], index: 3, kind: input, shape index: {}]
  %s4 = inlined_call_operand.hbm [shape: f32[2,64], index: 4, kind: input, shape index: {}]
  %s5 = inlined_call_operand.hbm [shape: bf16[192,320], index: 5, kind: input, shape index: {}]
  %s6 = inlined_call_operand.hbm [shape: f32[2,320], index: 6, kind: input, shape index: {}]
  %s7 = inlined_call_operand.vmem [shape: bf16[576,192], index: 7, kind: input, shape index: {}]
  %s8 = inlined_call_operand.hbm [shape: f32[2,192], index: 8, kind: input, shape index: {}]
  %s9 = inlined_call_operand.hbm [shape: bf16[384,128], index: 9, kind: input, shape index: {}]
  %s10 = inlined_call_operand.hbm [shape: f32[2,128], index: 10, kind: input, shape index: {}]
  %s11 = inlined_call_operand.vmem [shape: bf16[192,64], index: 11, kind: input, shape index: {}]
  %s12 = inlined_call_operand.hbm [shape: f32[2,64], index: 12, kind: input, shape index: {}]
  %s13 = inlined_call_operand.vmem [shape: bf16[2,32,128], index: 13, kind: output, shape index: {}]
  %s14 = sld [smem:[#allocation0]]
  $region121: #{resnet_pca_mini.2} parent=0
    _
  %s16 = ssub.s32 1, %s14
  %s17 = scalar_select 0, %s16, %s14
  $region1: #{resnet_pca_mini.2} parent=0
    #allocation2 [shape = 'u8[4096]{0}', space=vmem, size = 0x1000, scoped, tag = 'input window, operand 1, single buffered']
    #allocation3 [shape = 's32[2]{0}', space=sflag, size = 0x8, scoped, tag = 'scoped memory for resnet_pca_mini.2']
    #allocation4 [shape = 'u8[1024]{0}', space=vmem, size = 0x400, scoped, tag = 'input window, operand 2, single buffered']
    #allocation5 [shape = 's32[1]{0}', space=sflag, size = 0x4, scoped, tag = 'scoped memory for resnet_pca_mini.2']
    #allocation6 [shape = 'u8[1024]{0}', space=vmem, size = 0x400, scoped, tag = 'input window, operand 4, single buffered']
    #allocation7 [shape = 'u8[147456]{0}', space=vmem, size = 0x24000, scoped, tag = 'input window, operand 5, single buffered']
    #allocation8 [shape = 's32[1]{0}', space=sflag, size = 0x4, scoped, tag = 'scoped memory for resnet_pca_mini.2']
    #allocation9 [shape = 'u8[3072]{0}', space=vmem, size = 0xc00, scoped, tag = 'input window, operand 6, single buffered']
    #allocation10 [shape = 'u8[2048]{0}', space=vmem, size = 0x800, scoped, tag = 'input window, operand 8, single buffered']
    #allocation11 [shape = 's32[1]{0}', space=sflag, size = 0x4, scoped, tag = 'scoped memory for resnet_pca_mini.2']
    #allocation12 [shape = 'u8[98304]{0}', space=vmem, size = 0x18000, scoped, tag = 'input window, operand 9, single buffered']
    #allocation13 [shape = 'u8[1024]{0}', space=vmem, size = 0x400, scoped, tag = 'input window, operand 10, single buffered']
    #allocation14 [shape = 's32[1]{0}', space=sflag, size = 0x4, scoped, tag = 'scoped memory for resnet_pca_mini.2']
    #allocation15 [shape = 'u8[1024]{0}', space=vmem, size = 0x400, scoped, tag = 'input window, operand 12, single buffered']
    %18 = vsyncpa [#allocation3], 0
    %19 = vsyncpa [#allocation5], 0
    %20 = vsyncpa [#allocation8], 0
    %21 = vsyncpa [#allocation11], 0
    %22 = vsyncpa [#allocation14], 0
    loop: start=0, step=1, limit=4
    $region2: #{resnet_pca_mini.2} parent=1 // loop_pre_header
      _
    $region3: #{resnet_pca_mini.2} parent=1 // loop_header
      %s24 = sphi 0, %s28
      %p25 = scmp.ge.s32.totalorder %s24, 4
      %s34 = sphi 0, %s36
      %s37 = sphi 0, %s34
      %s38 = sphi 0, %s37
      %s54 = sphi 0, %s38
      %s58 = sphi 0, %s58
      %s60 = sphi 0, %s58
      %s61 = sphi 0, %s60
      %s75 = sphi 0, %s61
      %s79 = sphi 0, %s79
      %s81 = sphi 0, %s79
      %s82 = sphi 0, %s81
      %s96 = sphi 0, %s82
      %s100 = sphi 0, %s100
      %s102 = sphi 0, %s100
      %s103 = sphi 0, %s102
      %s117 = sphi 0, %s103
      %s121 = sphi 0, %s121
      %s123 = sphi 0, %s121
      %s124 = sphi 0, %s123
      %s138 = sphi 0, %s124
      %s142 = sphi 0, %s142
      %s144 = sphi 0, %s142
      %s145 = sphi 0, %s144
      %s159 = sphi 0, %s145
      %s163 = sphi 0, %s163
      %s165 = sphi 0, %s163
      %s166 = sphi 0, %s165
      %s180 = sphi 0, %s166
      %s184 = sphi 0, %s184
      %s186 = sphi 0, %s184
      %s187 = sphi 0, %s186
      %s201 = sphi 0, %s187
      %s205 = sphi 0, %s205
      %s207 = sphi 0, %s205
      %s208 = sphi 0, %s207
      %s222 = sphi 0, %s208
      %s226 = sphi 0, %s226
      %s228 = sphi 0, %s226
      %s229 = sphi 0, %s228
      %s243 = sphi 0, %s229
      %s247 = sphi 0, %s247
      %s249 = sphi 0, %s247
      %s250 = sphi 0, %s249
      %s264 = sphi 0, %s250
      %s268 = sphi 0, %s268
      %s270 = sphi 0, %s268
      %s271 = sphi 0, %s270
      %s285 = sphi 0, %s271
      %s289 = sphi 0, %s289
      %s291 = sphi 0, %s289
      %s292 = sphi 0, %s291
      %s306 = sphi 0, %s292
      %s312 = sphi 0, %s314
      %s315 = sphi 0, %s312
      %s316 = sphi 0, %s315
      %s332 = sphi 0, %s316
    $region4: #{resnet_pca_mini.2} parent=1 // loop_header_branch
      %27 = sbr.rel (%p25) target = $region8
    $region5: #{resnet_pca_mini.2} parent=1 // loop_body
      %s29 = ssub.s32 %s24, 1
      %s30 = ssub.s32 %s24, 2
      %s31 = sadd.s32 %s24, 1
      %s32 = ssub.s32 %s24, %s31
      %p33 = scmp.eq.s32.totalorder %s32, 0
      %s35 = sadd.s32 %s34, 1
      %s36 = scalar_select %p33, %s34, %s35
      %p39 = pneg %p33
      %p40 = scmp.eq.s32.totalorder %s24, 1
      %p41 = por %p39, %p40
      %p42 = scmp.ne.s32.totalorder %s34, %s37
      %p43 = scmp.eq.s32.totalorder %s24, 0
      %p44 = por %p42, %p43
      %p45 = scmp.ne.s32.totalorder %s34, %s37
      %p46 = scmp.eq.s32.totalorder %s29, 1
      %p47 = por %p45, %p46
      %p48 = scmp.ne.s32.totalorder %s37, %s38
      %p49 = scmp.eq.s32.totalorder %s29, 0
      %p50 = por %p48, %p49
      %p51 = scmp.ne.s32.totalorder %s37, %s38
      %p52 = scmp.eq.s32.totalorder %s30, 1
      %p53 = por %p51, %p52
      %p55 = scmp.ne.s32.totalorder %s38, %s54
      %p56 = scmp.eq.s32.totalorder %s30, 0
      %p57 = por %p55, %p56
      %s59 = sadd.s32 %s58, 1
      %p62 = scmp.eq.s32.totalorder %s24, 1
      %p63 = scmp.ne.s32.totalorder %s58, %s60
      %p64 = scmp.eq.s32.totalorder %s24, 0
      %p65 = por %p63, %p64
      %p66 = scmp.ne.s32.totalorder %s58, %s60
      %p67 = scmp.eq.s32.totalorder %s29, 1
      %p68 = por %p66, %p67
      %p69 = scmp.ne.s32.totalorder %s60, %s61
      %p70 = scmp.eq.s32.totalorder %s29, 0
      %p71 = por %p69, %p70
      %p72 = scmp.ne.s32.totalorder %s60, %s61
      %p73 = scmp.eq.s32.totalorder %s30, 1
      %p74 = por %p72, %p73
      %p76 = scmp.ne.s32.totalorder %s61, %s75
      %p77 = scmp.eq.s32.totalorder %s30, 0
      %p78 = por %p76, %p77
      %s80 = sadd.s32 %s79, 1
      %p83 = scmp.eq.s32.totalorder %s24, 1
      %p84 = scmp.ne.s32.totalorder %s79, %s81
      %p85 = scmp.eq.s32.totalorder %s24, 0
      %p86 = por %p84, %p85
      %p87 = scmp.ne.s32.totalorder %s79, %s81
      %p88 = scmp.eq.s32.totalorder %s29, 1
      %p89 = por %p87, %p88
      %p90 = scmp.ne.s32.totalorder %s81, %s82
      %p91 = scmp.eq.s32.totalorder %s29, 0
      %p92 = por %p90, %p91
      %p93 = scmp.ne.s32.totalorder %s81, %s82
      %p94 = scmp.eq.s32.totalorder %s30, 1
      %p95 = por %p93, %p94
      %p97 = scmp.ne.s32.totalorder %s82, %s96
      %p98 = scmp.eq.s32.totalorder %s30, 0
      %p99 = por %p97, %p98
      %s101 = sadd.s32 %s100, 1
      %p104 = scmp.eq.s32.totalorder %s24, 1
      %p105 = scmp.ne.s32.totalorder %s100, %s102
      %p106 = scmp.eq.s32.totalorder %s24, 0
      %p107 = por %p105, %p106
      %p108 = scmp.ne.s32.totalorder %s100, %s102
      %p109 = scmp.eq.s32.totalorder %s29, 1
      %p110 = por %p108, %p109
      %p111 = scmp.ne.s32.totalorder %s102, %s103
      %p112 = scmp.eq.s32.totalorder %s29, 0
      %p113 = por %p111, %p112
      %p114 = scmp.ne.s32.totalorder %s102, %s103
      %p115 = scmp.eq.s32.totalorder %s30, 1
      %p116 = por %p114, %p115
      %p118 = scmp.ne.s32.totalorder %s103, %s117
      %p119 = scmp.eq.s32.totalorder %s30, 0
      %p120 = por %p118, %p119
      %s122 = sadd.s32 %s121, 1
      %p125 = scmp.eq.s32.totalorder %s24, 1
      %p126 = scmp.ne.s32.totalorder %s121, %s123
      %p127 = scmp.eq.s32.totalorder %s24, 0
      %p128 = por %p126, %p127
      %p129 = scmp.ne.s32.totalorder %s121, %s123
      %p130 = scmp.eq.s32.totalorder %s29, 1
      %p131 = por %p129, %p130
      %p132 = scmp.ne.s32.totalorder %s123, %s124
      %p133 = scmp.eq.s32.totalorder %s29, 0
      %p134 = por %p132, %p133
      %p135 = scmp.ne.s32.totalorder %s123, %s124
      %p136 = scmp.eq.s32.totalorder %s30, 1
      %p137 = por %p135, %p136
      %p139 = scmp.ne.s32.totalorder %s124, %s138
      %p140 = scmp.eq.s32.totalorder %s30, 0
      %p141 = por %p139, %p140
      %s143 = sadd.s32 %s142, 1
      %p146 = scmp.eq.s32.totalorder %s24, 1
      %p147 = scmp.ne.s32.totalorder %s142, %s144
      %p148 = scmp.eq.s32.totalorder %s24, 0
      %p149 = por %p147, %p148
      %p150 = scmp.ne.s32.totalorder %s142, %s144
      %p151 = scmp.eq.s32.totalorder %s29, 1
      %p152 = por %p150, %p151
      %p153 = scmp.ne.s32.totalorder %s144, %s145
      %p154 = scmp.eq.s32.totalorder %s29, 0
      %p155 = por %p153, %p154
      %p156 = scmp.ne.s32.totalorder %s144, %s145
      %p157 = scmp.eq.s32.totalorder %s30, 1
      %p158 = por %p156, %p157
      %p160 = scmp.ne.s32.totalorder %s145, %s159
      %p161 = scmp.eq.s32.totalorder %s30, 0
      %p162 = por %p160, %p161
      %s164 = sadd.s32 %s163, 1
      %p167 = scmp.eq.s32.totalorder %s24, 1
      %p168 = scmp.ne.s32.totalorder %s163, %s165
      %p169 = scmp.eq.s32.totalorder %s24, 0
      %p170 = por %p168, %p169
      %p171 = scmp.ne.s32.totalorder %s163, %s165
      %p172 = scmp.eq.s32.totalorder %s29, 1
      %p173 = por %p171, %p172
      %p174 = scmp.ne.s32.totalorder %s165, %s166
      %p175 = scmp.eq.s32.totalorder %s29, 0
      %p176 = por %p174, %p175
      %p177 = scmp.ne.s32.totalorder %s165, %s166
      %p178 = scmp.eq.s32.totalorder %s30, 1
      %p179 = por %p177, %p178
      %p181 = scmp.ne.s32.totalorder %s166, %s180
      %p182 = scmp.eq.s32.totalorder %s30, 0
      %p183 = por %p181, %p182
      %s185 = sadd.s32 %s184, 1
      %p188 = scmp.eq.s32.totalorder %s24, 1
      %p189 = scmp.ne.s32.totalorder %s184, %s186
      %p190 = scmp.eq.s32.totalorder %s24, 0
      %p191 = por %p189, %p190
      %p192 = scmp.ne.s32.totalorder %s184, %s186
      %p193 = scmp.eq.s32.totalorder %s29, 1
      %p194 = por %p192, %p193
      %p195 = scmp.ne.s32.totalorder %s186, %s187
      %p196 = scmp.eq.s32.totalorder %s29, 0
      %p197 = por %p195, %p196
      %p198 = scmp.ne.s32.totalorder %s186, %s187
      %p199 = scmp.eq.s32.totalorder %s30, 1
      %p200 = por %p198, %p199
      %p202 = scmp.ne.s32.totalorder %s187, %s201
      %p203 = scmp.eq.s32.totalorder %s30, 0
      %p204 = por %p202, %p203
      %s206 = sadd.s32 %s205, 1
      %p209 = scmp.eq.s32.totalorder %s24, 1
      %p210 = scmp.ne.s32.totalorder %s205, %s207
      %p211 = scmp.eq.s32.totalorder %s24, 0
      %p212 = por %p210, %p211
      %p213 = scmp.ne.s32.totalorder %s205, %s207
      %p214 = scmp.eq.s32.totalorder %s29, 1
      %p215 = por %p213, %p214
      %p216 = scmp.ne.s32.totalorder %s207, %s208
      %p217 = scmp.eq.s32.totalorder %s29, 0
      %p218 = por %p216, %p217
      %p219 = scmp.ne.s32.totalorder %s207, %s208
      %p220 = scmp.eq.s32.totalorder %s30, 1
      %p221 = por %p219, %p220
      %p223 = scmp.ne.s32.totalorder %s208, %s222
      %p224 = scmp.eq.s32.totalorder %s30, 0
      %p225 = por %p223, %p224
      %s227 = sadd.s32 %s226, 1
      %p230 = scmp.eq.s32.totalorder %s24, 1
      %p231 = scmp.ne.s32.totalorder %s226, %s228
      %p232 = scmp.eq.s32.totalorder %s24, 0
      %p233 = por %p231, %p232
      %p234 = scmp.ne.s32.totalorder %s226, %s228
      %p235 = scmp.eq.s32.totalorder %s29, 1
      %p236 = por %p234, %p235
      %p237 = scmp.ne.s32.totalorder %s228, %s229
      %p238 = scmp.eq.s32.totalorder %s29, 0
      %p239 = por %p237, %p238
      %p240 = scmp.ne.s32.totalorder %s228, %s229
      %p241 = scmp.eq.s32.totalorder %s30, 1
      %p242 = por %p240, %p241
      %p244 = scmp.ne.s32.totalorder %s229, %s243
      %p245 = scmp.eq.s32.totalorder %s30, 0
      %p246 = por %p244, %p245
      %s248 = sadd.s32 %s247, 1
      %p251 = scmp.eq.s32.totalorder %s24, 1
      %p252 = scmp.ne.s32.totalorder %s247, %s249
      %p253 = scmp.eq.s32.totalorder %s24, 0
      %p254 = por %p252, %p253
      %p255 = scmp.ne.s32.totalorder %s247, %s249
      %p256 = scmp.eq.s32.totalorder %s29, 1
      %p257 = por %p255, %p256
      %p258 = scmp.ne.s32.totalorder %s249, %s250
      %p259 = scmp.eq.s32.totalorder %s29, 0
      %p260 = por %p258, %p259
      %p261 = scmp.ne.s32.totalorder %s249, %s250
      %p262 = scmp.eq.s32.totalorder %s30, 1
      %p263 = por %p261, %p262
      %p265 = scmp.ne.s32.totalorder %s250, %s264
      %p266 = scmp.eq.s32.totalorder %s30, 0
      %p267 = por %p265, %p266
      %s269 = sadd.s32 %s268, 1
      %p272 = scmp.eq.s32.totalorder %s24, 1
      %p273 = scmp.ne.s32.totalorder %s268, %s270
      %p274 = scmp.eq.s32.totalorder %s24, 0
      %p275 = por %p273, %p274
      %p276 = scmp.ne.s32.totalorder %s268, %s270
      %p277 = scmp.eq.s32.totalorder %s29, 1
      %p278 = por %p276, %p277
      %p279 = scmp.ne.s32.totalorder %s270, %s271
      %p280 = scmp.eq.s32.totalorder %s29, 0
      %p281 = por %p279, %p280
      %p282 = scmp.ne.s32.totalorder %s270, %s271
      %p283 = scmp.eq.s32.totalorder %s30, 1
      %p284 = por %p282, %p283
      %p286 = scmp.ne.s32.totalorder %s271, %s285
      %p287 = scmp.eq.s32.totalorder %s30, 0
      %p288 = por %p286, %p287
      %s290 = sadd.s32 %s289, 1
      %p293 = scmp.eq.s32.totalorder %s24, 1
      %p294 = scmp.ne.s32.totalorder %s289, %s291
      %p295 = scmp.eq.s32.totalorder %s24, 0
      %p296 = por %p294, %p295
      %p297 = scmp.ne.s32.totalorder %s289, %s291
      %p298 = scmp.eq.s32.totalorder %s29, 1
      %p299 = por %p297, %p298
      %p300 = scmp.ne.s32.totalorder %s291, %s292
      %p301 = scmp.eq.s32.totalorder %s29, 0
      %p302 = por %p300, %p301
      %p303 = scmp.ne.s32.totalorder %s291, %s292
      %p304 = scmp.eq.s32.totalorder %s30, 1
      %p305 = por %p303, %p304
      %p307 = scmp.ne.s32.totalorder %s292, %s306
      %p308 = scmp.eq.s32.totalorder %s30, 0
      %p309 = por %p307, %p308
      %s310 = ssub.s32 %s24, %s31
      %p311 = scmp.eq.s32.totalorder %s310, 0
      %s313 = sadd.s32 %s312, 1
      %s314 = scalar_select %p311, %s312, %s313
      %p317 = pneg %p311
      %p318 = scmp.eq.s32.totalorder %s24, 1
      %p319 = por %p317, %p318
      %p320 = scmp.ne.s32.totalorder %s312, %s315
      %p321 = scmp.eq.s32.totalorder %s24, 0
      %p322 = por %p320, %p321
      %p323 = scmp.ne.s32.totalorder %s312, %s315
      %p324 = scmp.eq.s32.totalorder %s29, 1
      %p325 = por %p323, %p324
      %p326 = scmp.ne.s32.totalorder %s315, %s316
      %p327 = scmp.eq.s32.totalorder %s29, 0
      %p328 = por %p326, %p327
      %p329 = scmp.ne.s32.totalorder %s315, %s316
      %p330 = scmp.eq.s32.totalorder %s30, 1
      %p331 = por %p329, %p330
      %p333 = scmp.ne.s32.totalorder %s316, %s332
      %p334 = scmp.eq.s32.totalorder %s30, 0
      %p335 = por %p333, %p334
      %p336 = scmp.le.s32.totalorder 1, %s24
      %p337 = scmp.lt.s32.totalorder %s24, 3
      %p338 = pnand %p336, %p337
      %p339 = pneg %p338
      // Predicated region
      $region9: #{resnet_pca_mini.2} parent=5 // pred_check
        _
      $region10: #{resnet_pca_mini.2} parent=5 // pred_check_branch
        %341 = sbr.rel (%p338) target = $region12
      $region11: #{resnet_pca_mini.2} parent=5 // pred_region
        %s342 = ssub.s32 %s24, 1
        // Predicated region
        $region13: #{resnet_pca_mini.2} parent=11 // pred_check
          %p343 = pneg %p71
        $region14: #{resnet_pca_mini.2} parent=11 // pred_check_branch
          %345 = sbr.rel (%p343) target = $region16
        $region15: #{resnet_pca_mini.2} parent=11 // pred_region
          %347 = vsyncadd [#allocation3], 0
          %s348 = sshll.u32 %s1, 4
          %s349 = int_to_ptr.hbm [resolvable:$true] %s348
          %s350 = sshll.u32 [#allocation2], 4
          %s351 = int_to_ptr.vmem [resolvable:$true] %s350
          %356 = dma.hbm_to_vmem [thread:$0]  %s349, 128, %s351, [#allocation3], 64, 64, 4
        $region16: #{resnet_pca_mini.2} parent=11 // pred_fallthru
          _
        // Predicated region
        $region17: #{resnet_pca_mini.2} parent=11 // pred_check
          %p357 = pneg %p92
        $region18: #{resnet_pca_mini.2} parent=11 // pred_check_branch
          %359 = sbr.rel (%p357) target = $region20
        $region19: #{resnet_pca_mini.2} parent=11 // pred_region
          %361 = vsyncadd [#allocation5], 0
          %s363 = sshll.u32 %s2, 4
          %s364 = int_to_ptr.hbm [resolvable:$true] %s363
          %s365 = sshll.u32 [#allocation4], 4
          %s366 = int_to_ptr.vmem [resolvable:$true] %s365
          %368 = dma.hbm_to_vmem [thread:$0]  %s364, 32, %s366, [#allocation5]
        $region20: #{resnet_pca_mini.2} parent=11 // pred_fallthru
          _
        // Predicated region
        $region21: #{resnet_pca_mini.2} parent=11 // pred_check
          %p369 = pneg %p113
        $region22: #{resnet_pca_mini.2} parent=11 // pred_check_branch
          %371 = sbr.rel (%p369) target = $region24
        $region23: #{resnet_pca_mini.2} parent=11 // pred_region
          _
        $region24: #{resnet_pca_mini.2} parent=11 // pred_fallthru
          _
        // Predicated region
        $region25: #{resnet_pca_mini.2} parent=11 // pred_check
          %p372 = pneg %p134
        $region26: #{resnet_pca_mini.2} parent=11 // pred_check_branch
          %374 = sbr.rel (%p372) target = $region28
        $region27: #{resnet_pca_mini.2} parent=11 // pred_region
          %376 = vsyncadd [#allocation5], 0
          %s378 = sshll.u32 %s4, 4
          %s379 = int_to_ptr.hbm [resolvable:$true] %s378
          %s380 = sshll.u32 [#allocation6], 4
          %s381 = int_to_ptr.vmem [resolvable:$true] %s380
          %383 = dma.hbm_to_vmem [thread:$0]  %s379, 32, %s381, [#allocation5]
        $region28: #{resnet_pca_mini.2} parent=11 // pred_fallthru
          _
        // Predicated region
        $region29: #{resnet_pca_mini.2} parent=11 // pred_check
          %p384 = pneg %p155
        $region30: #{resnet_pca_mini.2} parent=11 // pred_check_branch
          %386 = sbr.rel (%p384) target = $region32
        $region31: #{resnet_pca_mini.2} parent=11 // pred_region
          %388 = vsyncadd [#allocation8], 0
          %s389 = sshll.u32 %s5, 4
          %s390 = int_to_ptr.hbm [resolvable:$true] %s389
          %s391 = sshll.u32 [#allocation7], 4
          %s392 = int_to_ptr.vmem [resolvable:$true] %s391
          %397 = dma.hbm_to_vmem [thread:$0]  %s390, 4608, %s392, [#allocation8], 192, 192, 12
        $region32: #{resnet_pca_mini.2} parent=11 // pred_fallthru
          _
        // Predicated region
        $region33: #{resnet_pca_mini.2} parent=11 // pred_check
          %p398 = pneg %p176
        $region34: #{resnet_pca_mini.2} parent=11 // pred_check_branch
          %400 = sbr.rel (%p398) target = $region36
        $region35: #{resnet_pca_mini.2} parent=11 // pred_region
          %402 = vsyncadd [#allocation8], 0
          %s404 = sshll.u32 %s6, 4
          %s405 = int_to_ptr.hbm [resolvable:$true] %s404
          %s406 = sshll.u32 [#allocation9], 4
          %s407 = int_to_ptr.vmem [resolvable:$true] %s406
          %409 = dma.hbm_to_vmem [thread:$0]  %s405, 96, %s407, [#allocation8]
        $region36: #{resnet_pca_mini.2} parent=11 // pred_fallthru
          _
        // Predicated region
        $region37: #{resnet_pca_mini.2} parent=11 // pred_check
          %p410 = pneg %p197
        $region38: #{resnet_pca_mini.2} parent=11 // pred_check_branch
          %412 = sbr.rel (%p410) target = $region40
        $region39: #{resnet_pca_mini.2} parent=11 // pred_region
          _
        $region40: #{resnet_pca_mini.2} parent=11 // pred_fallthru
          _
        // Predicated region
        $region41: #{resnet_pca_mini.2} parent=11 // pred_check
          %p413 = pneg %p218
        $region42: #{resnet_pca_mini.2} parent=11 // pred_check_branch
          %415 = sbr.rel (%p413) target = $region44
        $region43: #{resnet_pca_mini.2} parent=11 // pred_region
          %417 = vsyncadd [#allocation11], 0
          %s419 = sshll.u32 %s8, 4
          %s420 = int_to_ptr.hbm [resolvable:$true] %s419
          %s421 = sshll.u32 [#allocation10], 4
          %s422 = int_to_ptr.vmem [resolvable:$true] %s421
          %424 = dma.hbm_to_vmem [thread:$0]  %s420, 64, %s422, [#allocation11]
        $region44: #{resnet_pca_mini.2} parent=11 // pred_fallthru
          _
        // Predicated region
        $region45: #{resnet_pca_mini.2} parent=11 // pred_check
          %p425 = pneg %p239
        $region46: #{resnet_pca_mini.2} parent=11 // pred_check_branch
          %427 = sbr.rel (%p425) target = $region48
        $region47: #{resnet_pca_mini.2} parent=11 // pred_region
          %429 = vsyncadd [#allocation11], 0
          %s430 = sshll.u32 %s9, 4
          %s431 = int_to_ptr.hbm [resolvable:$true] %s430
          %s432 = sshll.u32 [#allocation12], 4
          %s433 = int_to_ptr.vmem [resolvable:$true] %s432
          %438 = dma.hbm_to_vmem [thread:$0]  %s431, 3072, %s433, [#allocation11], 64, 64, 4
        $region48: #{resnet_pca_mini.2} parent=11 // pred_fallthru
          _
        // Predicated region
        $region49: #{resnet_pca_mini.2} parent=11 // pred_check
          %p439 = pneg %p260
        $region50: #{resnet_pca_mini.2} parent=11 // pred_check_branch
          %441 = sbr.rel (%p439) target = $region52
        $region51: #{resnet_pca_mini.2} parent=11 // pred_region
          %443 = vsyncadd [#allocation14], 0
          %s445 = sshll.u32 %s10, 4
          %s446 = int_to_ptr.hbm [resolvable:$true] %s445
          %s447 = sshll.u32 [#allocation13], 4
          %s448 = int_to_ptr.vmem [resolvable:$true] %s447
          %450 = dma.hbm_to_vmem [thread:$0]  %s446, 32, %s448, [#allocation14]
        $region52: #{resnet_pca_mini.2} parent=11 // pred_fallthru
          _
        // Predicated region
        $region53: #{resnet_pca_mini.2} parent=11 // pred_check
          %p451 = pneg %p281
        $region54: #{resnet_pca_mini.2} parent=11 // pred_check_branch
          %453 = sbr.rel (%p451) target = $region56
        $region55: #{resnet_pca_mini.2} parent=11 // pred_region
          _
        $region56: #{resnet_pca_mini.2} parent=11 // pred_fallthru
          _
        // Predicated region
        $region57: #{resnet_pca_mini.2} parent=11 // pred_check
          %p454 = pneg %p302
        $region58: #{resnet_pca_mini.2} parent=11 // pred_check_branch
          %456 = sbr.rel (%p454) target = $region60
        $region59: #{resnet_pca_mini.2} parent=11 // pred_region
          %458 = vsyncadd [#allocation14], 0
          %s460 = sshll.u32 %s12, 4
          %s461 = int_to_ptr.hbm [resolvable:$true] %s460
          %s462 = sshll.u32 [#allocation15], 4
          %s463 = int_to_ptr.vmem [resolvable:$true] %s462
          %465 = dma.hbm_to_vmem [thread:$0]  %s461, 32, %s463, [#allocation14]
        $region60: #{resnet_pca_mini.2} parent=11 // pred_fallthru
          _
      $region12: #{resnet_pca_mini.2} parent=5 // pred_fallthru
        _
      %p466 = scmp.lt.s32.totalorder %s24, 2
      // Predicated region
      $region61: #{resnet_pca_mini.2} parent=5 // pred_check
        %p467 = pneg %p466
      $region62: #{resnet_pca_mini.2} parent=5 // pred_check_branch
        %469 = sbr.rel (%p467) target = $region64
      $region63: #{resnet_pca_mini.2} parent=5 // pred_region
        // Predicated region
        $region65: #{resnet_pca_mini.2} parent=63 // pred_check
          %p470 = pneg %p44
        $region66: #{resnet_pca_mini.2} parent=63 // pred_check_branch
          %472 = sbr.rel (%p470) target = $region68
        $region67: #{resnet_pca_mini.2} parent=63 // pred_region
          %p473 = scmp.lt.s32.totalorder %s24, 1
          %s474 = scalar_select %p473, %s24, 1
          %s475 = smul.addr %s474, 4
          %s476 = smul.addr %s475, 8
          %s477 = scalar_lea.vmem %s0, %s476
        $region68: #{resnet_pca_mini.2} parent=63 // pred_fallthru
          _
      $region64: #{resnet_pca_mini.2} parent=5 // pred_fallthru
        _
      %p478 = scmp.le.s32.totalorder 1, %s24
      %p479 = scmp.lt.s32.totalorder %s24, 3
      %p480 = pnand %p478, %p479
      %p481 = pneg %p480
      // Predicated region
      $region69: #{resnet_pca_mini.2} parent=5 // pred_check
        _
      $region70: #{resnet_pca_mini.2} parent=5 // pred_check_branch
        %483 = sbr.rel (%p480) target = $region72
      $region71: #{resnet_pca_mini.2} parent=5 // pred_region
        %s484 = ssub.s32 %s24, 1
        // Predicated region
        $region73: #{resnet_pca_mini.2} parent=71 // pred_check
          %p485 = pneg %p71
        $region74: #{resnet_pca_mini.2} parent=71 // pred_check_branch
          %487 = sbr.rel (%p485) target = $region76
        $region75: #{resnet_pca_mini.2} parent=71 // pred_region
          %489 = dma.done [#allocation3], 128
        $region76: #{resnet_pca_mini.2} parent=71 // pred_fallthru
          _
        // Predicated region
        $region77: #{resnet_pca_mini.2} parent=71 // pred_check
          %p490 = pneg %p92
        $region78: #{resnet_pca_mini.2} parent=71 // pred_check_branch
          %492 = sbr.rel (%p490) target = $region80
        $region79: #{resnet_pca_mini.2} parent=71 // pred_region
          %494 = dma.done [#allocation5], 32
        $region80: #{resnet_pca_mini.2} parent=71 // pred_fallthru
          _
        // Predicated region
        $region81: #{resnet_pca_mini.2} parent=71 // pred_check
          %p495 = pneg %p134
        $region82: #{resnet_pca_mini.2} parent=71 // pred_check_branch
          %497 = sbr.rel (%p495) target = $region84
        $region83: #{resnet_pca_mini.2} parent=71 // pred_region
          %499 = dma.done [#allocation5], 32
        $region84: #{resnet_pca_mini.2} parent=71 // pred_fallthru
          _
        // Predicated region
        $region85: #{resnet_pca_mini.2} parent=71 // pred_check
          %p500 = pneg %p155
        $region86: #{resnet_pca_mini.2} parent=71 // pred_check_branch
          %502 = sbr.rel (%p500) target = $region88
        $region87: #{resnet_pca_mini.2} parent=71 // pred_region
          %504 = dma.done [#allocation8], 4608
        $region88: #{resnet_pca_mini.2} parent=71 // pred_fallthru
          _
        // Predicated region
        $region89: #{resnet_pca_mini.2} parent=71 // pred_check
          %p505 = pneg %p176
        $region90: #{resnet_pca_mini.2} parent=71 // pred_check_branch
          %507 = sbr.rel (%p505) target = $region92
        $region91: #{resnet_pca_mini.2} parent=71 // pred_region
          %509 = dma.done [#allocation8], 96
        $region92: #{resnet_pca_mini.2} parent=71 // pred_fallthru
          _
        // Predicated region
        $region93: #{resnet_pca_mini.2} parent=71 // pred_check
          %p510 = pneg %p218
        $region94: #{resnet_pca_mini.2} parent=71 // pred_check_branch
          %512 = sbr.rel (%p510) target = $region96
        $region95: #{resnet_pca_mini.2} parent=71 // pred_region
          %514 = dma.done [#allocation11], 64
        $region96: #{resnet_pca_mini.2} parent=71 // pred_fallthru
          _
        // Predicated region
        $region97: #{resnet_pca_mini.2} parent=71 // pred_check
          %p515 = pneg %p239
        $region98: #{resnet_pca_mini.2} parent=71 // pred_check_branch
          %517 = sbr.rel (%p515) target = $region100
        $region99: #{resnet_pca_mini.2} parent=71 // pred_region
          %519 = dma.done [#allocation11], 3072
        $region100: #{resnet_pca_mini.2} parent=71 // pred_fallthru
          _
        // Predicated region
        $region101: #{resnet_pca_mini.2} parent=71 // pred_check
          %p520 = pneg %p260
        $region102: #{resnet_pca_mini.2} parent=71 // pred_check_branch
          %522 = sbr.rel (%p520) target = $region104
        $region103: #{resnet_pca_mini.2} parent=71 // pred_region
          %524 = dma.done [#allocation14], 32
        $region104: #{resnet_pca_mini.2} parent=71 // pred_fallthru
          _
        // Predicated region
        $region105: #{resnet_pca_mini.2} parent=71 // pred_check
          %p525 = pneg %p302
        $region106: #{resnet_pca_mini.2} parent=71 // pred_check_branch
          %527 = sbr.rel (%p525) target = $region108
        $region107: #{resnet_pca_mini.2} parent=71 // pred_region
          %529 = dma.done [#allocation14], 32
        $region108: #{resnet_pca_mini.2} parent=71 // pred_fallthru
          _
        %p530 = scmp.lt.s32.totalorder %s29, 1
        %s531 = scalar_select %p530, %s29, 1
        %s532 = smul.addr %s531, 4
        %s533 = smul.addr %s532, 8
        %s534 = scalar_lea.vmem %s0, %s533
        %p535 = pneg %p50
        %p536 = pneg %p47
        %p537 = pneg %p71
        %p538 = pneg %p68
        %p539 = pneg %p92
        %p540 = pneg %p89
        %p541 = pneg %p113
        %p542 = pneg %p110
        %p543 = pneg %p134
        %p544 = pneg %p131
        %p545 = pneg %p155
        %p546 = pneg %p152
        %p547 = pneg %p176
        %p548 = pneg %p173
        %p549 = pneg %p197
        %p550 = pneg %p194
        %p551 = pneg %p218
        %p552 = pneg %p215
        %p553 = pneg %p239
        %p554 = pneg %p236
        %p555 = pneg %p260
        %p556 = pneg %p257
        %p557 = pneg %p281
        %p558 = pneg %p278
        %p559 = pneg %p302
        %p560 = pneg %p299
        %p561 = pneg %p328
        %p562 = pneg %p325
        %p563 = scmp.lt.s32.totalorder %s29, 1
        %s564 = scalar_select %p563, %s29, 1
        %s565 = smul.addr %s564, 4
        %s566 = smul.addr %s565, 4
        %s567 = scalar_lea.vmem %s13, %s566
        %p568 = scmp.lt.s32.totalorder %s29, 1
        %s569 = scalar_select %p568, %s29, 1
        %s570 = smul.addr %s569, 4
        %s571 = smul.addr %s570, 8
        %s572 = scalar_lea.vmem %s0, %s571
        %p573 = scmp.lt.s32.totalorder %s29, 1
        %s574 = scalar_select %p573, %s29, 1
        %s575 = smul.addr %s574, 4
        %s576 = smul.addr %s575, 4
        %s577 = scalar_lea.vmem %s13, %s576
        %v579 = vld [vmem:[%s572] sm:$0xff]
        %v580 = vld [vmem:[%s572 + $0x8] sm:$0xff]
        %v581 = vld [vmem:[%s572 + $0x10] sm:$0xff]
        %v582 = vld [vmem:[%s572 + $0x18] sm:$0xff]
        %v583 = vpack.c.bf16 %v579, %v579
        %v584 = vpack.c.bf16 %v580, %v580
        %v585 = vpack.c.bf16 %v581, %v581
        %v586 = vpack.c.bf16 %v582, %v582
        %v591 = vunpack.c.l.b16 %v583
        %v592 = vunpack.c.l.b16 %v584
        %v593 = vunpack.c.l.b16 %v585
        %v594 = vunpack.c.l.b16 %v586
        %v595 = vpack.c.b16 %v592, %v591
        %v596 = vpack.c.b16 %v594, %v593
        %vm597 = vsmask.f32 256
        %v599 = vshrl.u32 %v595, 16
        %v601 = vrot.slane %v599, 7
        %v602 = vshll.u32 %v595, 16
        %v604 = vor.u32 %v601, %v602
        %v606 = vshrl.u32 %v596, 16
        %v608 = vrot.slane %v606, 7
        %v609 = vshll.u32 %v596, 16
        %v611 = vor.u32 %v608, %v609
        %v612 = vsel %vm597, %v601, %v611
        %vm615 = vcmask 1040384
        %vm616 = vmand %vm615, %vm597
        %v617 = vsel %vm616, 0, %v604
        %v618 = vsel %vm616, %v608, 0
        %vm619 = vsmask.f32 7424
        %v621 = vshrl.u32 %v617, 16
        %v623 = vshll.u32 %v617, 16
        %v625 = vrot.slane %v623, 1
        %v626 = vor.u32 %v621, %v625
        %v628 = vshll.u32 %v612, 16
        %v630 = vrot.slane %v628, 1
        %v631 = vsel %vm619, %v626, %v630
        %v632 = vshrl.u32 %v612, 16
        %v634 = vor.u32 %v632, %v630
        %v636 = vshll.u32 %v618, 16
        %v638 = vrot.slane %v636, 1
        %v639 = vsel %vm619, %v634, %v638
        %640 = vrot.lane.b32.xlu0 %v631, 4
        %v641 = vpop.permute.xlu0 %640
        %642 = vrot.lane.b32.xlu0 %v639, 4
        %v643 = vpop.permute.xlu0 %642
        %vm646 = vcmask 1046528
        %v647 = vrot.slane %v617, 1
        %v648 = vrot.slane %v612, 1
        %v649 = vsel %vm646, %v647, %v648
        %v650 = vrot.slane %v618, 1
        %v651 = vsel %vm646, %v648, %v650
        %652 = vrot.lane.b32.xlu0 %v649, 8
        %v653 = vpop.permute.xlu0 %652
        %654 = vrot.lane.b32.xlu0 %v651, 8
        %v655 = vpop.permute.xlu0 %654
        %vm656 = vcmask 31744
        %v658 = vsel %vm656, %v617, %v641
        %v660 = vsel %vm656, %v612, %v643
        %vm661 = vcmask 64512
        %v663 = vsel %vm661, %v658, %v653
        %v665 = vsel %vm661, %v660, %v655
        %v666 = vld [vmem:[#allocation2] sm:$0xf]
        %v667 = vld [vmem:[#allocation2 + $0x4] sm:$0x3]
        %v670 = vunpack.c.l.b16 %v666
        %v671 = vunpack.c.l.b16 %v667
        %v672 = vpack.c.b16 %v671, %v670
        %vm673 = vcmask 97280
        %v674 = vsel %vm673, %v663, 0
        %v676 = vsel %vm673, %v665, 0
        %vm678 = vcmask 1045504
        %v680 = vsel %vm678, %v672, 0
        %682 = vmatpush.bf16.msra.mxu0 0
        %683 = vmatpush.bf16.msra.mxu0 0
        %684 = vmatpush.bf16.msra.mxu0 0
        %685 = vmatpush.bf16.msra.mxu0 0
        %686 = vmatpush.bf16.msra.mxu0 0
        %687 = vmatpush.bf16.msra.mxu0 0
        %688 = vmatpush.bf16.msra.mxu0 0
        %689 = vmatpush.bf16.msra.mxu0 %v680
        %690 = vmatmul.bf16.gmra.mxu0 %v674
        %v691 = vpop.f32.mrf.mxu0
        %v692 = vadd.f32 0.0, %v691
        %v693 = vpop.f32.mrf.mxu0
        %v694 = vadd.f32 0.0, %v693
        %695 = vmatmul.bf16.gmra.mxu0 %v676
        %v696 = vpop.f32.mrf.mxu0
        %v697 = vadd.f32 0.0, %v696
        %v698 = vpop.f32.mrf.mxu0
        %v699 = vadd.f32 0.0, %v698
        %700 = vdwg.mxu0
        %v701 = vld [vmem:[#allocation4] sm:$0x3]
        %v702 = vperm.slane %v701, 0
        %v703 = vmul.f32 %v692, %v702
        %v704 = vmul.f32 %v694, %v702
        %v705 = vmul.f32 %v697, %v702
        %v706 = vmul.f32 %v699, %v702
        %v707 = vperm.slane %v701, 1
        %v708 = vadd.f32 %v703, %v707
        %v709 = vadd.f32 %v704, %v707
        %v710 = vadd.f32 %v705, %v707
        %v711 = vadd.f32 %v706, %v707
        %v712 = vmax.f32 %v708, 0.0
        %v713 = vmax.f32 %v709, 0.0
        %v714 = vmax.f32 %v710, 0.0
        %v715 = vmax.f32 %v711, 0.0
        %v716 = vpack.c.bf16 %v712, %v712
        %v717 = vpack.c.bf16 %v713, %v713
        %v718 = vpack.c.bf16 %v714, %v714
        %v719 = vpack.c.bf16 %v715, %v715
        %v724 = vunpack.c.l.b16 %v716
        %v725 = vunpack.c.l.b16 %v717
        %v726 = vunpack.c.l.b16 %v718
        %v727 = vunpack.c.l.b16 %v719
        %v728 = vpack.c.b16 %v725, %v724
        %v729 = vpack.c.b16 %v727, %v726
        %v731 = vshrl.u32 %v728, 16
        %v733 = vrot.slane %v731, 7
        %v734 = vshll.u32 %v728, 16
        %v736 = vor.u32 %v733, %v734
        %v738 = vshrl.u32 %v729, 16
        %v740 = vrot.slane %v738, 7
        %v741 = vshll.u32 %v729, 16
        %v743 = vor.u32 %v740, %v741
        %v744 = vsel %vm597, %v733, %v743
        %745 = vrot.lane.b32.xlu0 %v736, 64
        %v746 = vpop.permute.xlu0 %745
        %747 = vrot.lane.b32.xlu0 %v744, 64
        %v748 = vpop.permute.xlu0 %747
        %749 = vrot.lane.b32.xlu0 %v740, 64
        %v750 = vpop.permute.xlu0 %749
        %v753 = vsel %vm616, 0, %v746
        %v754 = vsel %vm616, %v750, 0
        %v756 = vshrl.u32 %v753, 16
        %v758 = vshll.u32 %v753, 16
        %v760 = vrot.slane %v758, 1
        %v761 = vor.u32 %v756, %v760
        %v763 = vshll.u32 %v748, 16
        %v765 = vrot.slane %v763, 1
        %v766 = vsel %vm619, %v761, %v765
        %v767 = vshrl.u32 %v748, 16
        %v769 = vor.u32 %v767, %v765
        %v771 = vshll.u32 %v754, 16
        %v773 = vrot.slane %v771, 1
        %v774 = vsel %vm619, %v769, %v773
        %775 = vrot.lane.b32.xlu0 %v766, 64
        %v776 = vpop.permute.xlu0 %775
        %777 = vrot.lane.b32.xlu0 %v774, 64
        %v778 = vpop.permute.xlu0 %777
        %v781 = vrot.slane %v753, 1
        %v782 = vrot.slane %v748, 1
        %v783 = vsel %vm646, %v781, %v782
        %v784 = vrot.slane %v754, 1
        %v785 = vsel %vm646, %v782, %v784
        %vm786 = vcmask 523264
        %v788 = vsel %vm786, %v753, %v776
        %v791 = vsel %vm786, %v748, %v778
        %v793 = vld [vmem:[%s3] sm:$0xf]
        %v794 = vld [vmem:[%s3 + $0x4] sm:$0xf]
        %v795 = vld [vmem:[%s3 + $0x8] sm:$0xf]
        %v796 = vld [vmem:[%s3 + $0xc] sm:$0xf]
        %v797 = vld [vmem:[%s3 + $0x10] sm:$0xf]
        %v798 = vld [vmem:[%s3 + $0x14] sm:$0xf]
        %v799 = vld [vmem:[%s3 + $0x18] sm:$0xf]
        %v800 = vld [vmem:[%s3 + $0x1c] sm:$0xf]
        %v801 = vld [vmem:[%s3 + $0x20] sm:$0xf]
        %v802 = vld [vmem:[%s3 + $0x24] sm:$0xf]
        %v803 = vld [vmem:[%s3 + $0x28] sm:$0xf]
        %v804 = vld [vmem:[%s3 + $0x2c] sm:$0xf]
        %v805 = vld [vmem:[%s3 + $0x30] sm:$0xf]
        %v806 = vld [vmem:[%s3 + $0x34] sm:$0xf]
        %v807 = vld [vmem:[%s3 + $0x38] sm:$0xf]
        %v808 = vld [vmem:[%s3 + $0x3c] sm:$0xf]
        %v809 = vld [vmem:[%s3 + $0x40] sm:$0xf]
        %v810 = vld [vmem:[%s3 + $0x44] sm:$0xf]
        %v811 = vld [vmem:[%s3 + $0x48] sm:$0xf]
        %v812 = vld [vmem:[%s3 + $0x4c] sm:$0xf]
        %v813 = vld [vmem:[%s3 + $0x50] sm:$0xf]
        %v814 = vld [vmem:[%s3 + $0x54] sm:$0xf]
        %v815 = vld [vmem:[%s3 + $0x58] sm:$0xf]
        %v816 = vld [vmem:[%s3 + $0x5c] sm:$0xf]
        %v841 = vunpack.c.l.b16 %v793
        %v842 = vunpack.c.l.b16 %v794
        %v843 = vunpack.c.l.b16 %v795
        %v844 = vunpack.c.l.b16 %v796
        %v845 = vunpack.c.l.b16 %v797
        %v846 = vunpack.c.l.b16 %v798
        %v847 = vunpack.c.l.b16 %v799
        %v848 = vunpack.c.l.b16 %v800
        %v849 = vunpack.c.l.b16 %v801
        %v850 = vunpack.c.l.b16 %v802
        %v851 = vunpack.c.l.b16 %v803
        %v852 = vunpack.c.l.b16 %v804
        %v853 = vunpack.c.l.b16 %v805
        %v854 = vunpack.c.l.b16 %v806
        %v855 = vunpack.c.l.b16 %v807
        %v856 = vunpack.c.l.b16 %v808
        %v857 = vunpack.c.l.b16 %v809
        %v858 = vunpack.c.l.b16 %v810
        %v859 = vunpack.c.l.b16 %v811
        %v860 = vunpack.c.l.b16 %v812
        %v861 = vunpack.c.l.b16 %v813
        %v862 = vunpack.c.l.b16 %v814
        %v863 = vunpack.c.l.b16 %v815
        %v864 = vunpack.c.l.b16 %v816
        %v865 = vpack.c.b16 %v842, %v841
        %v866 = vpack.c.b16 %v844, %v843
        %v867 = vpack.c.b16 %v846, %v845
        %v868 = vpack.c.b16 %v848, %v847
        %v869 = vpack.c.b16 %v850, %v849
        %v870 = vpack.c.b16 %v852, %v851
        %v871 = vpack.c.b16 %v854, %v853
        %v872 = vpack.c.b16 %v856, %v855
        %v873 = vpack.c.b16 %v858, %v857
        %v874 = vpack.c.b16 %v860, %v859
        %v875 = vpack.c.b16 %v862, %v861
        %v876 = vpack.c.b16 %v864, %v863
        %v890 = vsel %vm786, %v783, 0
        %v893 = vsel %vm786, %v785, 0
        %895 = vmatpush.bf16.msra.mxu0 %v872
        %896 = vmatpush.bf16.msra.mxu0 %v871
        %897 = vmatpush.bf16.msra.mxu0 %v870
        %898 = vmatpush.bf16.msra.mxu0 %v869
        %899 = vmatpush.bf16.msra.mxu0 %v868
        %900 = vmatpush.bf16.msra.mxu0 %v867
        %901 = vmatpush.bf16.msra.mxu0 %v866
        %902 = vmatpush.bf16.msra.mxu0 %v865
        %903 = vmatmul.bf16.gmra.mxu0 %v788
        %v904 = vpop.f32.mrf.mxu0
        %v905 = vadd.f32 0.0, %v904
        %v906 = vpop.f32.mrf.mxu0
        %v907 = vadd.f32 0.0, %v906
        %908 = vmatmul.bf16.gmra.mxu0 %v791
        %v909 = vpop.f32.mrf.mxu0
        %v910 = vadd.f32 0.0, %v909
        %v911 = vpop.f32.mrf.mxu0
        %v912 = vadd.f32 0.0, %v911
        %913 = vdwg.mxu0
        %914 = vmatpush.bf16.msra.mxu0 0
        %915 = vmatpush.bf16.msra.mxu0 0
        %916 = vmatpush.bf16.msra.mxu0 0
        %917 = vmatpush.bf16.msra.mxu0 0
        %918 = vmatpush.bf16.msra.mxu0 %v876
        %919 = vmatpush.bf16.msra.mxu0 %v875
        %920 = vmatpush.bf16.msra.mxu0 %v874
        %921 = vmatpush.bf16.msra.mxu0 %v873
        %922 = vmatmul.bf16.gmra.mxu0 %v890
        %v923 = vpop.f32.mrf.mxu0
        %v924 = vadd.f32 %v905, %v923
        %v925 = vpop.f32.mrf.mxu0
        %v926 = vadd.f32 %v907, %v925
        %927 = vmatmul.bf16.gmra.mxu0 %v893
        %v928 = vpop.f32.mrf.mxu0
        %v929 = vadd.f32 %v910, %v928
        %v930 = vpop.f32.mrf.mxu0
        %v931 = vadd.f32 %v912, %v930
        %932 = vdwg.mxu0
        %v933 = vld [vmem:[#allocation6] sm:$0x3]
        %v934 = vperm.slane %v933, 0
        %v935 = vmul.f32 %v924, %v934
        %v936 = vmul.f32 %v926, %v934
        %v937 = vmul.f32 %v929, %v934
        %v938 = vmul.f32 %v931, %v934
        %v939 = vperm.slane %v933, 1
        %v940 = vadd.f32 %v935, %v939
        %v941 = vadd.f32 %v936, %v939
        %v942 = vadd.f32 %v937, %v939
        %v943 = vadd.f32 %v938, %v939
        %v944 = vadd.f32 %v940, %v708
        %v945 = vadd.f32 %v941, %v709
        %v946 = vadd.f32 %v942, %v710
        %v947 = vadd.f32 %v943, %v711
        %v948 = vmax.f32 %v944, 0.0
        %v949 = vmax.f32 %v945, 0.0
        %v950 = vmax.f32 %v946, 0.0
        %v951 = vmax.f32 %v947, 0.0
        %v952 = vpack.c.bf16 %v948, %v948
        %v953 = vpack.c.bf16 %v949, %v949
        %v954 = vpack.c.bf16 %v950, %v950
        %v955 = vpack.c.bf16 %v951, %v951
        %v960 = vunpack.c.l.b16 %v952
        %v961 = vunpack.c.l.b16 %v953
        %v962 = vunpack.c.l.b16 %v954
        %v963 = vunpack.c.l.b16 %v955
        %v964 = vpack.c.b16 %v961, %v960
        %v965 = vpack.c.b16 %v963, %v962
        %v967 = vshrl.u32 %v964, 16
        %v969 = vrot.slane %v967, 7
        %v970 = vshll.u32 %v964, 16
        %v972 = vor.u32 %v969, %v970
        %v974 = vshrl.u32 %v965, 16
        %v976 = vrot.slane %v974, 7
        %v977 = vshll.u32 %v965, 16
        %v979 = vor.u32 %v976, %v977
        %v980 = vsel %vm597, %v969, %v979
        %v983 = vsel %vm616, 0, %v972
        %v984 = vsel %vm616, %v976, 0
        %v986 = vshrl.u32 %v983, 16
        %v988 = vshll.u32 %v983, 16
        %v990 = vrot.slane %v988, 1
        %v991 = vor.u32 %v986, %v990
        %v993 = vshll.u32 %v980, 16
        %v995 = vrot.slane %v993, 1
        %v996 = vsel %vm619, %v991, %v995
        %v997 = vshrl.u32 %v980, 16
        %v999 = vor.u32 %v997, %v995
        %v1001 = vshll.u32 %v984, 16
        %v1003 = vrot.slane %v1001, 1
        %v1004 = vsel %vm619, %v999, %v1003
        %1005 = vrot.lane.b32.xlu0 %v996, 64
        %v1006 = vpop.permute.xlu0 %1005
        %1007 = vrot.lane.b32.xlu0 %v1004, 64
        %v1008 = vpop.permute.xlu0 %1007
        %v1011 = vrot.slane %v983, 1
        %v1012 = vrot.slane %v980, 1
        %v1013 = vsel %vm646, %v1011, %v1012
        %v1014 = vrot.slane %v984, 1
        %v1015 = vsel %vm646, %v1012, %v1014
        %v1017 = vsel %vm786, %v983, %v1006
        %v1020 = vsel %vm786, %v980, %v1008
        %v1022 = vld [vmem:[#allocation7] sm:$0xff]
        %v1023 = vld [vmem:[#allocation7 + $0x8] sm:$0xf]
        %v1024 = vld [vmem:[#allocation7 + $0xc] sm:$0xff]
        %v1025 = vld [vmem:[#allocation7 + $0x14] sm:$0xf]
        %v1026 = vld [vmem:[#allocation7 + $0x18] sm:$0xff]
        %v1027 = vld [vmem:[#allocation7 + $0x20] sm:$0xf]
        %v1028 = vld [vmem:[#allocation7 + $0x24] sm:$0xff]
        %v1029 = vld [vmem:[#allocation7 + $0x2c] sm:$0xf]
        %v1030 = vld [vmem:[#allocation7 + $0x30] sm:$0xff]
        %v1031 = vld [vmem:[#allocation7 + $0x38] sm:$0xf]
        %v1032 = vld [vmem:[#allocation7 + $0x3c] sm:$0xff]
        %v1033 = vld [vmem:[#allocation7 + $0x44] sm:$0xf]
        %v1034 = vld [vmem:[#allocation7 + $0x48] sm:$0xff]
        %v1035 = vld [vmem:[#allocation7 + $0x50] sm:$0xf]
        %v1036 = vld [vmem:[#allocation7 + $0x54] sm:$0xff]
        %v1037 = vld [vmem:[#allocation7 + $0x5c] sm:$0xf]
        %v1038 = vld [vmem:[#allocation7 + $0x60] sm:$0xff]
        %v1039 = vld [vmem:[#allocation7 + $0x68] sm:$0xf]
        %v1040 = vld [vmem:[#allocation7 + $0x6c] sm:$0xff]
        %v1041 = vld [vmem:[#allocation7 + $0x74] sm:$0xf]
        %v1042 = vld [vmem:[#allocation7 + $0x78] sm:$0xff]
        %v1043 = vld [vmem:[#allocation7 + $0x80] sm:$0xf]
        %v1044 = vld [vmem:[#allocation7 + $0x84] sm:$0xff]
        %v1045 = vld [vmem:[#allocation7 + $0x8c] sm:$0xf]
        %v1046 = vld [vmem:[#allocation7 + $0x90] sm:$0xff]
        %v1047 = vld [vmem:[#allocation7 + $0x98] sm:$0xf]
        %v1048 = vld [vmem:[#allocation7 + $0x9c] sm:$0xff]
        %v1049 = vld [vmem:[#allocation7 + $0xa4] sm:$0xf]
        %v1050 = vld [vmem:[#allocation7 + $0xa8] sm:$0xff]
        %v1051 = vld [vmem:[#allocation7 + $0xb0] sm:$0xf]
        %v1052 = vld [vmem:[#allocation7 + $0xb4] sm:$0xff]
        %v1053 = vld [vmem:[#allocation7 + $0xbc] sm:$0xf]
        %v1054 = vld [vmem:[#allocation7 + $0xc0] sm:$0xff]
        %v1055 = vld [vmem:[#allocation7 + $0xc8] sm:$0xf]
        %v1056 = vld [vmem:[#allocation7 + $0xcc] sm:$0xff]
        %v1057 = vld [vmem:[#allocation7 + $0xd4] sm:$0xf]
        %v1058 = vld [vmem:[#allocation7 + $0xd8] sm:$0xff]
        %v1059 = vld [vmem:[#allocation7 + $0xe0] sm:$0xf]
        %v1060 = vld [vmem:[#allocation7 + $0xe4] sm:$0xff]
        %v1061 = vld [vmem:[#allocation7 + $0xec] sm:$0xf]
        %v1062 = vld [vmem:[#allocation7 + $0xf0] sm:$0xff]
        %v1063 = vld [vmem:[#allocation7 + $0xf8] sm:$0xf]
        %v1064 = vld [vmem:[#allocation7 + $0xfc] sm:$0xff]
        %v1065 = vld [vmem:[#allocation7 + $0x104] sm:$0xf]
        %v1066 = vld [vmem:[#allocation7 + $0x108] sm:$0xff]
        %v1067 = vld [vmem:[#allocation7 + $0x110] sm:$0xf]
        %v1068 = vld [vmem:[#allocation7 + $0x114] sm:$0xff]
        %v1069 = vld [vmem:[#allocation7 + $0x11c] sm:$0xf]
        %v1118 = vunpack.c.l.b16 %v1022
        %v1119 = vunpack.c.h.b16 %v1022
        %v1120 = vunpack.c.l.b16 %v1023
        %v1121 = vunpack.c.l.b16 %v1024
        %v1122 = vunpack.c.h.b16 %v1024
        %v1123 = vunpack.c.l.b16 %v1025
        %v1124 = vunpack.c.l.b16 %v1026
        %v1125 = vunpack.c.h.b16 %v1026
        %v1126 = vunpack.c.l.b16 %v1027
        %v1127 = vunpack.c.l.b16 %v1028
        %v1128 = vunpack.c.h.b16 %v1028
        %v1129 = vunpack.c.l.b16 %v1029
        %v1130 = vunpack.c.l.b16 %v1030
        %v1131 = vunpack.c.h.b16 %v1030
        %v1132 = vunpack.c.l.b16 %v1031
        %v1133 = vunpack.c.l.b16 %v1032
        %v1134 = vunpack.c.h.b16 %v1032
        %v1135 = vunpack.c.l.b16 %v1033
        %v1136 = vunpack.c.l.b16 %v1034
        %v1137 = vunpack.c.h.b16 %v1034
        %v1138 = vunpack.c.l.b16 %v1035
        %v1139 = vunpack.c.l.b16 %v1036
        %v1140 = vunpack.c.h.b16 %v1036
        %v1141 = vunpack.c.l.b16 %v1037
        %v1142 = vunpack.c.l.b16 %v1038
        %v1143 = vunpack.c.h.b16 %v1038
        %v1144 = vunpack.c.l.b16 %v1039
        %v1145 = vunpack.c.l.b16 %v1040
        %v1146 = vunpack.c.h.b16 %v1040
        %v1147 = vunpack.c.l.b16 %v1041
        %v1148 = vunpack.c.l.b16 %v1042
        %v1149 = vunpack.c.h.b16 %v1042
        %v1150 = vunpack.c.l.b16 %v1043
        %v1151 = vunpack.c.l.b16 %v1044
        %v1152 = vunpack.c.h.b16 %v1044
        %v1153 = vunpack.c.l.b16 %v1045
        %v1154 = vunpack.c.l.b16 %v1046
        %v1155 = vunpack.c.h.b16 %v1046
        %v1156 = vunpack.c.l.b16 %v1047
        %v1157 = vunpack.c.l.b16 %v1048
        %v1158 = vunpack.c.h.b16 %v1048
        %v1159 = vunpack.c.l.b16 %v1049
        %v1160 = vunpack.c.l.b16 %v1050
        %v1161 = vunpack.c.h.b16 %v1050
        %v1162 = vunpack.c.l.b16 %v1051
        %v1163 = vunpack.c.l.b16 %v1052
        %v1164 = vunpack.c.h.b16 %v1052
        %v1165 = vunpack.c.l.b16 %v1053
        %v1166 = vunpack.c.l.b16 %v1054
        %v1167 = vunpack.c.h.b16 %v1054
        %v1168 = vunpack.c.l.b16 %v1055
        %v1169 = vunpack.c.l.b16 %v1056
        %v1170 = vunpack.c.h.b16 %v1056
        %v1171 = vunpack.c.l.b16 %v1057
        %v1172 = vunpack.c.l.b16 %v1058
        %v1173 = vunpack.c.h.b16 %v1058
        %v1174 = vunpack.c.l.b16 %v1059
        %v1175 = vunpack.c.l.b16 %v1060
        %v1176 = vunpack.c.h.b16 %v1060
        %v1177 = vunpack.c.l.b16 %v1061
        %v1178 = vunpack.c.l.b16 %v1062
        %v1179 = vunpack.c.h.b16 %v1062
        %v1180 = vunpack.c.l.b16 %v1063
        %v1181 = vunpack.c.l.b16 %v1064
        %v1182 = vunpack.c.h.b16 %v1064
        %v1183 = vunpack.c.l.b16 %v1065
        %v1184 = vunpack.c.l.b16 %v1066
        %v1185 = vunpack.c.h.b16 %v1066
        %v1186 = vunpack.c.l.b16 %v1067
        %v1187 = vunpack.c.l.b16 %v1068
        %v1188 = vunpack.c.h.b16 %v1068
        %v1189 = vunpack.c.l.b16 %v1069
        %v1190 = vpack.c.b16 %v1121, %v1118
        %v1191 = vpack.c.b16 %v1122, %v1119
        %v1192 = vpack.c.b16 %v1123, %v1120
        %v1193 = vpack.c.b16 %v1127, %v1124
        %v1194 = vpack.c.b16 %v1128, %v1125
        %v1195 = vpack.c.b16 %v1129, %v1126
        %v1196 = vpack.c.b16 %v1133, %v1130
        %v1197 = vpack.c.b16 %v1134, %v1131
        %v1198 = vpack.c.b16 %v1135, %v1132
        %v1199 = vpack.c.b16 %v1139, %v1136
        %v1200 = vpack.c.b16 %v1140, %v1137
        %v1201 = vpack.c.b16 %v1141, %v1138
        %v1202 = vpack.c.b16 %v1145, %v1142
        %v1203 = vpack.c.b16 %v1146, %v1143
        %v1204 = vpack.c.b16 %v1147, %v1144
        %v1205 = vpack.c.b16 %v1151, %v1148
        %v1206 = vpack.c.b16 %v1152, %v1149
        %v1207 = vpack.c.b16 %v1153, %v1150
        %v1208 = vpack.c.b16 %v1157, %v1154
        %v1209 = vpack.c.b16 %v1158, %v1155
        %v1210 = vpack.c.b16 %v1159, %v1156
        %v1211 = vpack.c.b16 %v1163, %v1160
        %v1212 = vpack.c.b16 %v1164, %v1161
        %v1213 = vpack.c.b16 %v1165, %v1162
        %v1214 = vpack.c.b16 %v1169, %v1166
        %v1215 = vpack.c.b16 %v1170, %v1167
        %v1216 = vpack.c.b16 %v1171, %v1168
        %v1217 = vpack.c.b16 %v1175, %v1172
        %v1218 = vpack.c.b16 %v1176, %v1173
        %v1219 = vpack.c.b16 %v1177, %v1174
        %v1220 = vpack.c.b16 %v1181, %v1178
        %v1221 = vpack.c.b16 %v1182, %v1179
        %v1222 = vpack.c.b16 %v1183, %v1180
        %v1223 = vpack.c.b16 %v1187, %v1184
        %v1224 = vpack.c.b16 %v1188, %v1185
        %v1225 = vpack.c.b16 %v1189, %v1186
        %v1263 = vsel %vm786, %v1013, 0
        %v1266 = vsel %vm786, %v1015, 0
        %1268 = vmatpush.bf16.msra.mxu0 %v1211
        %1269 = vmatpush.bf16.msra.mxu0 %v1208
        %1270 = vmatpush.bf16.msra.mxu0 %v1205
        %1271 = vmatpush.bf16.msra.mxu0 %v1202
        %1272 = vmatpush.bf16.msra.mxu0 %v1199
        %1273 = vmatpush.bf16.msra.mxu0 %v1196
        %1274 = vmatpush.bf16.msra.mxu0 %v1193
        %1275 = vmatpush.bf16.msra.mxu0 %v1190
        %1276 = vmatmul.bf16.gmra.mxu0 %v1017
        %v1277 = vpop.f32.mrf.mxu0
        %v1278 = vadd.f32 0.0, %v1277
        %v1279 = vpop.f32.mrf.mxu0
        %v1280 = vadd.f32 0.0, %v1279
        %1281 = vmatmul.bf16.gmra.mxu0 %v1020
        %v1282 = vpop.f32.mrf.mxu0
        %v1283 = vadd.f32 0.0, %v1282
        %v1284 = vpop.f32.mrf.mxu0
        %v1285 = vadd.f32 0.0, %v1284
        %1286 = vdwg.mxu0
        %1287 = vmatpush.bf16.msra.mxu0 0
        %1288 = vmatpush.bf16.msra.mxu0 0
        %1289 = vmatpush.bf16.msra.mxu0 0
        %1290 = vmatpush.bf16.msra.mxu0 0
        %1291 = vmatpush.bf16.msra.mxu0 %v1223
        %1292 = vmatpush.bf16.msra.mxu0 %v1220
        %1293 = vmatpush.bf16.msra.mxu0 %v1217
        %1294 = vmatpush.bf16.msra.mxu0 %v1214
        %1295 = vmatmul.bf16.gmra.mxu0 %v1263
        %v1296 = vpop.f32.mrf.mxu0
        %v1297 = vadd.f32 %v1278, %v1296
        %v1298 = vpop.f32.mrf.mxu0
        %v1299 = vadd.f32 %v1280, %v1298
        %1300 = vmatmul.bf16.gmra.mxu0 %v1266
        %v1301 = vpop.f32.mrf.mxu0
        %v1302 = vadd.f32 %v1283, %v1301
        %v1303 = vpop.f32.mrf.mxu0
        %v1304 = vadd.f32 %v1285, %v1303
        %1305 = vdwg.mxu0
        %1306 = vmatpush.bf16.msra.mxu0 %v1212
        %1307 = vmatpush.bf16.msra.mxu0 %v1209
        %1308 = vmatpush.bf16.msra.mxu0 %v1206
        %1309 = vmatpush.bf16.msra.mxu0 %v1203
        %1310 = vmatpush.bf16.msra.mxu0 %v1200
        %1311 = vmatpush.bf16.msra.mxu0 %v1197
        %1312 = vmatpush.bf16.msra.mxu0 %v1194
        %1313 = vmatpush.bf16.msra.mxu0 %v1191
        %1314 = vmatmul.bf16.gmra.mxu0 %v1017
        %v1315 = vpop.f32.mrf.mxu0
        %v1316 = vadd.f32 0.0, %v1315
        %v1317 = vpop.f32.mrf.mxu0
        %v1318 = vadd.f32 0.0, %v1317
        %1319 = vmatmul.bf16.gmra.mxu0 %v1020
        %v1320 = vpop.f32.mrf.mxu0
        %v1321 = vadd.f32 0.0, %v1320
        %v1322 = vpop.f32.mrf.mxu0
        %v1323 = vadd.f32 0.0, %v1322
        %1324 = vdwg.mxu0
        %1325 = vmatpush.bf16.msra.mxu0 0
        %1326 = vmatpush.bf16.msra.mxu0 0
        %1327 = vmatpush.bf16.msra.mxu0 0
        %1328 = vmatpush.bf16.msra.mxu0 0
        %1329 = vmatpush.bf16.msra.mxu0 %v1224
        %1330 = vmatpush.bf16.msra.mxu0 %v1221
        %1331 = vmatpush.bf16.msra.mxu0 %v1218
        %1332 = vmatpush.bf16.msra.mxu0 %v1215
        %1333 = vmatmul.bf16.gmra.mxu0 %v1263
        %v1334 = vpop.f32.mrf.mxu0
        %v1335 = vadd.f32 %v1316, %v1334
        %v1336 = vpop.f32.mrf.mxu0
        %v1337 = vadd.f32 %v1318, %v1336
        %1338 = vmatmul.bf16.gmra.mxu0 %v1266
        %v1339 = vpop.f32.mrf.mxu0
        %v1340 = vadd.f32 %v1321, %v1339
        %v1341 = vpop.f32.mrf.mxu0
        %v1342 = vadd.f32 %v1323, %v1341
        %1343 = vdwg.mxu0
        %1344 = vmatpush.bf16.msra.mxu0 %v1213
        %1345 = vmatpush.bf16.msra.mxu0 %v1210
        %1346 = vmatpush.bf16.msra.mxu0 %v1207
        %1347 = vmatpush.bf16.msra.mxu0 %v1204
        %1348 = vmatpush.bf16.msra.mxu0 %v1201
        %1349 = vmatpush.bf16.msra.mxu0 %v1198
        %1350 = vmatpush.bf16.msra.mxu0 %v1195
        %1351 = vmatpush.bf16.msra.mxu0 %v1192
        %1352 = vmatmul.bf16.gmra.mxu0 %v1017
        %v1353 = vpop.f32.mrf.mxu0
        %v1354 = vadd.f32 0.0, %v1353
        %v1355 = vpop.f32.mrf.mxu0
        %v1356 = vadd.f32 0.0, %v1355
        %1357 = vmatmul.bf16.gmra.mxu0 %v1020
        %v1358 = vpop.f32.mrf.mxu0
        %v1359 = vadd.f32 0.0, %v1358
        %v1360 = vpop.f32.mrf.mxu0
        %v1361 = vadd.f32 0.0, %v1360
        %1362 = vdwg.mxu0
        %1363 = vmatpush.bf16.msra.mxu0 0
        %1364 = vmatpush.bf16.msra.mxu0 0
        %1365 = vmatpush.bf16.msra.mxu0 0
        %1366 = vmatpush.bf16.msra.mxu0 0
        %1367 = vmatpush.bf16.msra.mxu0 %v1225
        %1368 = vmatpush.bf16.msra.mxu0 %v1222
        %1369 = vmatpush.bf16.msra.mxu0 %v1219
        %1370 = vmatpush.bf16.msra.mxu0 %v1216
        %1371 = vmatmul.bf16.gmra.mxu0 %v1263
        %v1372 = vpop.f32.mrf.mxu0
        %v1373 = vadd.f32 %v1354, %v1372
        %v1374 = vpop.f32.mrf.mxu0
        %v1375 = vadd.f32 %v1356, %v1374
        %1376 = vmatmul.bf16.gmra.mxu0 %v1266
        %v1377 = vpop.f32.mrf.mxu0
        %v1378 = vadd.f32 %v1359, %v1377
        %v1379 = vpop.f32.mrf.mxu0
        %v1380 = vadd.f32 %v1361, %v1379
        %1381 = vdwg.mxu0
        %v1382 = vld [vmem:[#allocation9] sm:$0x3f]
        %v1384 = vperm.slane %v1382, 0
        %v1385 = vperm.slane %v1382, 2
        %v1386 = vperm.slane %v1382, 4
        %v1390 = vperm.slane %v1384, 0
        %v1391 = vperm.slane %v1385, 0
        %v1392 = vperm.slane %v1386, 0
        %v1393 = vmul.f32 %v1297, %v1390
        %v1394 = vmul.f32 %v1335, %v1391
        %v1395 = vmul.f32 %v1373, %v1392
        %v1396 = vmul.f32 %v1299, %v1390
        %v1397 = vmul.f32 %v1337, %v1391
        %v1398 = vmul.f32 %v1375, %v1392
        %v1399 = vmul.f32 %v1302, %v1390
        %v1400 = vmul.f32 %v1340, %v1391
        %v1401 = vmul.f32 %v1378, %v1392
        %v1402 = vmul.f32 %v1304, %v1390
        %v1403 = vmul.f32 %v1342, %v1391
        %v1404 = vmul.f32 %v1380, %v1392
        %v1405 = vperm.slane %v1382, 1
        %v1406 = vperm.slane %v1382, 3
        %v1407 = vperm.slane %v1382, 5
        %v1411 = vperm.slane %v1405, 1
        %v1412 = vperm.slane %v1406, 1
        %v1413 = vperm.slane %v1407, 1
        %v1414 = vadd.f32 %v1393, %v1411
        %v1415 = vadd.f32 %v1394, %v1412
        %v1416 = vadd.f32 %v1395, %v1413
        %v1417 = vadd.f32 %v1396, %v1411
        %v1418 = vadd.f32 %v1397, %v1412
        %v1419 = vadd.f32 %v1398, %v1413
        %v1420 = vadd.f32 %v1399, %v1411
        %v1421 = vadd.f32 %v1400, %v1412
        %v1422 = vadd.f32 %v1401, %v1413
        %v1423 = vadd.f32 %v1402, %v1411
        %v1424 = vadd.f32 %v1403, %v1412
        %v1425 = vadd.f32 %v1404, %v1413
        %v1426 = vmax.f32 %v1415, 0.0
        %v1427 = vmax.f32 %v1416, 0.0
        %v1428 = vmax.f32 %v1418, 0.0
        %v1429 = vmax.f32 %v1419, 0.0
        %v1430 = vmax.f32 %v1421, 0.0
        %v1431 = vmax.f32 %v1422, 0.0
        %v1432 = vmax.f32 %v1424, 0.0
        %v1433 = vmax.f32 %v1425, 0.0
        %v1434 = vpack.c.bf16 %v1427, %v1426
        %v1435 = vpack.c.bf16 %v1429, %v1428
        %v1436 = vpack.c.bf16 %v1431, %v1430
        %v1437 = vpack.c.bf16 %v1433, %v1432
        %v1442 = vunpack.c.l.b16 %v1434
        %v1443 = vunpack.c.h.b16 %v1434
        %v1444 = vunpack.c.l.b16 %v1435
        %v1445 = vunpack.c.h.b16 %v1435
        %v1446 = vunpack.c.l.b16 %v1436
        %v1447 = vunpack.c.h.b16 %v1436
        %v1448 = vunpack.c.l.b16 %v1437
        %v1449 = vunpack.c.h.b16 %v1437
        %v1450 = vpack.c.b16 %v1444, %v1442
        %v1451 = vpack.c.b16 %v1445, %v1443
        %v1452 = vpack.c.b16 %v1448, %v1446
        %v1453 = vpack.c.b16 %v1449, %v1447
        %v1455 = vshrl.u32 %v1450, 16
        %v1457 = vrot.slane %v1455, 7
        %v1458 = vshll.u32 %v1450, 16
        %v1460 = vor.u32 %v1457, %v1458
        %v1462 = vshrl.u32 %v1451, 16
        %v1464 = vrot.slane %v1462, 7
        %v1465 = vshll.u32 %v1451, 16
        %v1467 = vor.u32 %v1464, %v1465
        %v1469 = vshrl.u32 %v1452, 16
        %v1471 = vrot.slane %v1469, 7
        %v1472 = vshll.u32 %v1452, 16
        %v1474 = vor.u32 %v1471, %v1472
        %v1475 = vsel %vm597, %v1457, %v1474
        %v1477 = vshrl.u32 %v1453, 16
        %v1479 = vrot.slane %v1477, 7
        %v1480 = vshll.u32 %v1453, 16
        %v1482 = vor.u32 %v1479, %v1480
        %v1483 = vsel %vm597, %v1464, %v1482
        %v1489 = vsel %vm616, 0, %v1460
        %v1490 = vsel %vm616, 0, %v1467
        %v1491 = vsel %vm616, %v1471, 0
        %v1492 = vsel %vm616, %v1479, 0
        %v1494 = vshrl.u32 %v1489, 16
        %v1496 = vshll.u32 %v1489, 16
        %v1498 = vrot.slane %v1496, 1
        %v1499 = vor.u32 %v1494, %v1498
        %v1501 = vshll.u32 %v1475, 16
        %v1503 = vrot.slane %v1501, 1
        %v1504 = vsel %vm619, %v1499, %v1503
        %v1506 = vshrl.u32 %v1490, 16
        %v1508 = vshll.u32 %v1490, 16
        %v1510 = vrot.slane %v1508, 1
        %v1511 = vor.u32 %v1506, %v1510
        %v1513 = vshll.u32 %v1483, 16
        %v1515 = vrot.slane %v1513, 1
        %v1516 = vsel %vm619, %v1511, %v1515
        %v1517 = vshrl.u32 %v1475, 16
        %v1519 = vor.u32 %v1517, %v1503
        %v1521 = vshll.u32 %v1491, 16
        %v1523 = vrot.slane %v1521, 1
        %v1524 = vsel %vm619, %v1519, %v1523
        %v1525 = vshrl.u32 %v1483, 16
        %v1527 = vor.u32 %v1525, %v1515
        %v1529 = vshll.u32 %v1492, 16
        %v1531 = vrot.slane %v1529, 1
        %v1532 = vsel %vm619, %v1527, %v1531
        %1533 = vrot.lane.b32.xlu0 %v1504, 64
        %v1534 = vpop.permute.xlu0 %1533
        %1535 = vrot.lane.b32.xlu0 %v1516, 64
        %v1536 = vpop.permute.xlu0 %1535
        %1537 = vrot.lane.b32.xlu0 %v1524, 64
        %v1538 = vpop.permute.xlu0 %1537
        %1539 = vrot.lane.b32.xlu0 %v1532, 64
        %v1540 = vpop.permute.xlu0 %1539
        %vm1541 = vcmask 523264
        %v1542 = vsel %vm1541, %v1534, %v1536
        %v1543 = vsel %vm1541, %v1538, %v1540
        %v1550 = vrot.slane %v1489, 1
        %v1551 = vrot.slane %v1475, 1
        %v1552 = vsel %vm646, %v1550, %v1551
        %v1553 = vrot.slane %v1490, 1
        %v1554 = vrot.slane %v1483, 1
        %v1555 = vsel %vm646, %v1553, %v1554
        %v1556 = vrot.slane %v1491, 1
        %v1557 = vsel %vm646, %v1551, %v1556
        %v1558 = vrot.slane %v1492, 1
        %v1559 = vsel %vm646, %v1554, %v1558
        %v1563 = vsel %vm786, %v1490, %v1534
        %v1566 = vsel %vm786, %v1483, %v1538
        %v1568 = vld [vmem:[%s7] sm:$0xff]
        %v1569 = vld [vmem:[%s7 + $0x8] sm:$0xff]
        %v1570 = vld [vmem:[%s7 + $0x10] sm:$0xff]
        %v1571 = vld [vmem:[%s7 + $0x18] sm:$0xff]
        %v1572 = vld [vmem:[%s7 + $0x20] sm:$0xff]
        %v1573 = vld [vmem:[%s7 + $0x28] sm:$0xff]
        %v1574 = vld [vmem:[%s7 + $0x30] sm:$0xff]
        %v1575 = vld [vmem:[%s7 + $0x38] sm:$0xff]
        %v1576 = vld [vmem:[%s7 + $0x40] sm:$0xff]
        %v1577 = vld [vmem:[%s7 + $0x48] sm:$0xff]
        %v1578 = vld [vmem:[%s7 + $0x50] sm:$0xff]
        %v1579 = vld [vmem:[%s7 + $0x58] sm:$0xff]
        %v1580 = vld [vmem:[%s7 + $0x60] sm:$0xff]
        %v1581 = vld [vmem:[%s7 + $0x68] sm:$0xff]
        %v1582 = vld [vmem:[%s7 + $0x70] sm:$0xff]
        %v1583 = vld [vmem:[%s7 + $0x78] sm:$0xff]
        %v1584 = vld [vmem:[%s7 + $0x80] sm:$0xff]
        %v1585 = vld [vmem:[%s7 + $0x88] sm:$0xff]
        %v1586 = vld [vmem:[%s7 + $0x90] sm:$0xff]
        %v1587 = vld [vmem:[%s7 + $0x98] sm:$0xff]
        %v1588 = vld [vmem:[%s7 + $0xa0] sm:$0xff]
        %v1589 = vld [vmem:[%s7 + $0xa8] sm:$0xff]
        %v1590 = vld [vmem:[%s7 + $0xb0] sm:$0xff]
        %v1591 = vld [vmem:[%s7 + $0xb8] sm:$0xff]
        %v1592 = vld [vmem:[%s7 + $0xc0] sm:$0xff]
        %v1593 = vld [vmem:[%s7 + $0xc8] sm:$0xff]
        %v1594 = vld [vmem:[%s7 + $0xd0] sm:$0xff]
        %v1595 = vld [vmem:[%s7 + $0xd8] sm:$0xff]
        %v1596 = vld [vmem:[%s7 + $0xe0] sm:$0xff]
        %v1597 = vld [vmem:[%s7 + $0xe8] sm:$0xff]
        %v1598 = vld [vmem:[%s7 + $0xf0] sm:$0xff]
        %v1599 = vld [vmem:[%s7 + $0xf8] sm:$0xff]
        %v1600 = vld [vmem:[%s7 + $0x100] sm:$0xff]
        %v1601 = vld [vmem:[%s7 + $0x108] sm:$0xff]
        %v1602 = vld [vmem:[%s7 + $0x110] sm:$0xff]
        %v1603 = vld [vmem:[%s7 + $0x118] sm:$0xff]
        %v1604 = vld [vmem:[%s7 + $0x120] sm:$0xff]
        %v1605 = vld [vmem:[%s7 + $0x128] sm:$0xff]
        %v1606 = vld [vmem:[%s7 + $0x130] sm:$0xff]
        %v1607 = vld [vmem:[%s7 + $0x138] sm:$0xff]
        %v1608 = vld [vmem:[%s7 + $0x140] sm:$0xff]
        %v1609 = vld [vmem:[%s7 + $0x148] sm:$0xff]
        %v1610 = vld [vmem:[%s7 + $0x150] sm:$0xff]
        %v1611 = vld [vmem:[%s7 + $0x158] sm:$0xff]
        %v1612 = vld [vmem:[%s7 + $0x160] sm:$0xff]
        %v1613 = vld [vmem:[%s7 + $0x168] sm:$0xff]
        %v1614 = vld [vmem:[%s7 + $0x170] sm:$0xff]
        %v1615 = vld [vmem:[%s7 + $0x178] sm:$0xff]
        %v1616 = vld [vmem:[%s7 + $0x180] sm:$0xff]
        %v1617 = vld [vmem:[%s7 + $0x188] sm:$0xff]
        %v1618 = vld [vmem:[%s7 + $0x190] sm:$0xff]
        %v1619 = vld [vmem:[%s7 + $0x198] sm:$0xff]
        %v1620 = vld [vmem:[%s7 + $0x1a0] sm:$0xff]
        %v1621 = vld [vmem:[%s7 + $0x1a8] sm:$0xff]
        %v1622 = vld [vmem:[%s7 + $0x1b0] sm:$0xff]
        %v1623 = vld [vmem:[%s7 + $0x1b8] sm:$0xff]
        %v1624 = vld [vmem:[%s7 + $0x1c0] sm:$0xff]
        %v1625 = vld [vmem:[%s7 + $0x1c8] sm:$0xff]
        %v1626 = vld [vmem:[%s7 + $0x1d0] sm:$0xff]
        %v1627 = vld [vmem:[%s7 + $0x1d8] sm:$0xff]
        %v1628 = vld [vmem:[%s7 + $0x1e0] sm:$0xff]
        %v1629 = vld [vmem:[%s7 + $0x1e8] sm:$0xff]
        %v1630 = vld [vmem:[%s7 + $0x1f0] sm:$0xff]
        %v1631 = vld [vmem:[%s7 + $0x1f8] sm:$0xff]
        %v1632 = vld [vmem:[%s7 + $0x200] sm:$0xff]
        %v1633 = vld [vmem:[%s7 + $0x208] sm:$0xff]
        %v1634 = vld [vmem:[%s7 + $0x210] sm:$0xff]
        %v1635 = vld [vmem:[%s7 + $0x218] sm:$0xff]
        %v1636 = vld [vmem:[%s7 + $0x220] sm:$0xff]
        %v1637 = vld [vmem:[%s7 + $0x228] sm:$0xff]
        %v1638 = vld [vmem:[%s7 + $0x230] sm:$0xff]
        %v1639 = vld [vmem:[%s7 + $0x238] sm:$0xff]
        %v1712 = vunpack.c.l.b16 %v1568
        %v1713 = vunpack.c.h.b16 %v1568
        %v1714 = vunpack.c.l.b16 %v1569
        %v1715 = vunpack.c.h.b16 %v1569
        %v1716 = vunpack.c.l.b16 %v1570
        %v1717 = vunpack.c.h.b16 %v1570
        %v1718 = vunpack.c.l.b16 %v1571
        %v1719 = vunpack.c.h.b16 %v1571
        %v1720 = vunpack.c.l.b16 %v1572
        %v1721 = vunpack.c.h.b16 %v1572
        %v1722 = vunpack.c.l.b16 %v1573
        %v1723 = vunpack.c.h.b16 %v1573
        %v1724 = vunpack.c.l.b16 %v1574
        %v1725 = vunpack.c.h.b16 %v1574
        %v1726 = vunpack.c.l.b16 %v1575
        %v1727 = vunpack.c.h.b16 %v1575
        %v1728 = vunpack.c.l.b16 %v1576
        %v1729 = vunpack.c.h.b16 %v1576
        %v1730 = vunpack.c.l.b16 %v1577
        %v1731 = vunpack.c.h.b16 %v1577
        %v1732 = vunpack.c.l.b16 %v1578
        %v1733 = vunpack.c.h.b16 %v1578
        %v1734 = vunpack.c.l.b16 %v1579
        %v1735 = vunpack.c.h.b16 %v1579
        %v1736 = vunpack.c.l.b16 %v1580
        %v1737 = vunpack.c.h.b16 %v1580
        %v1738 = vunpack.c.l.b16 %v1581
        %v1739 = vunpack.c.h.b16 %v1581
        %v1740 = vunpack.c.l.b16 %v1582
        %v1741 = vunpack.c.h.b16 %v1582
        %v1742 = vunpack.c.l.b16 %v1583
        %v1743 = vunpack.c.h.b16 %v1583
        %v1744 = vunpack.c.l.b16 %v1584
        %v1745 = vunpack.c.h.b16 %v1584
        %v1746 = vunpack.c.l.b16 %v1585
        %v1747 = vunpack.c.h.b16 %v1585
        %v1748 = vunpack.c.l.b16 %v1586
        %v1749 = vunpack.c.h.b16 %v1586
        %v1750 = vunpack.c.l.b16 %v1587
        %v1751 = vunpack.c.h.b16 %v1587
        %v1752 = vunpack.c.l.b16 %v1588
        %v1753 = vunpack.c.h.b16 %v1588
        %v1754 = vunpack.c.l.b16 %v1589
        %v1755 = vunpack.c.h.b16 %v1589
        %v1756 = vunpack.c.l.b16 %v1590
        %v1757 = vunpack.c.h.b16 %v1590
        %v1758 = vunpack.c.l.b16 %v1591
        %v1759 = vunpack.c.h.b16 %v1591
        %v1760 = vunpack.c.l.b16 %v1592
        %v1761 = vunpack.c.h.b16 %v1592
        %v1762 = vunpack.c.l.b16 %v1593
        %v1763 = vunpack.c.h.b16 %v1593
        %v1764 = vunpack.c.l.b16 %v1594
        %v1765 = vunpack.c.h.b16 %v1594
        %v1766 = vunpack.c.l.b16 %v1595
        %v1767 = vunpack.c.h.b16 %v1595
        %v1768 = vunpack.c.l.b16 %v1596
        %v1769 = vunpack.c.h.b16 %v1596
        %v1770 = vunpack.c.l.b16 %v1597
        %v1771 = vunpack.c.h.b16 %v1597
        %v1772 = vunpack.c.l.b16 %v1598
        %v1773 = vunpack.c.h.b16 %v1598
        %v1774 = vunpack.c.l.b16 %v1599
        %v1775 = vunpack.c.h.b16 %v1599
        %v1776 = vunpack.c.l.b16 %v1600
        %v1777 = vunpack.c.h.b16 %v1600
        %v1778 = vunpack.c.l.b16 %v1601
        %v1779 = vunpack.c.h.b16 %v1601
        %v1780 = vunpack.c.l.b16 %v1602
        %v1781 = vunpack.c.h.b16 %v1602
        %v1782 = vunpack.c.l.b16 %v1603
        %v1783 = vunpack.c.h.b16 %v1603
        %v1784 = vunpack.c.l.b16 %v1604
        %v1785 = vunpack.c.h.b16 %v1604
        %v1786 = vunpack.c.l.b16 %v1605
        %v1787 = vunpack.c.h.b16 %v1605
        %v1788 = vunpack.c.l.b16 %v1606
        %v1789 = vunpack.c.h.b16 %v1606
        %v1790 = vunpack.c.l.b16 %v1607
        %v1791 = vunpack.c.h.b16 %v1607
        %v1792 = vunpack.c.l.b16 %v1608
        %v1793 = vunpack.c.h.b16 %v1608
        %v1794 = vunpack.c.l.b16 %v1609
        %v1795 = vunpack.c.h.b16 %v1609
        %v1796 = vunpack.c.l.b16 %v1610
        %v1797 = vunpack.c.h.b16 %v1610
        %v1798 = vunpack.c.l.b16 %v1611
        %v1799 = vunpack.c.h.b16 %v1611
        %v1800 = vunpack.c.l.b16 %v1612
        %v1801 = vunpack.c.h.b16 %v1612
        %v1802 = vunpack.c.l.b16 %v1613
        %v1803 = vunpack.c.h.b16 %v1613
        %v1804 = vunpack.c.l.b16 %v1614
        %v1805 = vunpack.c.h.b16 %v1614
        %v1806 = vunpack.c.l.b16 %v1615
        %v1807 = vunpack.c.h.b16 %v1615
        %v1808 = vunpack.c.l.b16 %v1616
        %v1809 = vunpack.c.h.b16 %v1616
        %v1810 = vunpack.c.l.b16 %v1617
        %v1811 = vunpack.c.h.b16 %v1617
        %v1812 = vunpack.c.l.b16 %v1618
        %v1813 = vunpack.c.h.b16 %v1618
        %v1814 = vunpack.c.l.b16 %v1619
        %v1815 = vunpack.c.h.b16 %v1619
        %v1816 = vunpack.c.l.b16 %v1620
        %v1817 = vunpack.c.h.b16 %v1620
        %v1818 = vunpack.c.l.b16 %v1621
        %v1819 = vunpack.c.h.b16 %v1621
        %v1820 = vunpack.c.l.b16 %v1622
        %v1821 = vunpack.c.h.b16 %v1622
        %v1822 = vunpack.c.l.b16 %v1623
        %v1823 = vunpack.c.h.b16 %v1623
        %v1824 = vunpack.c.l.b16 %v1624
        %v1825 = vunpack.c.h.b16 %v1624
        %v1826 = vunpack.c.l.b16 %v1625
        %v1827 = vunpack.c.h.b16 %v1625
        %v1828 = vunpack.c.l.b16 %v1626
        %v1829 = vunpack.c.h.b16 %v1626
        %v1830 = vunpack.c.l.b16 %v1627
        %v1831 = vunpack.c.h.b16 %v1627
        %v1832 = vunpack.c.l.b16 %v1628
        %v1833 = vunpack.c.h.b16 %v1628
        %v1834 = vunpack.c.l.b16 %v1629
        %v1835 = vunpack.c.h.b16 %v1629
        %v1836 = vunpack.c.l.b16 %v1630
        %v1837 = vunpack.c.h.b16 %v1630
        %v1838 = vunpack.c.l.b16 %v1631
        %v1839 = vunpack.c.h.b16 %v1631
        %v1840 = vunpack.c.l.b16 %v1632
        %v1841 = vunpack.c.h.b16 %v1632
        %v1842 = vunpack.c.l.b16 %v1633
        %v1843 = vunpack.c.h.b16 %v1633
        %v1844 = vunpack.c.l.b16 %v1634
        %v1845 = vunpack.c.h.b16 %v1634
        %v1846 = vunpack.c.l.b16 %v1635
        %v1847 = vunpack.c.h.b16 %v1635
        %v1848 = vunpack.c.l.b16 %v1636
        %v1849 = vunpack.c.h.b16 %v1636
        %v1850 = vunpack.c.l.b16 %v1637
        %v1851 = vunpack.c.h.b16 %v1637
        %v1852 = vunpack.c.l.b16 %v1638
        %v1853 = vunpack.c.h.b16 %v1638
        %v1854 = vunpack.c.l.b16 %v1639
        %v1855 = vunpack.c.h.b16 %v1639
        %v1856 = vpack.c.b16 %v1714, %v1712
        %v1857 = vpack.c.b16 %v1715, %v1713
        %v1858 = vpack.c.b16 %v1718, %v1716
        %v1859 = vpack.c.b16 %v1719, %v1717
        %v1860 = vpack.c.b16 %v1722, %v1720
        %v1861 = vpack.c.b16 %v1723, %v1721
        %v1862 = vpack.c.b16 %v1726, %v1724
        %v1863 = vpack.c.b16 %v1727, %v1725
        %v1864 = vpack.c.b16 %v1730, %v1728
        %v1865 = vpack.c.b16 %v1731, %v1729
        %v1866 = vpack.c.b16 %v1734, %v1732
        %v1867 = vpack.c.b16 %v1735, %v1733
        %v1868 = vpack.c.b16 %v1738, %v1736
        %v1869 = vpack.c.b16 %v1739, %v1737
        %v1870 = vpack.c.b16 %v1742, %v1740
        %v1871 = vpack.c.b16 %v1743, %v1741
        %v1872 = vpack.c.b16 %v1746, %v1744
        %v1873 = vpack.c.b16 %v1747, %v1745
        %v1874 = vpack.c.b16 %v1750, %v1748
        %v1875 = vpack.c.b16 %v1751, %v1749
        %v1876 = vpack.c.b16 %v1754, %v1752
        %v1877 = vpack.c.b16 %v1755, %v1753
        %v1878 = vpack.c.b16 %v1758, %v1756
        %v1879 = vpack.c.b16 %v1759, %v1757
        %v1880 = vpack.c.b16 %v1762, %v1760
        %v1881 = vpack.c.b16 %v1763, %v1761
        %v1882 = vpack.c.b16 %v1766, %v1764
        %v1883 = vpack.c.b16 %v1767, %v1765
        %v1884 = vpack.c.b16 %v1770, %v1768
        %v1885 = vpack.c.b16 %v1771, %v1769
        %v1886 = vpack.c.b16 %v1774, %v1772
        %v1887 = vpack.c.b16 %v1775, %v1773
        %v1888 = vpack.c.b16 %v1778, %v1776
        %v1889 = vpack.c.b16 %v1779, %v1777
        %v1890 = vpack.c.b16 %v1782, %v1780
        %v1891 = vpack.c.b16 %v1783, %v1781
        %v1892 = vpack.c.b16 %v1786, %v1784
        %v1893 = vpack.c.b16 %v1787, %v1785
        %v1894 = vpack.c.b16 %v1790, %v1788
        %v1895 = vpack.c.b16 %v1791, %v1789
        %v1896 = vpack.c.b16 %v1794, %v1792
        %v1897 = vpack.c.b16 %v1795, %v1793
        %v1898 = vpack.c.b16 %v1798, %v1796
        %v1899 = vpack.c.b16 %v1799, %v1797
        %v1900 = vpack.c.b16 %v1802, %v1800
        %v1901 = vpack.c.b16 %v1803, %v1801
        %v1902 = vpack.c.b16 %v1806, %v1804
        %v1903 = vpack.c.b16 %v1807, %v1805
        %v1904 = vpack.c.b16 %v1810, %v1808
        %v1905 = vpack.c.b16 %v1811, %v1809
        %v1906 = vpack.c.b16 %v1814, %v1812
        %v1907 = vpack.c.b16 %v1815, %v1813
        %v1908 = vpack.c.b16 %v1818, %v1816
        %v1909 = vpack.c.b16 %v1819, %v1817
        %v1910 = vpack.c.b16 %v1822, %v1820
        %v1911 = vpack.c.b16 %v1823, %v1821
        %v1912 = vpack.c.b16 %v1826, %v1824
        %v1913 = vpack.c.b16 %v1827, %v1825
        %v1914 = vpack.c.b16 %v1830, %v1828
        %v1915 = vpack.c.b16 %v1831, %v1829
        %v1916 = vpack.c.b16 %v1834, %v1832
        %v1917 = vpack.c.b16 %v1835, %v1833
        %v1918 = vpack.c.b16 %v1838, %v1836
        %v1919 = vpack.c.b16 %v1839, %v1837
        %v1920 = vpack.c.b16 %v1842, %v1840
        %v1921 = vpack.c.b16 %v1843, %v1841
        %v1922 = vpack.c.b16 %v1846, %v1844
        %v1923 = vpack.c.b16 %v1847, %v1845
        %v1924 = vpack.c.b16 %v1850, %v1848
        %v1925 = vpack.c.b16 %v1851, %v1849
        %v1926 = vpack.c.b16 %v1854, %v1852
        %v1927 = vpack.c.b16 %v1855, %v1853
        %v2001 = vsel %vm786, %v1555, 0
        %v2004 = vsel %vm786, %v1559, 0
        %2006 = vmatpush.bf16.msra.mxu0 %v1870
        %2007 = vmatpush.bf16.msra.mxu0 %v1868
        %2008 = vmatpush.bf16.msra.mxu0 %v1866
        %2009 = vmatpush.bf16.msra.mxu0 %v1864
        %2010 = vmatpush.bf16.msra.mxu0 %v1862
        %2011 = vmatpush.bf16.msra.mxu0 %v1860
        %2012 = vmatpush.bf16.msra.mxu0 %v1858
        %2013 = vmatpush.bf16.msra.mxu0 %v1856
        %2014 = vmatmul.bf16.gmra.mxu0 %v1489
        %v2015 = vpop.f32.mrf.mxu0
        %v2016 = vadd.f32 0.0, %v2015
        %v2017 = vpop.f32.mrf.mxu0
        %v2018 = vadd.f32 0.0, %v2017
        %2019 = vmatmul.bf16.gmra.mxu0 %v1475
        %v2020 = vpop.f32.mrf.mxu0
        %v2021 = vadd.f32 0.0, %v2020
        %v2022 = vpop.f32.mrf.mxu0
        %v2023 = vadd.f32 0.0, %v2022
        %2024 = vdwg.mxu0
        %2025 = vmatpush.bf16.msra.mxu0 %v1886
        %2026 = vmatpush.bf16.msra.mxu0 %v1884
        %2027 = vmatpush.bf16.msra.mxu0 %v1882
        %2028 = vmatpush.bf16.msra.mxu0 %v1880
        %2029 = vmatpush.bf16.msra.mxu0 %v1878
        %2030 = vmatpush.bf16.msra.mxu0 %v1876
        %2031 = vmatpush.bf16.msra.mxu0 %v1874
        %2032 = vmatpush.bf16.msra.mxu0 %v1872
        %2033 = vmatmul.bf16.gmra.mxu0 %v1563
        %v2034 = vpop.f32.mrf.mxu0
        %v2035 = vadd.f32 %v2016, %v2034
        %v2036 = vpop.f32.mrf.mxu0
        %v2037 = vadd.f32 %v2018, %v2036
        %2038 = vmatmul.bf16.gmra.mxu0 %v1566
        %v2039 = vpop.f32.mrf.mxu0
        %v2040 = vadd.f32 %v2021, %v2039
        %v2041 = vpop.f32.mrf.mxu0
        %v2042 = vadd.f32 %v2023, %v2041
        %2043 = vdwg.mxu0
        %2044 = vmatpush.bf16.msra.mxu0 %v1902
        %2045 = vmatpush.bf16.msra.mxu0 %v1900
        %2046 = vmatpush.bf16.msra.mxu0 %v1898
        %2047 = vmatpush.bf16.msra.mxu0 %v1896
        %2048 = vmatpush.bf16.msra.mxu0 %v1894
        %2049 = vmatpush.bf16.msra.mxu0 %v1892
        %2050 = vmatpush.bf16.msra.mxu0 %v1890
        %2051 = vmatpush.bf16.msra.mxu0 %v1888
        %2052 = vmatmul.bf16.gmra.mxu0 %v1542
        %v2053 = vpop.f32.mrf.mxu0
        %v2054 = vadd.f32 %v2035, %v2053
        %v2055 = vpop.f32.mrf.mxu0
        %v2056 = vadd.f32 %v2037, %v2055
        %2057 = vmatmul.bf16.gmra.mxu0 %v1543
        %v2058 = vpop.f32.mrf.mxu0
        %v2059 = vadd.f32 %v2040, %v2058
        %v2060 = vpop.f32.mrf.mxu0
        %v2061 = vadd.f32 %v2042, %v2060
        %2062 = vdwg.mxu0
        %2063 = vmatpush.bf16.msra.mxu0 %v1918
        %2064 = vmatpush.bf16.msra.mxu0 %v1916
        %2065 = vmatpush.bf16.msra.mxu0 %v1914
        %2066 = vmatpush.bf16.msra.mxu0 %v1912
        %2067 = vmatpush.bf16.msra.mxu0 %v1910
        %2068 = vmatpush.bf16.msra.mxu0 %v1908
        %2069 = vmatpush.bf16.msra.mxu0 %v1906
        %2070 = vmatpush.bf16.msra.mxu0 %v1904
        %2071 = vmatmul.bf16.gmra.mxu0 %v1552
        %v2072 = vpop.f32.mrf.mxu0
        %v2073 = vadd.f32 %v2054, %v2072
        %v2074 = vpop.f32.mrf.mxu0
        %v2075 = vadd.f32 %v2056, %v2074
        %2076 = vmatmul.bf16.gmra.mxu0 %v1557
        %v2077 = vpop.f32.mrf.mxu0
        %v2078 = vadd.f32 %v2059, %v2077
        %v2079 = vpop.f32.mrf.mxu0
        %v2080 = vadd.f32 %v2061, %v2079
        %2081 = vdwg.mxu0
        %2082 = vmatpush.bf16.msra.mxu0 0
        %2083 = vmatpush.bf16.msra.mxu0 0
        %2084 = vmatpush.bf16.msra.mxu0 0
        %2085 = vmatpush.bf16.msra.mxu0 0
        %2086 = vmatpush.bf16.msra.mxu0 %v1926
        %2087 = vmatpush.bf16.msra.mxu0 %v1924
        %2088 = vmatpush.bf16.msra.mxu0 %v1922
        %2089 = vmatpush.bf16.msra.mxu0 %v1920
        %2090 = vmatmul.bf16.gmra.mxu0 %v2001
        %v2091 = vpop.f32.mrf.mxu0
        %v2092 = vadd.f32 %v2073, %v2091
        %v2093 = vpop.f32.mrf.mxu0
        %v2094 = vadd.f32 %v2075, %v2093
        %2095 = vmatmul.bf16.gmra.mxu0 %v2004
        %v2096 = vpop.f32.mrf.mxu0
        %v2097 = vadd.f32 %v2078, %v2096
        %v2098 = vpop.f32.mrf.mxu0
        %v2099 = vadd.f32 %v2080, %v2098
        %2100 = vdwg.mxu0
        %2101 = vmatpush.bf16.msra.mxu0 %v1871
        %2102 = vmatpush.bf16.msra.mxu0 %v1869
        %2103 = vmatpush.bf16.msra.mxu0 %v1867
        %2104 = vmatpush.bf16.msra.mxu0 %v1865
        %2105 = vmatpush.bf16.msra.mxu0 %v1863
        %2106 = vmatpush.bf16.msra.mxu0 %v1861
        %2107 = vmatpush.bf16.msra.mxu0 %v1859
        %2108 = vmatpush.bf16.msra.mxu0 %v1857
        %2109 = vmatmul.bf16.gmra.mxu0 %v1489
        %v2110 = vpop.f32.mrf.mxu0
        %v2111 = vadd.f32 0.0, %v2110
        %v2112 = vpop.f32.mrf.mxu0
        %v2113 = vadd.f32 0.0, %v2112
        %2114 = vmatmul.bf16.gmra.mxu0 %v1475
        %v2115 = vpop.f32.mrf.mxu0
        %v2116 = vadd.f32 0.0, %v2115
        %v2117 = vpop.f32.mrf.mxu0
        %v2118 = vadd.f32 0.0, %v2117
        %2119 = vdwg.mxu0
        %2120 = vmatpush.bf16.msra.mxu0 %v1887
        %2121 = vmatpush.bf16.msra.mxu0 %v1885
        %2122 = vmatpush.bf16.msra.mxu0 %v1883
        %2123 = vmatpush.bf16.msra.mxu0 %v1881
        %2124 = vmatpush.bf16.msra.mxu0 %v1879
        %2125 = vmatpush.bf16.msra.mxu0 %v1877
        %2126 = vmatpush.bf16.msra.mxu0 %v1875
        %2127 = vmatpush.bf16.msra.mxu0 %v1873
        %2128 = vmatmul.bf16.gmra.mxu0 %v1563
        %v2129 = vpop.f32.mrf.mxu0
        %v2130 = vadd.f32 %v2111, %v2129
        %v2131 = vpop.f32.mrf.mxu0
        %v2132 = vadd.f32 %v2113, %v2131
        %2133 = vmatmul.bf16.gmra.mxu0 %v1566
        %v2134 = vpop.f32.mrf.mxu0
        %v2135 = vadd.f32 %v2116, %v2134
        %v2136 = vpop.f32.mrf.mxu0
        %v2137 = vadd.f32 %v2118, %v2136
        %2138 = vdwg.mxu0
        %2139 = vmatpush.bf16.msra.mxu0 %v1903
        %2140 = vmatpush.bf16.msra.mxu0 %v1901
        %2141 = vmatpush.bf16.msra.mxu0 %v1899
        %2142 = vmatpush.bf16.msra.mxu0 %v1897
        %2143 = vmatpush.bf16.msra.mxu0 %v1895
        %2144 = vmatpush.bf16.msra.mxu0 %v1893
        %2145 = vmatpush.bf16.msra.mxu0 %v1891
        %2146 = vmatpush.bf16.msra.mxu0 %v1889
        %2147 = vmatmul.bf16.gmra.mxu0 %v1542
        %v2148 = vpop.f32.mrf.mxu0
        %v2149 = vadd.f32 %v2130, %v2148
        %v2150 = vpop.f32.mrf.mxu0
        %v2151 = vadd.f32 %v2132, %v2150
        %2152 = vmatmul.bf16.gmra.mxu0 %v1543
        %v2153 = vpop.f32.mrf.mxu0
        %v2154 = vadd.f32 %v2135, %v2153
        %v2155 = vpop.f32.mrf.mxu0
        %v2156 = vadd.f32 %v2137, %v2155
        %2157 = vdwg.mxu0
        %2158 = vmatpush.bf16.msra.mxu0 %v1919
        %2159 = vmatpush.bf16.msra.mxu0 %v1917
        %2160 = vmatpush.bf16.msra.mxu0 %v1915
        %2161 = vmatpush.bf16.msra.mxu0 %v1913
        %2162 = vmatpush.bf16.msra.mxu0 %v1911
        %2163 = vmatpush.bf16.msra.mxu0 %v1909
        %2164 = vmatpush.bf16.msra.mxu0 %v1907
        %2165 = vmatpush.bf16.msra.mxu0 %v1905
        %2166 = vmatmul.bf16.gmra.mxu0 %v1552
        %v2167 = vpop.f32.mrf.mxu0
        %v2168 = vadd.f32 %v2149, %v2167
        %v2169 = vpop.f32.mrf.mxu0
        %v2170 = vadd.f32 %v2151, %v2169
        %2171 = vmatmul.bf16.gmra.mxu0 %v1557
        %v2172 = vpop.f32.mrf.mxu0
        %v2173 = vadd.f32 %v2154, %v2172
        %v2174 = vpop.f32.mrf.mxu0
        %v2175 = vadd.f32 %v2156, %v2174
        %2176 = vdwg.mxu0
        %2177 = vmatpush.bf16.msra.mxu0 0
        %2178 = vmatpush.bf16.msra.mxu0 0
        %2179 = vmatpush.bf16.msra.mxu0 0
        %2180 = vmatpush.bf16.msra.mxu0 0
        %2181 = vmatpush.bf16.msra.mxu0 %v1927
        %2182 = vmatpush.bf16.msra.mxu0 %v1925
        %2183 = vmatpush.bf16.msra.mxu0 %v1923
        %2184 = vmatpush.bf16.msra.mxu0 %v1921
        %2185 = vmatmul.bf16.gmra.mxu0 %v2001
        %v2186 = vpop.f32.mrf.mxu0
        %v2187 = vadd.f32 %v2168, %v2186
        %v2188 = vpop.f32.mrf.mxu0
        %v2189 = vadd.f32 %v2170, %v2188
        %2190 = vmatmul.bf16.gmra.mxu0 %v2004
        %v2191 = vpop.f32.mrf.mxu0
        %v2192 = vadd.f32 %v2173, %v2191
        %v2193 = vpop.f32.mrf.mxu0
        %v2194 = vadd.f32 %v2175, %v2193
        %2195 = vdwg.mxu0
        %v2196 = vld [vmem:[#allocation10] sm:$0xf]
        %v2198 = vperm.slane %v2196, 0
        %v2199 = vperm.slane %v2196, 2
        %v2202 = vperm.slane %v2198, 0
        %v2203 = vperm.slane %v2199, 0
        %v2204 = vmul.f32 %v2092, %v2202
        %v2205 = vmul.f32 %v2187, %v2203
        %v2206 = vmul.f32 %v2094, %v2202
        %v2207 = vmul.f32 %v2189, %v2203
        %v2208 = vmul.f32 %v2097, %v2202
        %v2209 = vmul.f32 %v2192, %v2203
        %v2210 = vmul.f32 %v2099, %v2202
        %v2211 = vmul.f32 %v2194, %v2203
        %v2212 = vperm.slane %v2196, 1
        %v2213 = vperm.slane %v2196, 3
        %v2216 = vperm.slane %v2212, 1
        %v2217 = vperm.slane %v2213, 1
        %v2218 = vadd.f32 %v2204, %v2216
        %v2219 = vadd.f32 %v2205, %v2217
        %v2220 = vadd.f32 %v2206, %v2216
        %v2221 = vadd.f32 %v2207, %v2217
        %v2222 = vadd.f32 %v2208, %v2216
        %v2223 = vadd.f32 %v2209, %v2217
        %v2224 = vadd.f32 %v2210, %v2216
        %v2225 = vadd.f32 %v2211, %v2217
        %v2226 = vadd.f32 %v2218, %v1414
        %v2227 = vadd.f32 %v2219, %v948
        %v2228 = vadd.f32 %v2220, %v1417
        %v2229 = vadd.f32 %v2221, %v949
        %v2230 = vadd.f32 %v2222, %v1420
        %v2231 = vadd.f32 %v2223, %v950
        %v2232 = vadd.f32 %v2224, %v1423
        %v2233 = vadd.f32 %v2225, %v951
        %v2234 = vmax.f32 %v2226, 0.0
        %v2235 = vmax.f32 %v2227, 0.0
        %v2236 = vmax.f32 %v2228, 0.0
        %v2237 = vmax.f32 %v2229, 0.0
        %v2238 = vmax.f32 %v2230, 0.0
        %v2239 = vmax.f32 %v2231, 0.0
        %v2240 = vmax.f32 %v2232, 0.0
        %v2241 = vmax.f32 %v2233, 0.0
        %v2242 = vpack.c.bf16 %v2234, %v2234
        %v2243 = vpack.c.bf16 %v2236, %v2236
        %v2244 = vpack.c.bf16 %v2238, %v2238
        %v2245 = vpack.c.bf16 %v2240, %v2240
        %v2250 = vunpack.c.l.b16 %v2242
        %v2251 = vunpack.c.l.b16 %v2243
        %v2252 = vunpack.c.l.b16 %v2244
        %v2253 = vunpack.c.l.b16 %v2245
        %v2254 = vpack.c.b16 %v2251, %v2250
        %v2255 = vpack.c.b16 %v2253, %v2252
        %v2257 = vshrl.u32 %v2254, 16
        %v2259 = vrot.slane %v2257, 7
        %v2260 = vshll.u32 %v2254, 16
        %v2262 = vor.u32 %v2259, %v2260
        %v2264 = vshrl.u32 %v2255, 16
        %v2266 = vrot.slane %v2264, 7
        %v2267 = vshll.u32 %v2255, 16
        %v2269 = vor.u32 %v2266, %v2267
        %v2270 = vsel %vm597, %v2259, %v2269
        %v2274 = vsel %vm616, 0, %v2262
        %v2275 = vsel %vm616, %v2266, 0
        %v2277 = vshrl.u32 %v2274, 16
        %v2279 = vshll.u32 %v2274, 16
        %v2281 = vrot.slane %v2279, 1
        %v2282 = vor.u32 %v2277, %v2281
        %v2284 = vshll.u32 %v2270, 16
        %v2286 = vrot.slane %v2284, 1
        %v2287 = vsel %vm619, %v2282, %v2286
        %v2288 = vshrl.u32 %v2270, 16
        %v2290 = vor.u32 %v2288, %v2286
        %v2292 = vshll.u32 %v2275, 16
        %v2294 = vrot.slane %v2292, 1
        %v2295 = vsel %vm619, %v2290, %v2294
        %v2300 = vrot.slane %v2274, 1
        %v2301 = vrot.slane %v2270, 1
        %v2302 = vsel %vm646, %v2300, %v2301
        %v2303 = vrot.slane %v2275, 1
        %v2304 = vsel %vm646, %v2301, %v2303
        %v2307 = vld [vmem:[#allocation12] sm:$0xf]
        %v2308 = vld [vmem:[#allocation12 + $0x4] sm:$0xf]
        %v2309 = vld [vmem:[#allocation12 + $0x8] sm:$0xf]
        %v2310 = vld [vmem:[#allocation12 + $0xc] sm:$0xf]
        %v2311 = vld [vmem:[#allocation12 + $0x10] sm:$0xf]
        %v2312 = vld [vmem:[#allocation12 + $0x14] sm:$0xf]
        %v2313 = vld [vmem:[#allocation12 + $0x18] sm:$0xf]
        %v2314 = vld [vmem:[#allocation12 + $0x1c] sm:$0xf]
        %v2315 = vld [vmem:[#allocation12 + $0x20] sm:$0xf]
        %v2316 = vld [vmem:[#allocation12 + $0x24] sm:$0xf]
        %v2317 = vld [vmem:[#allocation12 + $0x28] sm:$0xf]
        %v2318 = vld [vmem:[#allocation12 + $0x2c] sm:$0xf]
        %v2319 = vld [vmem:[#allocation12 + $0x30] sm:$0xf]
        %v2320 = vld [vmem:[#allocation12 + $0x34] sm:$0xf]
        %v2321 = vld [vmem:[#allocation12 + $0x38] sm:$0xf]
        %v2322 = vld [vmem:[#allocation12 + $0x3c] sm:$0xf]
        %v2323 = vld [vmem:[#allocation12 + $0x40] sm:$0xf]
        %v2324 = vld [vmem:[#allocation12 + $0x44] sm:$0xf]
        %v2325 = vld [vmem:[#allocation12 + $0x48] sm:$0xf]
        %v2326 = vld [vmem:[#allocation12 + $0x4c] sm:$0xf]
        %v2327 = vld [vmem:[#allocation12 + $0x50] sm:$0xf]
        %v2328 = vld [vmem:[#allocation12 + $0x54] sm:$0xf]
        %v2329 = vld [vmem:[#allocation12 + $0x58] sm:$0xf]
        %v2330 = vld [vmem:[#allocation12 + $0x5c] sm:$0xf]
        %v2331 = vld [vmem:[#allocation12 + $0x60] sm:$0xf]
        %v2332 = vld [vmem:[#allocation12 + $0x64] sm:$0xf]
        %v2333 = vld [vmem:[#allocation12 + $0x68] sm:$0xf]
        %v2334 = vld [vmem:[#allocation12 + $0x6c] sm:$0xf]
        %v2335 = vld [vmem:[#allocation12 + $0x70] sm:$0xf]
        %v2336 = vld [vmem:[#allocation12 + $0x74] sm:$0xf]
        %v2337 = vld [vmem:[#allocation12 + $0x78] sm:$0xf]
        %v2338 = vld [vmem:[#allocation12 + $0x7c] sm:$0xf]
        %v2339 = vld [vmem:[#allocation12 + $0x80] sm:$0xf]
        %v2340 = vld [vmem:[#allocation12 + $0x84] sm:$0xf]
        %v2341 = vld [vmem:[#allocation12 + $0x88] sm:$0xf]
        %v2342 = vld [vmem:[#allocation12 + $0x8c] sm:$0xf]
        %v2343 = vld [vmem:[#allocation12 + $0x90] sm:$0xf]
        %v2344 = vld [vmem:[#allocation12 + $0x94] sm:$0xf]
        %v2345 = vld [vmem:[#allocation12 + $0x98] sm:$0xf]
        %v2346 = vld [vmem:[#allocation12 + $0x9c] sm:$0xf]
        %v2347 = vld [vmem:[#allocation12 + $0xa0] sm:$0xf]
        %v2348 = vld [vmem:[#allocation12 + $0xa4] sm:$0xf]
        %v2349 = vld [vmem:[#allocation12 + $0xa8] sm:$0xf]
        %v2350 = vld [vmem:[#allocation12 + $0xac] sm:$0xf]
        %v2351 = vld [vmem:[#allocation12 + $0xb0] sm:$0xf]
        %v2352 = vld [vmem:[#allocation12 + $0xb4] sm:$0xf]
        %v2353 = vld [vmem:[#allocation12 + $0xb8] sm:$0xf]
        %v2354 = vld [vmem:[#allocation12 + $0xbc] sm:$0xf]
        %v2403 = vunpack.c.l.b16 %v2307
        %v2404 = vunpack.c.l.b16 %v2308
        %v2405 = vunpack.c.l.b16 %v2309
        %v2406 = vunpack.c.l.b16 %v2310
        %v2407 = vunpack.c.l.b16 %v2311
        %v2408 = vunpack.c.l.b16 %v2312
        %v2409 = vunpack.c.l.b16 %v2313
        %v2410 = vunpack.c.l.b16 %v2314
        %v2411 = vunpack.c.l.b16 %v2315
        %v2412 = vunpack.c.l.b16 %v2316
        %v2413 = vunpack.c.l.b16 %v2317
        %v2414 = vunpack.c.l.b16 %v2318
        %v2415 = vunpack.c.l.b16 %v2319
        %v2416 = vunpack.c.l.b16 %v2320
        %v2417 = vunpack.c.l.b16 %v2321
        %v2418 = vunpack.c.l.b16 %v2322
        %v2419 = vunpack.c.l.b16 %v2323
        %v2420 = vunpack.c.l.b16 %v2324
        %v2421 = vunpack.c.l.b16 %v2325
        %v2422 = vunpack.c.l.b16 %v2326
        %v2423 = vunpack.c.l.b16 %v2327
        %v2424 = vunpack.c.l.b16 %v2328
        %v2425 = vunpack.c.l.b16 %v2329
        %v2426 = vunpack.c.l.b16 %v2330
        %v2427 = vunpack.c.l.b16 %v2331
        %v2428 = vunpack.c.l.b16 %v2332
        %v2429 = vunpack.c.l.b16 %v2333
        %v2430 = vunpack.c.l.b16 %v2334
        %v2431 = vunpack.c.l.b16 %v2335
        %v2432 = vunpack.c.l.b16 %v2336
        %v2433 = vunpack.c.l.b16 %v2337
        %v2434 = vunpack.c.l.b16 %v2338
        %v2435 = vunpack.c.l.b16 %v2339
        %v2436 = vunpack.c.l.b16 %v2340
        %v2437 = vunpack.c.l.b16 %v2341
        %v2438 = vunpack.c.l.b16 %v2342
        %v2439 = vunpack.c.l.b16 %v2343
        %v2440 = vunpack.c.l.b16 %v2344
        %v2441 = vunpack.c.l.b16 %v2345
        %v2442 = vunpack.c.l.b16 %v2346
        %v2443 = vunpack.c.l.b16 %v2347
        %v2444 = vunpack.c.l.b16 %v2348
        %v2445 = vunpack.c.l.b16 %v2349
        %v2446 = vunpack.c.l.b16 %v2350
        %v2447 = vunpack.c.l.b16 %v2351
        %v2448 = vunpack.c.l.b16 %v2352
        %v2449 = vunpack.c.l.b16 %v2353
        %v2450 = vunpack.c.l.b16 %v2354
        %v2451 = vpack.c.b16 %v2404, %v2403
        %v2452 = vpack.c.b16 %v2406, %v2405
        %v2453 = vpack.c.b16 %v2408, %v2407
        %v2454 = vpack.c.b16 %v2410, %v2409
        %v2455 = vpack.c.b16 %v2412, %v2411
        %v2456 = vpack.c.b16 %v2414, %v2413
        %v2457 = vpack.c.b16 %v2416, %v2415
        %v2458 = vpack.c.b16 %v2418, %v2417
        %v2459 = vpack.c.b16 %v2420, %v2419
        %v2460 = vpack.c.b16 %v2422, %v2421
        %v2461 = vpack.c.b16 %v2424, %v2423
        %v2462 = vpack.c.b16 %v2426, %v2425
        %v2463 = vpack.c.b16 %v2428, %v2427
        %v2464 = vpack.c.b16 %v2430, %v2429
        %v2465 = vpack.c.b16 %v2432, %v2431
        %v2466 = vpack.c.b16 %v2434, %v2433
        %v2467 = vpack.c.b16 %v2436, %v2435
        %v2468 = vpack.c.b16 %v2438, %v2437
        %v2469 = vpack.c.b16 %v2440, %v2439
        %v2470 = vpack.c.b16 %v2442, %v2441
        %v2471 = vpack.c.b16 %v2444, %v2443
        %v2472 = vpack.c.b16 %v2446, %v2445
        %v2473 = vpack.c.b16 %v2448, %v2447
        %v2474 = vpack.c.b16 %v2450, %v2449
        %2499 = vmatpush.bf16.msra.mxu0 %v2458
        %2500 = vmatpush.bf16.msra.mxu0 %v2457
        %2501 = vmatpush.bf16.msra.mxu0 %v2456
        %2502 = vmatpush.bf16.msra.mxu0 %v2455
        %2503 = vmatpush.bf16.msra.mxu0 %v2454
        %2504 = vmatpush.bf16.msra.mxu0 %v2453
        %2505 = vmatpush.bf16.msra.mxu0 %v2452
        %2506 = vmatpush.bf16.msra.mxu0 %v2451
        %2507 = vmatmul.bf16.gmra.mxu0 %v2274
        %v2508 = vpop.f32.mrf.mxu0
        %v2509 = vadd.f32 0.0, %v2508
        %v2510 = vpop.f32.mrf.mxu0
        %v2511 = vadd.f32 0.0, %v2510
        %2512 = vmatmul.bf16.gmra.mxu0 %v2270
        %v2513 = vpop.f32.mrf.mxu0
        %v2514 = vadd.f32 0.0, %v2513
        %v2515 = vpop.f32.mrf.mxu0
        %v2516 = vadd.f32 0.0, %v2515
        %2517 = vdwg.mxu0
        %2518 = vmatpush.bf16.msra.mxu0 %v2466
        %2519 = vmatpush.bf16.msra.mxu0 %v2465
        %2520 = vmatpush.bf16.msra.mxu0 %v2464
        %2521 = vmatpush.bf16.msra.mxu0 %v2463
        %2522 = vmatpush.bf16.msra.mxu0 %v2462
        %2523 = vmatpush.bf16.msra.mxu0 %v2461
        %2524 = vmatpush.bf16.msra.mxu0 %v2460
        %2525 = vmatpush.bf16.msra.mxu0 %v2459
        %2526 = vmatmul.bf16.gmra.mxu0 %v2287
        %v2527 = vpop.f32.mrf.mxu0
        %v2528 = vadd.f32 %v2509, %v2527
        %v2529 = vpop.f32.mrf.mxu0
        %v2530 = vadd.f32 %v2511, %v2529
        %2531 = vmatmul.bf16.gmra.mxu0 %v2295
        %v2532 = vpop.f32.mrf.mxu0
        %v2533 = vadd.f32 %v2514, %v2532
        %v2534 = vpop.f32.mrf.mxu0
        %v2535 = vadd.f32 %v2516, %v2534
        %2536 = vdwg.mxu0
        %2537 = vmatpush.bf16.msra.mxu0 %v2474
        %2538 = vmatpush.bf16.msra.mxu0 %v2473
        %2539 = vmatpush.bf16.msra.mxu0 %v2472
        %2540 = vmatpush.bf16.msra.mxu0 %v2471
        %2541 = vmatpush.bf16.msra.mxu0 %v2470
        %2542 = vmatpush.bf16.msra.mxu0 %v2469
        %2543 = vmatpush.bf16.msra.mxu0 %v2468
        %2544 = vmatpush.bf16.msra.mxu0 %v2467
        %2545 = vmatmul.bf16.gmra.mxu0 %v2302
        %v2546 = vpop.f32.mrf.mxu0
        %v2547 = vadd.f32 %v2528, %v2546
        %v2548 = vpop.f32.mrf.mxu0
        %v2549 = vadd.f32 %v2530, %v2548
        %2550 = vmatmul.bf16.gmra.mxu0 %v2304
        %v2551 = vpop.f32.mrf.mxu0
        %v2552 = vadd.f32 %v2533, %v2551
        %v2553 = vpop.f32.mrf.mxu0
        %v2554 = vadd.f32 %v2535, %v2553
        %2555 = vdwg.mxu0
        %v2556 = vld [vmem:[#allocation13] sm:$0x3]
        %v2557 = vperm.slane %v2556, 0
        %v2558 = vmul.f32 %v2547, %v2557
        %v2559 = vmul.f32 %v2549, %v2557
        %v2560 = vmul.f32 %v2552, %v2557
        %v2561 = vmul.f32 %v2554, %v2557
        %v2562 = vperm.slane %v2556, 1
        %v2563 = vadd.f32 %v2558, %v2562
        %v2564 = vadd.f32 %v2559, %v2562
        %v2565 = vadd.f32 %v2560, %v2562
        %v2566 = vadd.f32 %v2561, %v2562
        %v2567 = vmax.f32 %v2563, 0.0
        %v2568 = vmax.f32 %v2564, 0.0
        %v2569 = vmax.f32 %v2565, 0.0
        %v2570 = vmax.f32 %v2566, 0.0
        %v2571 = vpack.c.bf16 %v2567, %v2567
        %v2572 = vpack.c.bf16 %v2568, %v2568
        %v2573 = vpack.c.bf16 %v2569, %v2569
        %v2574 = vpack.c.bf16 %v2570, %v2570
        %v2579 = vunpack.c.l.b16 %v2571
        %v2580 = vunpack.c.l.b16 %v2572
        %v2581 = vunpack.c.l.b16 %v2573
        %v2582 = vunpack.c.l.b16 %v2574
        %v2583 = vpack.c.b16 %v2580, %v2579
        %v2584 = vpack.c.b16 %v2582, %v2581
        %v2586 = vshrl.u32 %v2583, 16
        %v2588 = vrot.slane %v2586, 7
        %v2589 = vshll.u32 %v2583, 16
        %v2591 = vor.u32 %v2588, %v2589
        %v2593 = vshrl.u32 %v2584, 16
        %v2595 = vrot.slane %v2593, 7
        %v2596 = vshll.u32 %v2584, 16
        %v2598 = vor.u32 %v2595, %v2596
        %v2599 = vsel %vm597, %v2588, %v2598
        %2600 = vrot.lane.b32.xlu0 %v2591, 64
        %v2601 = vpop.permute.xlu0 %2600
        %2602 = vrot.lane.b32.xlu0 %v2599, 64
        %v2603 = vpop.permute.xlu0 %2602
        %2604 = vrot.lane.b32.xlu0 %v2595, 64
        %v2605 = vpop.permute.xlu0 %2604
        %v2608 = vsel %vm616, 0, %v2601
        %v2609 = vsel %vm616, %v2605, 0
        %v2611 = vshrl.u32 %v2608, 16
        %v2613 = vshll.u32 %v2608, 16
        %v2615 = vrot.slane %v2613, 1
        %v2616 = vor.u32 %v2611, %v2615
        %v2618 = vshll.u32 %v2603, 16
        %v2620 = vrot.slane %v2618, 1
        %v2621 = vsel %vm619, %v2616, %v2620
        %v2622 = vshrl.u32 %v2603, 16
        %v2624 = vor.u32 %v2622, %v2620
        %v2626 = vshll.u32 %v2609, 16
        %v2628 = vrot.slane %v2626, 1
        %v2629 = vsel %vm619, %v2624, %v2628
        %2630 = vrot.lane.b32.xlu0 %v2621, 64
        %v2631 = vpop.permute.xlu0 %2630
        %2632 = vrot.lane.b32.xlu0 %v2629, 64
        %v2633 = vpop.permute.xlu0 %2632
        %v2636 = vrot.slane %v2608, 1
        %v2637 = vrot.slane %v2603, 1
        %v2638 = vsel %vm646, %v2636, %v2637
        %v2639 = vrot.slane %v2609, 1
        %v2640 = vsel %vm646, %v2637, %v2639
        %v2642 = vsel %vm786, %v2608, %v2631
        %v2645 = vsel %vm786, %v2603, %v2633
        %v2647 = vld [vmem:[%s11] sm:$0xf]
        %v2648 = vld [vmem:[%s11 + $0x4] sm:$0xf]
        %v2649 = vld [vmem:[%s11 + $0x8] sm:$0xf]
        %v2650 = vld [vmem:[%s11 + $0xc] sm:$0xf]
        %v2651 = vld [vmem:[%s11 + $0x10] sm:$0xf]
        %v2652 = vld [vmem:[%s11 + $0x14] sm:$0xf]
        %v2653 = vld [vmem:[%s11 + $0x18] sm:$0xf]
        %v2654 = vld [vmem:[%s11 + $0x1c] sm:$0xf]
        %v2655 = vld [vmem:[%s11 + $0x20] sm:$0xf]
        %v2656 = vld [vmem:[%s11 + $0x24] sm:$0xf]
        %v2657 = vld [vmem:[%s11 + $0x28] sm:$0xf]
        %v2658 = vld [vmem:[%s11 + $0x2c] sm:$0xf]
        %v2659 = vld [vmem:[%s11 + $0x30] sm:$0xf]
        %v2660 = vld [vmem:[%s11 + $0x34] sm:$0xf]
        %v2661 = vld [vmem:[%s11 + $0x38] sm:$0xf]
        %v2662 = vld [vmem:[%s11 + $0x3c] sm:$0xf]
        %v2663 = vld [vmem:[%s11 + $0x40] sm:$0xf]
        %v2664 = vld [vmem:[%s11 + $0x44] sm:$0xf]
        %v2665 = vld [vmem:[%s11 + $0x48] sm:$0xf]
        %v2666 = vld [vmem:[%s11 + $0x4c] sm:$0xf]
        %v2667 = vld [vmem:[%s11 + $0x50] sm:$0xf]
        %v2668 = vld [vmem:[%s11 + $0x54] sm:$0xf]
        %v2669 = vld [vmem:[%s11 + $0x58] sm:$0xf]
        %v2670 = vld [vmem:[%s11 + $0x5c] sm:$0xf]
        %v2695 = vunpack.c.l.b16 %v2647
        %v2696 = vunpack.c.l.b16 %v2648
        %v2697 = vunpack.c.l.b16 %v2649
        %v2698 = vunpack.c.l.b16 %v2650
        %v2699 = vunpack.c.l.b16 %v2651
        %v2700 = vunpack.c.l.b16 %v2652
        %v2701 = vunpack.c.l.b16 %v2653
        %v2702 = vunpack.c.l.b16 %v2654
        %v2703 = vunpack.c.l.b16 %v2655
        %v2704 = vunpack.c.l.b16 %v2656
        %v2705 = vunpack.c.l.b16 %v2657
        %v2706 = vunpack.c.l.b16 %v2658
        %v2707 = vunpack.c.l.b16 %v2659
        %v2708 = vunpack.c.l.b16 %v2660
        %v2709 = vunpack.c.l.b16 %v2661
        %v2710 = vunpack.c.l.b16 %v2662
        %v2711 = vunpack.c.l.b16 %v2663
        %v2712 = vunpack.c.l.b16 %v2664
        %v2713 = vunpack.c.l.b16 %v2665
        %v2714 = vunpack.c.l.b16 %v2666
        %v2715 = vunpack.c.l.b16 %v2667
        %v2716 = vunpack.c.l.b16 %v2668
        %v2717 = vunpack.c.l.b16 %v2669
        %v2718 = vunpack.c.l.b16 %v2670
        %v2719 = vpack.c.b16 %v2696, %v2695
        %v2720 = vpack.c.b16 %v2698, %v2697
        %v2721 = vpack.c.b16 %v2700, %v2699
        %v2722 = vpack.c.b16 %v2702, %v2701
        %v2723 = vpack.c.b16 %v2704, %v2703
        %v2724 = vpack.c.b16 %v2706, %v2705
        %v2725 = vpack.c.b16 %v2708, %v2707
        %v2726 = vpack.c.b16 %v2710, %v2709
        %v2727 = vpack.c.b16 %v2712, %v2711
        %v2728 = vpack.c.b16 %v2714, %v2713
        %v2729 = vpack.c.b16 %v2716, %v2715
        %v2730 = vpack.c.b16 %v2718, %v2717
        %v2744 = vsel %vm786, %v2638, 0
        %v2747 = vsel %vm786, %v2640, 0
        %2749 = vmatpush.bf16.msra.mxu0 %v2726
        %2750 = vmatpush.bf16.msra.mxu0 %v2725
        %2751 = vmatpush.bf16.msra.mxu0 %v2724
        %2752 = vmatpush.bf16.msra.mxu0 %v2723
        %2753 = vmatpush.bf16.msra.mxu0 %v2722
        %2754 = vmatpush.bf16.msra.mxu0 %v2721
        %2755 = vmatpush.bf16.msra.mxu0 %v2720
        %2756 = vmatpush.bf16.msra.mxu0 %v2719
        %2757 = vmatmul.bf16.gmra.mxu0 %v2642
        %v2758 = vpop.f32.mrf.mxu0
        %v2759 = vadd.f32 0.0, %v2758
        %v2760 = vpop.f32.mrf.mxu0
        %v2761 = vadd.f32 0.0, %v2760
        %2762 = vmatmul.bf16.gmra.mxu0 %v2645
        %v2763 = vpop.f32.mrf.mxu0
        %v2764 = vadd.f32 0.0, %v2763
        %v2765 = vpop.f32.mrf.mxu0
        %v2766 = vadd.f32 0.0, %v2765
        %2767 = vdwg.mxu0
        %2768 = vmatpush.bf16.msra.mxu0 0
        %2769 = vmatpush.bf16.msra.mxu0 0
        %2770 = vmatpush.bf16.msra.mxu0 0
        %2771 = vmatpush.bf16.msra.mxu0 0
        %2772 = vmatpush.bf16.msra.mxu0 %v2730
        %2773 = vmatpush.bf16.msra.mxu0 %v2729
        %2774 = vmatpush.bf16.msra.mxu0 %v2728
        %2775 = vmatpush.bf16.msra.mxu0 %v2727
        %2776 = vmatmul.bf16.gmra.mxu0 %v2744
        %v2777 = vpop.f32.mrf.mxu0
        %v2778 = vadd.f32 %v2759, %v2777
        %v2779 = vpop.f32.mrf.mxu0
        %v2780 = vadd.f32 %v2761, %v2779
        %2781 = vmatmul.bf16.gmra.mxu0 %v2747
        %v2782 = vpop.f32.mrf.mxu0
        %v2783 = vadd.f32 %v2764, %v2782
        %v2784 = vpop.f32.mrf.mxu0
        %v2785 = vadd.f32 %v2766, %v2784
        %2786 = vdwg.mxu0
        %v2787 = vld [vmem:[#allocation15] sm:$0x3]
        %v2788 = vperm.slane %v2787, 0
        %v2789 = vmul.f32 %v2778, %v2788
        %v2790 = vmul.f32 %v2780, %v2788
        %v2791 = vmul.f32 %v2783, %v2788
        %v2792 = vmul.f32 %v2785, %v2788
        %v2793 = vperm.slane %v2787, 1
        %v2794 = vadd.f32 %v2789, %v2793
        %v2795 = vadd.f32 %v2790, %v2793
        %v2796 = vadd.f32 %v2791, %v2793
        %v2797 = vadd.f32 %v2792, %v2793
        %v2798 = vadd.f32 %v2794, %v2563
        %v2799 = vadd.f32 %v2795, %v2564
        %v2800 = vadd.f32 %v2796, %v2565
        %v2801 = vadd.f32 %v2797, %v2566
        %v2802 = vmax.f32 %v2798, 0.0
        %v2803 = vmax.f32 %v2799, 0.0
        %v2804 = vmax.f32 %v2800, 0.0
        %v2805 = vmax.f32 %v2801, 0.0
        %v2806 = vpack.c.bf16 %v2235, %v2235
        %v2807 = vpack.c.bf16 %v2237, %v2237
        %v2808 = vpack.c.bf16 %v2239, %v2239
        %v2809 = vpack.c.bf16 %v2241, %v2241
        %vm2810 = vcmask 519168
        %2811 = vst.msk [vmem:[%s577] sm:$0xf] %vm2810, %v2806
        %2812 = vst.msk [vmem:[%s577 + $0x4] sm:$0xf] %vm2810, %v2807
        %2813 = vst.msk [vmem:[%s577 + $0x8] sm:$0xf] %vm2810, %v2808
        %2814 = vst.msk [vmem:[%s577 + $0xc] sm:$0xf] %vm2810, %v2809
        %v2815 = vpack.c.bf16 %v2802, %v2802
        %v2816 = vpack.c.bf16 %v2803, %v2803
        %v2817 = vpack.c.bf16 %v2804, %v2804
        %v2818 = vpack.c.bf16 %v2805, %v2805
        %2823 = vrot.lane.b32.xlu0 %v2815, 64
        %v2824 = vpop.permute.xlu0 %2823
        %2825 = vrot.lane.b32.xlu0 %v2816, 64
        %v2826 = vpop.permute.xlu0 %2825
        %2827 = vrot.lane.b32.xlu0 %v2817, 64
        %v2828 = vpop.permute.xlu0 %2827
        %2829 = vrot.lane.b32.xlu0 %v2818, 64
        %v2830 = vpop.permute.xlu0 %2829
        %vm2835 = vcmask 1043968
        %2836 = vst.msk [vmem:[%s577] sm:$0xf] %vm2835, %v2824
        %2837 = vst.msk [vmem:[%s577 + $0x4] sm:$0xf] %vm2835, %v2826
        %2838 = vst.msk [vmem:[%s577 + $0x8] sm:$0xf] %vm2835, %v2828
        %2839 = vst.msk [vmem:[%s577 + $0xc] sm:$0xf] %vm2835, %v2830
        %p2840 = scmp.lt.s32.totalorder %s29, 1
        %s2841 = scalar_select %p2840, %s29, 1
        %s2842 = smul.addr %s2841, 4
        %s2843 = smul.addr %s2842, 4
        %s2844 = scalar_lea.vmem %s13, %s2843
        // Predicated region
        $region109: #{resnet_pca_mini.2} parent=71 // pred_check
          %p2845 = pneg %p325
        $region110: #{resnet_pca_mini.2} parent=71 // pred_check_branch
          %2847 = sbr.rel (%p2845) target = $region112
        $region111: #{resnet_pca_mini.2} parent=71 // pred_region
          _
        $region112: #{resnet_pca_mini.2} parent=71 // pred_fallthru
          _
      $region72: #{resnet_pca_mini.2} parent=5 // pred_fallthru
        _
      %p2848 = scmp.le.s32.totalorder 2, %s24
      // Predicated region
      $region113: #{resnet_pca_mini.2} parent=5 // pred_check
        %p2849 = pneg %p2848
      $region114: #{resnet_pca_mini.2} parent=5 // pred_check_branch
        %2851 = sbr.rel (%p2849) target = $region116
      $region115: #{resnet_pca_mini.2} parent=5 // pred_region
        %s2852 = ssub.s32 %s24, 2
        // Predicated region
        $region117: #{resnet_pca_mini.2} parent=115 // pred_check
          %p2853 = pneg %p331
        $region118: #{resnet_pca_mini.2} parent=115 // pred_check_branch
          %2855 = sbr.rel (%p2853) target = $region120
        $region119: #{resnet_pca_mini.2} parent=115 // pred_region
          %p2856 = scmp.lt.s32.totalorder %s30, 1
          %s2857 = scalar_select %p2856, %s30, 1
          %s2858 = smul.addr %s2857, 4
          %s2859 = smul.addr %s2858, 4
          %s2860 = scalar_lea.vmem %s13, %s2859
        $region120: #{resnet_pca_mini.2} parent=115 // pred_fallthru
          _
      $region116: #{resnet_pca_mini.2} parent=5 // pred_fallthru
        _
    $region6: #{resnet_pca_mini.2} parent=1 // loop_footer
      %s28 = sadd.s32 1, %s24
    $region7: #{resnet_pca_mini.2} parent=1 // loop_footer_branch
      %23 = sbr.rel target = $region3
    $region8: #{resnet_pca_mini.2} parent=1 // loop_exit
      _
    %2861 = vsyncpa [#allocation3], 1
    %s2862 = scalar_lea.sflag [#allocation3], 1
    %2863 = vsyncpa %s2862, 1
    %2864 = vsyncpa [#allocation5], 1
    %2865 = vsyncpa [#allocation8], 1
    %2866 = vsyncpa [#allocation11], 1
    %2867 = vsyncpa [#allocation14], 1

</llo_original>
